<compile_context>
chip_gen: v7x
topology: tpu7x:2x2x1
jax: 0.10.0
libtpu: 0.0.40
codegen_flags: <defaults>
</compile_context>

<pallas_src>
import functools
import math

import jax
import jax.numpy as jnp
from jax.experimental import pallas as pl
from jax.experimental.pallas import tpu as pltpu

MXU_DTYPE = jnp.bfloat16   # matmul-operand dtype; accumulation is always f32
LN_EPS = 1e-5


# ----------------------------- Pallas kernel --------------------------------
def fused_encoder_kernel(x_ref, w_qkv_ref, b_qkv_ref, w_out_ref, b_out_ref,
                         ln1_w_ref, ln1_b_ref, w1_ref, b1_ref, w2_ref, b2_ref,
                         ln2_w_ref, ln2_b_ref, o_ref, ctx_scr, *, n_head, seq):
    """Runs ALL encoder layers for the whole (B*S, D) activation block."""
    n_layers, d_model, _ = w_out_ref.shape          # (L, D, D)
    rows = x_ref.shape[0]                           # B * S
    n_batch = rows // seq
    dh = d_model // n_head

    def mm(a, b):
        # bf16 operands (weights pre-cast on the host), f32 accumulation on the MXU.
        return jnp.dot(a.astype(MXU_DTYPE), b, preferred_element_type=jnp.float32)

    def layer_norm(z, gamma, beta):
        mu = jnp.mean(z, axis=-1, keepdims=True)
        zc = z - mu
        var = jnp.mean(zc * zc, axis=-1, keepdims=True)
        return zc * jax.lax.rsqrt(var + LN_EPS) * gamma + beta

    def split_heads(qkv, which):
        # (rows, 3D) -> (H*B, S, dh) for projection `which` (0=Q, 1=K, 2=V).
        # Static lane slices + tile-aligned reshapes only.
        base = which * d_model
        parts = [qkv[:, base + h * dh: base + (h + 1) * dh].reshape(n_batch, seq, dh)
                 for h in range(n_head)]
        return jnp.stack(parts, axis=0).reshape(n_head * n_batch, seq, dh)

    x = x_ref[...].astype(jnp.float32)              # (rows, D)

    # NOTE: static unroll is fine for a handful of layers; switch to a layer grid
    # axis (or lax.fori_loop) if NUM_LAYER grows.
    for l in range(n_layers):
        # ---- fused QKV projection: one (rows, D) x (D, 3D) matmul -------------
        # (1/sqrt(dh) is pre-folded into the Q columns of w_qkv / b_qkv.)
        qkv = mm(x, w_qkv_ref[l]) + b_qkv_ref[l]    # (rows, 3D) f32

        q = split_heads(qkv, 0).astype(MXU_DTYPE)   # (H*B, S, dh)
        k = split_heads(qkv, 1).astype(MXU_DTYPE)
        v = split_heads(qkv, 2).astype(MXU_DTYPE)

        # ---- batched attention over g = head*B + batch (stable softmax) -------
        s = jnp.einsum('gqe,gke->gqk', q, k, preferred_element_type=jnp.float32)
        s = s - jnp.max(s, axis=-1, keepdims=True)
        p = jnp.exp(s)
        p = p * pl.reciprocal(jnp.sum(p, axis=-1, keepdims=True), approx=True)
        ctx = jnp.einsum('gqk,gke->gqe', p.astype(MXU_DTYPE), v,
                         preferred_element_type=jnp.float32)   # (H*B, S, dh) f32

        # ---- merge heads back into contiguous lanes via VMEM scratch ----------
        ctx = ctx.reshape(n_head, n_batch, seq, dh)
        for h in range(n_head):
            ctx_scr[:, :, h * dh:(h + 1) * dh] = ctx[h]
        attn_in = ctx_scr[...].reshape(rows, d_model)

        # ---- single-contraction output projection -----------------------------
        attn = mm(attn_in, w_out_ref[l]) + b_out_ref[l]        # (rows, D)

        # ---- residual + LayerNorm 1 (post-norm, eps=1e-5) ----------------------
        y = layer_norm(x + attn, ln1_w_ref[l], ln1_b_ref[l])

        # ---- feed-forward (ReLU) ----------------------------------------------
        h1 = jnp.maximum(mm(y, w1_ref[l]) + b1_ref[l], 0.0)    # (rows, FF)
        h2 = mm(h1, w2_ref[l]) + b2_ref[l]                     # (rows, D)

        # ---- residual + LayerNorm 2 --------------------------------------------
        x = layer_norm(y + h2, ln2_w_ref[l], ln2_b_ref[l])

    o_ref[...] = x.astype(o_ref.dtype)


# ------------------------------- wrapper -------------------------------------
def transformer_encoder(inputs_snd, packed_params, *, n_head):
    """inputs_snd: (S, N, D) — PyTorch (seq, batch, d_model), batch_first=False."""
    S, N, D = inputs_snd.shape
    rows = N * S
    # Flatten (batch, seq) into rows so every matmul sees a full 16-row operand
    # and there is no per-batch-row unroll inside the kernel.
    x = jnp.transpose(inputs_snd, (1, 0, 2)).reshape(rows, D)

    def const_spec(a):
        # Whole-array block, constant index map: fetched once, VMEM-resident.
        # NOTE: at production sizes, stream weights (layer grid axis / pl.ANY +
        # manual DMA) instead of keeping all layers resident, esp. on v7x (64 MiB).
        nd = a.ndim
        return pl.BlockSpec(a.shape, lambda i, _n=nd: (0,) * _n)

    kernel = functools.partial(fused_encoder_kernel, n_head=n_head, seq=S)

    out = pl.pallas_call(
        kernel,
        out_shape=jax.ShapeDtypeStruct((rows, D), inputs_snd.dtype),
        grid_spec=pltpu.PrefetchScalarGridSpec(
            num_scalar_prefetch=0,
            # Single grid step: at this size a 2-TensorCore batch split (v7x)
            # costs more in duplicated weight DMA + per-step overhead than it
            # saves; reintroduce a "parallel" batch axis for large batches.
            grid=(1,),
            in_specs=[pl.BlockSpec((rows, D), lambda i: (0, 0))]
                     + [const_spec(w) for w in packed_params],
            out_specs=pl.BlockSpec((rows, D), lambda i: (0, 0)),
            # Small scratch used to repack attention heads into contiguous
            # lanes before the fused output projection.
            scratch_shapes=[pltpu.VMEM((N, S, D), jnp.float32)],
        ),
        compiler_params=pltpu.CompilerParams(
            dimension_semantics=("arbitrary",)),
    )(x, *packed_params)

    return jnp.transpose(out.reshape(N, S, D), (1, 0, 2))      # back to (S, N, D)


# ----------------------------- parameter setup -------------------------------
def init_layer_params(key, d_model, ff_dim):
    """Random parameters in native PyTorch TransformerEncoderLayer shapes."""
    ks = jax.random.split(key, 8)
    std = 0.05
    return {
        "in_proj_weight": jax.random.normal(ks[0], (3 * d_model, d_model), jnp.float32) * std,
        "in_proj_bias": jax.random.normal(ks[1], (3 * d_model,), jnp.float32) * std,
        "out_proj_weight": jax.random.normal(ks[2], (d_model, d_model), jnp.float32) * std,
        "out_proj_bias": jax.random.normal(ks[3], (d_model,), jnp.float32) * std,
        "ln1_weight": jnp.ones((d_model,), jnp.float32),
        "ln1_bias": jnp.zeros((d_model,), jnp.float32),
        "linear1_weight": jax.random.normal(ks[4], (ff_dim, d_model), jnp.float32) * std,
        "linear1_bias": jax.random.normal(ks[5], (ff_dim,), jnp.float32) * std,
        "linear2_weight": jax.random.normal(ks[6], (d_model, ff_dim), jnp.float32) * std,
        "linear2_bias": jax.random.normal(ks[7], (d_model,), jnp.float32) * std,
        "ln2_weight": jnp.ones((d_model,), jnp.float32),
        "ln2_bias": jnp.zeros((d_model,), jnp.float32),
    }


def pack_params(layer_params, n_head):
    """Stack per-layer weights on a leading layer axis in the layout the kernel
    expects.  Matmul weights are pre-cast to MXU_DTYPE (one-time host cost);
    biases / LayerNorm params stay f32.  The 1/sqrt(dh) query scale is folded
    into the Q columns of the fused QKV weight/bias."""
    d_model = layer_params[0]["in_proj_weight"].shape[1]
    dh = d_model // n_head
    scale = 1.0 / math.sqrt(dh)

    def stack(fn, dtype=jnp.float32):
        return jnp.stack([fn(p) for p in layer_params], axis=0).astype(dtype)

    def qkv_weight(p):
        w = p["in_proj_weight"].T                    # (D, 3D): cols = [Q | K | V]
        return w.at[:, :d_model].multiply(scale)     # fold 1/sqrt(dh) into Q

    def qkv_bias(p):
        b = p["in_proj_bias"].at[:d_model].multiply(scale)
        return b.reshape(1, 3 * d_model)

    return [
        stack(qkv_weight, MXU_DTYPE),                           # (L, D, 3D)
        stack(qkv_bias),                                        # (L, 1, 3D)
        stack(lambda p: p["out_proj_weight"].T, MXU_DTYPE),     # (L, D, D)
        stack(lambda p: p["out_proj_bias"].reshape(1, -1)),     # (L, 1, D)
        stack(lambda p: p["ln1_weight"].reshape(1, -1)),        # (L, 1, D)
        stack(lambda p: p["ln1_bias"].reshape(1, -1)),          # (L, 1, D)
        stack(lambda p: p["linear1_weight"].T, MXU_DTYPE),      # (L, D, FF)
        stack(lambda p: p["linear1_bias"].reshape(1, -1)),      # (L, 1, FF)
        stack(lambda p: p["linear2_weight"].T, MXU_DTYPE),      # (L, FF, D)
        stack(lambda p: p["linear2_bias"].reshape(1, -1)),      # (L, 1, D)
        stack(lambda p: p["ln2_weight"].reshape(1, -1)),        # (L, 1, D)
        stack(lambda p: p["ln2_bias"].reshape(1, -1)),          # (L, 1, D)
    ]


# --------------------------------- main --------------------------------------
if __name__ == "__main__":
    # config: D_MODEL=32, N_HEAD=4, FF_DIM=64, DROP_OUT=0.0 (eval), NUM_LAYER=2
    D_MODEL, N_HEAD, FF_DIM, NUM_LAYER = 32, 4, 64, 2
    SEQ, BATCH = 8, 2

    key = jax.random.PRNGKey(0)
    k_in, *k_layers = jax.random.split(key, NUM_LAYER + 1)

    # TODO(synk): dropout layers (DROP_OUT) are identity here (inference semantics).
    inputs = jax.random.normal(k_in, (SEQ, BATCH, D_MODEL), jnp.float32)
    packed = pack_params([init_layer_params(k, D_MODEL, FF_DIM) for k in k_layers],
                         N_HEAD)

    run = jax.jit(functools.partial(transformer_encoder, n_head=N_HEAD))
    out = jax.block_until_ready(run(inputs, packed))
    assert out.shape == (SEQ, BATCH, D_MODEL)
    assert bool(jnp.all(jnp.isfinite(out)))
    print("KERNEL_OK")
</pallas_src>

<mosaic_0001>
module attributes {stable_mosaic.version = 11 : i64} {
  func.func @fused_encoder_kernel(%arg0: i32, %arg1: memref<16x32xf32, #tpu.memory_space<vmem>>, %arg2: memref<2x32x96xbf16, #tpu.memory_space<vmem>>, %arg3: memref<2x1x96xf32, #tpu.memory_space<vmem>>, %arg4: memref<2x32x32xbf16, #tpu.memory_space<vmem>>, %arg5: memref<2x1x32xf32, #tpu.memory_space<vmem>>, %arg6: memref<2x1x32xf32, #tpu.memory_space<vmem>>, %arg7: memref<2x1x32xf32, #tpu.memory_space<vmem>>, %arg8: memref<2x32x64xbf16, #tpu.memory_space<vmem>>, %arg9: memref<2x1x64xf32, #tpu.memory_space<vmem>>, %arg10: memref<2x64x32xbf16, #tpu.memory_space<vmem>>, %arg11: memref<2x1x32xf32, #tpu.memory_space<vmem>>, %arg12: memref<2x1x32xf32, #tpu.memory_space<vmem>>, %arg13: memref<2x1x32xf32, #tpu.memory_space<vmem>>, %arg14: memref<16x32xf32, #tpu.memory_space<vmem>>, %arg15: memref<2x8x32xf32, #tpu.memory_space<vmem>>) attributes {dimension_semantics = [#tpu.dimension_semantics<arbitrary>], iteration_bounds = array<i64: 1>, scalar_prefetch = 0 : i64, scratch_operands = 1 : i64, tpu.core_type = #tpu.core_type<tc>, window_params = [{pipeline_mode = #tpu.pipeline_mode<synchronous>, transform_indices = @transform_0, window_bounds = array<i64: 16, 32>}, {pipeline_mode = #tpu.pipeline_mode<synchronous>, transform_indices = @transform_1, window_bounds = array<i64: 2, 32, 96>}, {pipeline_mode = #tpu.pipeline_mode<synchronous>, transform_indices = @transform_2, window_bounds = array<i64: 2, 1, 96>}, {pipeline_mode = #tpu.pipeline_mode<synchronous>, transform_indices = @transform_3, window_bounds = array<i64: 2, 32, 32>}, {pipeline_mode = #tpu.pipeline_mode<synchronous>, transform_indices = @transform_4, window_bounds = array<i64: 2, 1, 32>}, {pipeline_mode = #tpu.pipeline_mode<synchronous>, transform_indices = @transform_5, window_bounds = array<i64: 2, 1, 32>}, {pipeline_mode = #tpu.pipeline_mode<synchronous>, transform_indices = @transform_6, window_bounds = array<i64: 2, 1, 32>}, {pipeline_mode = #tpu.pipeline_mode<synchronous>, transform_indices = @transform_7, window_bounds = array<i64: 2, 32, 64>}, {pipeline_mode = #tpu.pipeline_mode<synchronous>, transform_indices = @transform_8, window_bounds = array<i64: 2, 1, 64>}, {pipeline_mode = #tpu.pipeline_mode<synchronous>, transform_indices = @transform_9, window_bounds = array<i64: 2, 64, 32>}, {pipeline_mode = #tpu.pipeline_mode<synchronous>, transform_indices = @transform_10, window_bounds = array<i64: 2, 1, 32>}, {pipeline_mode = #tpu.pipeline_mode<synchronous>, transform_indices = @transform_11, window_bounds = array<i64: 2, 1, 32>}, {pipeline_mode = #tpu.pipeline_mode<synchronous>, transform_indices = @transform_12, window_bounds = array<i64: 2, 1, 32>}, {pipeline_mode = #tpu.pipeline_mode<synchronous>, transform_indices = @transform_13, window_bounds = array<i64: 16, 32>}]} {
    %c0 = arith.constant 0 : index
    %c0_0 = arith.constant 0 : index
    %0 = vector.load %arg1[%c0, %c0_0] : memref<16x32xf32, #tpu.memory_space<vmem>>, vector<16x32xf32>
    %c0_1 = arith.constant 0 : index
    %c0_2 = arith.constant 0 : index
    %c0_3 = arith.constant 0 : index
    %1 = vector.load %arg2[%c0_1, %c0_2, %c0_3] : memref<2x32x96xbf16, #tpu.memory_space<vmem>>, vector<1x32x96xbf16>
    %2 = vector.shape_cast %1 : vector<1x32x96xbf16> to vector<32x96xbf16>
    %3 = arith.truncf %0 : vector<16x32xf32> to vector<16x32xbf16>
    %cst = arith.constant dense<0.000000e+00> : vector<16x96xf32>
    %4 = tpu.matmul %3, %2, %cst {dimension_numbers = #tpu.dot_dimension_numbers<[1], [0], [0], [1], [0, 0, 1, 1], [], []>} : vector<16x32xbf16>, vector<32x96xbf16>, vector<16x96xf32> -> vector<16x96xf32>
    %c0_4 = arith.constant 0 : index
    %c0_5 = arith.constant 0 : index
    %c0_6 = arith.constant 0 : index
    %5 = vector.load %arg3[%c0_4, %c0_5, %c0_6] : memref<2x1x96xf32, #tpu.memory_space<vmem>>, vector<1x1x96xf32>
    %6 = vector.shape_cast %5 : vector<1x1x96xf32> to vector<1x96xf32>
    %7 = vector.broadcast %6 : vector<1x96xf32> to vector<16x96xf32>
    %8 = arith.addf %4, %7 : vector<16x96xf32>
    %9 = vector.extract_strided_slice %8 {offsets = [0, 0], sizes = [16, 8], strides = [1, 1]} : vector<16x96xf32> to vector<16x8xf32>
    %10 = vector.shape_cast %9 : vector<16x8xf32> to vector<2x8x8xf32>
    %11 = vector.extract_strided_slice %8 {offsets = [0, 8], sizes = [16, 8], strides = [1, 1]} : vector<16x96xf32> to vector<16x8xf32>
    %12 = vector.shape_cast %11 : vector<16x8xf32> to vector<2x8x8xf32>
    %13 = vector.extract_strided_slice %8 {offsets = [0, 16], sizes = [16, 8], strides = [1, 1]} : vector<16x96xf32> to vector<16x8xf32>
    %14 = vector.shape_cast %13 : vector<16x8xf32> to vector<2x8x8xf32>
    %15 = vector.extract_strided_slice %8 {offsets = [0, 24], sizes = [16, 8], strides = [1, 1]} : vector<16x96xf32> to vector<16x8xf32>
    %16 = vector.shape_cast %15 : vector<16x8xf32> to vector<2x8x8xf32>
    %17 = vector.shape_cast %10 : vector<2x8x8xf32> to vector<1x2x8x8xf32>
    %18 = vector.shape_cast %12 : vector<2x8x8xf32> to vector<1x2x8x8xf32>
    %19 = vector.shape_cast %14 : vector<2x8x8xf32> to vector<1x2x8x8xf32>
    %20 = vector.shape_cast %16 : vector<2x8x8xf32> to vector<1x2x8x8xf32>
    %21 = tpu.concatenate %17, %18, %19, %20 in 0 : vector<1x2x8x8xf32>, vector<1x2x8x8xf32>, vector<1x2x8x8xf32>, vector<1x2x8x8xf32> -> vector<4x2x8x8xf32>
    %22 = vector.shape_cast %21 : vector<4x2x8x8xf32> to vector<8x8x8xf32>
    %23 = arith.truncf %22 : vector<8x8x8xf32> to vector<8x8x8xbf16>
    %24 = vector.extract_strided_slice %8 {offsets = [0, 32], sizes = [16, 8], strides = [1, 1]} : vector<16x96xf32> to vector<16x8xf32>
    %25 = vector.shape_cast %24 : vector<16x8xf32> to vector<2x8x8xf32>
    %26 = vector.extract_strided_slice %8 {offsets = [0, 40], sizes = [16, 8], strides = [1, 1]} : vector<16x96xf32> to vector<16x8xf32>
    %27 = vector.shape_cast %26 : vector<16x8xf32> to vector<2x8x8xf32>
    %28 = vector.extract_strided_slice %8 {offsets = [0, 48], sizes = [16, 8], strides = [1, 1]} : vector<16x96xf32> to vector<16x8xf32>
    %29 = vector.shape_cast %28 : vector<16x8xf32> to vector<2x8x8xf32>
    %30 = vector.extract_strided_slice %8 {offsets = [0, 56], sizes = [16, 8], strides = [1, 1]} : vector<16x96xf32> to vector<16x8xf32>
    %31 = vector.shape_cast %30 : vector<16x8xf32> to vector<2x8x8xf32>
    %32 = vector.shape_cast %25 : vector<2x8x8xf32> to vector<1x2x8x8xf32>
    %33 = vector.shape_cast %27 : vector<2x8x8xf32> to vector<1x2x8x8xf32>
    %34 = vector.shape_cast %29 : vector<2x8x8xf32> to vector<1x2x8x8xf32>
    %35 = vector.shape_cast %31 : vector<2x8x8xf32> to vector<1x2x8x8xf32>
    %36 = tpu.concatenate %32, %33, %34, %35 in 0 : vector<1x2x8x8xf32>, vector<1x2x8x8xf32>, vector<1x2x8x8xf32>, vector<1x2x8x8xf32> -> vector<4x2x8x8xf32>
    %37 = vector.shape_cast %36 : vector<4x2x8x8xf32> to vector<8x8x8xf32>
    %38 = arith.truncf %37 : vector<8x8x8xf32> to vector<8x8x8xbf16>
    %39 = vector.extract_strided_slice %8 {offsets = [0, 64], sizes = [16, 8], strides = [1, 1]} : vector<16x96xf32> to vector<16x8xf32>
    %40 = vector.shape_cast %39 : vector<16x8xf32> to vector<2x8x8xf32>
    %41 = vector.extract_strided_slice %8 {offsets = [0, 72], sizes = [16, 8], strides = [1, 1]} : vector<16x96xf32> to vector<16x8xf32>
    %42 = vector.shape_cast %41 : vector<16x8xf32> to vector<2x8x8xf32>
    %43 = vector.extract_strided_slice %8 {offsets = [0, 80], sizes = [16, 8], strides = [1, 1]} : vector<16x96xf32> to vector<16x8xf32>
    %44 = vector.shape_cast %43 : vector<16x8xf32> to vector<2x8x8xf32>
    %45 = vector.extract_strided_slice %8 {offsets = [0, 88], sizes = [16, 8], strides = [1, 1]} : vector<16x96xf32> to vector<16x8xf32>
    %46 = vector.shape_cast %45 : vector<16x8xf32> to vector<2x8x8xf32>
    %47 = vector.shape_cast %40 : vector<2x8x8xf32> to vector<1x2x8x8xf32>
    %48 = vector.shape_cast %42 : vector<2x8x8xf32> to vector<1x2x8x8xf32>
    %49 = vector.shape_cast %44 : vector<2x8x8xf32> to vector<1x2x8x8xf32>
    %50 = vector.shape_cast %46 : vector<2x8x8xf32> to vector<1x2x8x8xf32>
    %51 = tpu.concatenate %47, %48, %49, %50 in 0 : vector<1x2x8x8xf32>, vector<1x2x8x8xf32>, vector<1x2x8x8xf32>, vector<1x2x8x8xf32> -> vector<4x2x8x8xf32>
    %52 = vector.shape_cast %51 : vector<4x2x8x8xf32> to vector<8x8x8xf32>
    %53 = arith.truncf %52 : vector<8x8x8xf32> to vector<8x8x8xbf16>
    "tpu.trace_start"() <{level = 10 : i32, message = "gqe,gke->gqk"}> : () -> ()
    %cst_7 = arith.constant dense<0.000000e+00> : vector<8x8x8xf32>
    %54 = tpu.matmul %23, %38, %cst_7 {dimension_numbers = #tpu.dot_dimension_numbers<[2], [2], [1], [1], [0, 0, 0, 1, 1, 1], [0], [0]>} : vector<8x8x8xbf16>, vector<8x8x8xbf16>, vector<8x8x8xf32> -> vector<8x8x8xf32>
    "tpu.trace_stop"() : () -> ()
    %cst_8 = arith.constant dense<0xFF800000> : vector<8x8xf32>
    %55 = vector.multi_reduction <maximumf>, %54, %cst_8 [2] : vector<8x8x8xf32> to vector<8x8xf32>
    %56 = vector.shape_cast %55 : vector<8x8xf32> to vector<8x8x1xf32>
    %57 = vector.broadcast %56 : vector<8x8x1xf32> to vector<8x8x8xf32>
    %58 = arith.subf %54, %57 : vector<8x8x8xf32>
    %59 = math.exp %58 : vector<8x8x8xf32>
    %cst_9 = arith.constant dense<0.000000e+00> : vector<8x8xf32>
    %60 = vector.multi_reduction <add>, %59, %cst_9 [2] : vector<8x8x8xf32> to vector<8x8xf32>
    %61 = vector.shape_cast %60 : vector<8x8xf32> to vector<8x8x1xf32>
    %62 = tpu.reciprocal %61 {approx = true} : vector<8x8x1xf32> -> vector<8x8x1xf32>
    %63 = vector.broadcast %62 : vector<8x8x1xf32> to vector<8x8x8xf32>
    %64 = arith.mulf %59, %63 : vector<8x8x8xf32>
    %65 = arith.truncf %64 : vector<8x8x8xf32> to vector<8x8x8xbf16>
    "tpu.trace_start"() <{level = 10 : i32, message = "gqk,gke->gqe"}> : () -> ()
    %cst_10 = arith.constant dense<0.000000e+00> : vector<8x8x8xf32>
    %66 = tpu.matmul %65, %53, %cst_10 {dimension_numbers = #tpu.dot_dimension_numbers<[2], [1], [1], [2], [0, 0, 0, 1, 1, 2], [0], [0]>} : vector<8x8x8xbf16>, vector<8x8x8xbf16>, vector<8x8x8xf32> -> vector<8x8x8xf32>
    "tpu.trace_stop"() : () -> ()
    %67 = vector.shape_cast %66 : vector<8x8x8xf32> to vector<4x2x8x8xf32>
    %68 = vector.extract_strided_slice %67 {offsets = [0, 0, 0, 0], sizes = [1, 2, 8, 8], strides = [1, 1, 1, 1]} : vector<4x2x8x8xf32> to vector<1x2x8x8xf32>
    %69 = vector.shape_cast %68 : vector<1x2x8x8xf32> to vector<2x8x8xf32>
    %c0_11 = arith.constant 0 : index
    %c0_12 = arith.constant 0 : index
    %c0_13 = arith.constant 0 : index
    %70 = vector.load %arg15[%c0_11, %c0_12, %c0_13] : memref<2x8x32xf32, #tpu.memory_space<vmem>>, vector<2x8x8xf32>
    tpu.vector_store %arg15[%c0_11, %c0_12, %c0_13], %69 {strides = array<i32>} : memref<2x8x32xf32, #tpu.memory_space<vmem>>, vector<2x8x8xf32>,
    %71 = vector.extract_strided_slice %67 {offsets = [1, 0, 0, 0], sizes = [1, 2, 8, 8], strides = [1, 1, 1, 1]} : vector<4x2x8x8xf32> to vector<1x2x8x8xf32>
    %72 = vector.shape_cast %71 : vector<1x2x8x8xf32> to vector<2x8x8xf32>
    %c0_14 = arith.constant 0 : index
    %c0_15 = arith.constant 0 : index
    %c8 = arith.constant 8 : index
    %73 = vector.load %arg15[%c0_14, %c0_15, %c8] : memref<2x8x32xf32, #tpu.memory_space<vmem>>, vector<2x8x8xf32>
    tpu.vector_store %arg15[%c0_14, %c0_15, %c8], %72 {strides = array<i32>} : memref<2x8x32xf32, #tpu.memory_space<vmem>>, vector<2x8x8xf32>,
    %74 = vector.extract_strided_slice %67 {offsets = [2, 0, 0, 0], sizes = [1, 2, 8, 8], strides = [1, 1, 1, 1]} : vector<4x2x8x8xf32> to vector<1x2x8x8xf32>
    %75 = vector.shape_cast %74 : vector<1x2x8x8xf32> to vector<2x8x8xf32>
    %c0_16 = arith.constant 0 : index
    %c0_17 = arith.constant 0 : index
    %c16 = arith.constant 16 : index
    %76 = vector.load %arg15[%c0_16, %c0_17, %c16] : memref<2x8x32xf32, #tpu.memory_space<vmem>>, vector<2x8x8xf32>
    tpu.vector_store %arg15[%c0_16, %c0_17, %c16], %75 {strides = array<i32>} : memref<2x8x32xf32, #tpu.memory_space<vmem>>, vector<2x8x8xf32>,
    %77 = vector.extract_strided_slice %67 {offsets = [3, 0, 0, 0], sizes = [1, 2, 8, 8], strides = [1, 1, 1, 1]} : vector<4x2x8x8xf32> to vector<1x2x8x8xf32>
    %78 = vector.shape_cast %77 : vector<1x2x8x8xf32> to vector<2x8x8xf32>
    %c0_18 = arith.constant 0 : index
    %c0_19 = arith.constant 0 : index
    %c24 = arith.constant 24 : index
    %79 = vector.load %arg15[%c0_18, %c0_19, %c24] : memref<2x8x32xf32, #tpu.memory_space<vmem>>, vector<2x8x8xf32>
    tpu.vector_store %arg15[%c0_18, %c0_19, %c24], %78 {strides = array<i32>} : memref<2x8x32xf32, #tpu.memory_space<vmem>>, vector<2x8x8xf32>,
    %c0_20 = arith.constant 0 : index
    %c0_21 = arith.constant 0 : index
    %c0_22 = arith.constant 0 : index
    %80 = vector.load %arg15[%c0_20, %c0_21, %c0_22] : memref<2x8x32xf32, #tpu.memory_space<vmem>>, vector<2x8x32xf32>
    %81 = vector.shape_cast %80 : vector<2x8x32xf32> to vector<16x32xf32>
    %c0_23 = arith.constant 0 : index
    %c0_24 = arith.constant 0 : index
    %c0_25 = arith.constant 0 : index
    %82 = vector.load %arg4[%c0_23, %c0_24, %c0_25] : memref<2x32x32xbf16, #tpu.memory_space<vmem>>, vector<1x32x32xbf16>
    %83 = vector.shape_cast %82 : vector<1x32x32xbf16> to vector<32x32xbf16>
    %84 = arith.truncf %81 : vector<16x32xf32> to vector<16x32xbf16>
    %cst_26 = arith.constant dense<0.000000e+00> : vector<16x32xf32>
    %85 = tpu.matmul %84, %83, %cst_26 {dimension_numbers = #tpu.dot_dimension_numbers<[1], [0], [0], [1], [0, 0, 1, 1], [], []>} : vector<16x32xbf16>, vector<32x32xbf16>, vector<16x32xf32> -> vector<16x32xf32>
    %c0_27 = arith.constant 0 : index
    %c0_28 = arith.constant 0 : index
    %c0_29 = arith.constant 0 : index
    %86 = vector.load %arg5[%c0_27, %c0_28, %c0_29] : memref<2x1x32xf32, #tpu.memory_space<vmem>>, vector<1x1x32xf32>
    %87 = vector.shape_cast %86 : vector<1x1x32xf32> to vector<1x32xf32>
    %88 = vector.broadcast %87 : vector<1x32xf32> to vector<16x32xf32>
    %89 = arith.addf %85, %88 : vector<16x32xf32>
    %90 = arith.addf %0, %89 : vector<16x32xf32>
    %c0_30 = arith.constant 0 : index
    %c0_31 = arith.constant 0 : index
    %c0_32 = arith.constant 0 : index
    %91 = vector.load %arg6[%c0_30, %c0_31, %c0_32] : memref<2x1x32xf32, #tpu.memory_space<vmem>>, vector<1x1x32xf32>
    %92 = vector.shape_cast %91 : vector<1x1x32xf32> to vector<1x32xf32>
    %c0_33 = arith.constant 0 : index
    %c0_34 = arith.constant 0 : index
    %c0_35 = arith.constant 0 : index
    %93 = vector.load %arg7[%c0_33, %c0_34, %c0_35] : memref<2x1x32xf32, #tpu.memory_space<vmem>>, vector<1x1x32xf32>
    %94 = vector.shape_cast %93 : vector<1x1x32xf32> to vector<1x32xf32>
    %cst_36 = arith.constant dense<0.000000e+00> : vector<16xf32>
    %95 = vector.multi_reduction <add>, %90, %cst_36 [1] : vector<16x32xf32> to vector<16xf32>
    %96 = vector.shape_cast %95 : vector<16xf32> to vector<16x1xf32>
    %cst_37 = arith.constant 3.200000e+01 : f32
    %97 = vector.broadcast %cst_37 : f32 to vector<16x1xf32>
    %98 = arith.divf %96, %97 : vector<16x1xf32>
    %99 = vector.broadcast %98 : vector<16x1xf32> to vector<16x32xf32>
    %100 = arith.subf %90, %99 : vector<16x32xf32>
    %101 = arith.mulf %100, %100 : vector<16x32xf32>
    %cst_38 = arith.constant dense<0.000000e+00> : vector<16xf32>
    %102 = vector.multi_reduction <add>, %101, %cst_38 [1] : vector<16x32xf32> to vector<16xf32>
    %103 = vector.shape_cast %102 : vector<16xf32> to vector<16x1xf32>
    %cst_39 = arith.constant 3.200000e+01 : f32
    %104 = vector.broadcast %cst_39 : f32 to vector<16x1xf32>
    %105 = arith.divf %103, %104 : vector<16x1xf32>
    %cst_40 = arith.constant 9.99999974E-6 : f32
    %106 = vector.broadcast %cst_40 : f32 to vector<16x1xf32>
    %107 = arith.addf %105, %106 : vector<16x1xf32>
    %108 = math.rsqrt %107 : vector<16x1xf32>
    %109 = vector.broadcast %108 : vector<16x1xf32> to vector<16x32xf32>
    %110 = arith.mulf %100, %109 : vector<16x32xf32>
    %111 = vector.broadcast %92 : vector<1x32xf32> to vector<16x32xf32>
    %112 = arith.mulf %110, %111 : vector<16x32xf32>
    %113 = vector.broadcast %94 : vector<1x32xf32> to vector<16x32xf32>
    %114 = arith.addf %112, %113 : vector<16x32xf32>
    %c0_41 = arith.constant 0 : index
    %c0_42 = arith.constant 0 : index
    %c0_43 = arith.constant 0 : index
    %115 = vector.load %arg8[%c0_41, %c0_42, %c0_43] : memref<2x32x64xbf16, #tpu.memory_space<vmem>>, vector<1x32x64xbf16>
    %116 = vector.shape_cast %115 : vector<1x32x64xbf16> to vector<32x64xbf16>
    %117 = arith.truncf %114 : vector<16x32xf32> to vector<16x32xbf16>
    %cst_44 = arith.constant dense<0.000000e+00> : vector<16x64xf32>
    %118 = tpu.matmul %117, %116, %cst_44 {dimension_numbers = #tpu.dot_dimension_numbers<[1], [0], [0], [1], [0, 0, 1, 1], [], []>} : vector<16x32xbf16>, vector<32x64xbf16>, vector<16x64xf32> -> vector<16x64xf32>
    %c0_45 = arith.constant 0 : index
    %c0_46 = arith.constant 0 : index
    %c0_47 = arith.constant 0 : index
    %119 = vector.load %arg9[%c0_45, %c0_46, %c0_47] : memref<2x1x64xf32, #tpu.memory_space<vmem>>, vector<1x1x64xf32>
    %120 = vector.shape_cast %119 : vector<1x1x64xf32> to vector<1x64xf32>
    %121 = vector.broadcast %120 : vector<1x64xf32> to vector<16x64xf32>
    %122 = arith.addf %118, %121 : vector<16x64xf32>
    %cst_48 = arith.constant 0.000000e+00 : f32
    %123 = vector.broadcast %cst_48 : f32 to vector<16x64xf32>
    %124 = arith.maximumf %122, %123 : vector<16x64xf32>
    %c0_49 = arith.constant 0 : index
    %c0_50 = arith.constant 0 : index
    %c0_51 = arith.constant 0 : index
    %125 = vector.load %arg10[%c0_49, %c0_50, %c0_51] : memref<2x64x32xbf16, #tpu.memory_space<vmem>>, vector<1x64x32xbf16>
    %126 = vector.shape_cast %125 : vector<1x64x32xbf16> to vector<64x32xbf16>
    %127 = arith.truncf %124 : vector<16x64xf32> to vector<16x64xbf16>
    %cst_52 = arith.constant dense<0.000000e+00> : vector<16x32xf32>
    %128 = tpu.matmul %127, %126, %cst_52 {dimension_numbers = #tpu.dot_dimension_numbers<[1], [0], [0], [1], [0, 0, 1, 1], [], []>} : vector<16x64xbf16>, vector<64x32xbf16>, vector<16x32xf32> -> vector<16x32xf32>
    %c0_53 = arith.constant 0 : index
    %c0_54 = arith.constant 0 : index
    %c0_55 = arith.constant 0 : index
    %129 = vector.load %arg11[%c0_53, %c0_54, %c0_55] : memref<2x1x32xf32, #tpu.memory_space<vmem>>, vector<1x1x32xf32>
    %130 = vector.shape_cast %129 : vector<1x1x32xf32> to vector<1x32xf32>
    %131 = vector.broadcast %130 : vector<1x32xf32> to vector<16x32xf32>
    %132 = arith.addf %128, %131 : vector<16x32xf32>
    %133 = arith.addf %114, %132 : vector<16x32xf32>
    %c0_56 = arith.constant 0 : index
    %c0_57 = arith.constant 0 : index
    %c0_58 = arith.constant 0 : index
    %134 = vector.load %arg12[%c0_56, %c0_57, %c0_58] : memref<2x1x32xf32, #tpu.memory_space<vmem>>, vector<1x1x32xf32>
    %135 = vector.shape_cast %134 : vector<1x1x32xf32> to vector<1x32xf32>
    %c0_59 = arith.constant 0 : index
    %c0_60 = arith.constant 0 : index
    %c0_61 = arith.constant 0 : index
    %136 = vector.load %arg13[%c0_59, %c0_60, %c0_61] : memref<2x1x32xf32, #tpu.memory_space<vmem>>, vector<1x1x32xf32>
    %137 = vector.shape_cast %136 : vector<1x1x32xf32> to vector<1x32xf32>
    %cst_62 = arith.constant dense<0.000000e+00> : vector<16xf32>
    %138 = vector.multi_reduction <add>, %133, %cst_62 [1] : vector<16x32xf32> to vector<16xf32>
    %139 = vector.shape_cast %138 : vector<16xf32> to vector<16x1xf32>
    %cst_63 = arith.constant 3.200000e+01 : f32
    %140 = vector.broadcast %cst_63 : f32 to vector<16x1xf32>
    %141 = arith.divf %139, %140 : vector<16x1xf32>
    %142 = vector.broadcast %141 : vector<16x1xf32> to vector<16x32xf32>
    %143 = arith.subf %133, %142 : vector<16x32xf32>
    %144 = arith.mulf %143, %143 : vector<16x32xf32>
    %cst_64 = arith.constant dense<0.000000e+00> : vector<16xf32>
    %145 = vector.multi_reduction <add>, %144, %cst_64 [1] : vector<16x32xf32> to vector<16xf32>
    %146 = vector.shape_cast %145 : vector<16xf32> to vector<16x1xf32>
    %cst_65 = arith.constant 3.200000e+01 : f32
    %147 = vector.broadcast %cst_65 : f32 to vector<16x1xf32>
    %148 = arith.divf %146, %147 : vector<16x1xf32>
    %cst_66 = arith.constant 9.99999974E-6 : f32
    %149 = vector.broadcast %cst_66 : f32 to vector<16x1xf32>
    %150 = arith.addf %148, %149 : vector<16x1xf32>
    %151 = math.rsqrt %150 : vector<16x1xf32>
    %152 = vector.broadcast %151 : vector<16x1xf32> to vector<16x32xf32>
    %153 = arith.mulf %143, %152 : vector<16x32xf32>
    %154 = vector.broadcast %135 : vector<1x32xf32> to vector<16x32xf32>
    %155 = arith.mulf %153, %154 : vector<16x32xf32>
    %156 = vector.broadcast %137 : vector<1x32xf32> to vector<16x32xf32>
    %157 = arith.addf %155, %156 : vector<16x32xf32>
    %c1 = arith.constant 1 : index
    %c0_67 = arith.constant 0 : index
    %c0_68 = arith.constant 0 : index
    %158 = vector.load %arg2[%c1, %c0_67, %c0_68] : memref<2x32x96xbf16, #tpu.memory_space<vmem>>, vector<1x32x96xbf16>
    %159 = vector.shape_cast %158 : vector<1x32x96xbf16> to vector<32x96xbf16>
    %160 = arith.truncf %157 : vector<16x32xf32> to vector<16x32xbf16>
    %cst_69 = arith.constant dense<0.000000e+00> : vector<16x96xf32>
    %161 = tpu.matmul %160, %159, %cst_69 {dimension_numbers = #tpu.dot_dimension_numbers<[1], [0], [0], [1], [0, 0, 1, 1], [], []>} : vector<16x32xbf16>, vector<32x96xbf16>, vector<16x96xf32> -> vector<16x96xf32>
    %c1_70 = arith.constant 1 : index
    %c0_71 = arith.constant 0 : index
    %c0_72 = arith.constant 0 : index
    %162 = vector.load %arg3[%c1_70, %c0_71, %c0_72] : memref<2x1x96xf32, #tpu.memory_space<vmem>>, vector<1x1x96xf32>
    %163 = vector.shape_cast %162 : vector<1x1x96xf32> to vector<1x96xf32>
    %164 = vector.broadcast %163 : vector<1x96xf32> to vector<16x96xf32>
    %165 = arith.addf %161, %164 : vector<16x96xf32>
    %166 = vector.extract_strided_slice %165 {offsets = [0, 0], sizes = [16, 8], strides = [1, 1]} : vector<16x96xf32> to vector<16x8xf32>
    %167 = vector.shape_cast %166 : vector<16x8xf32> to vector<2x8x8xf32>
    %168 = vector.extract_strided_slice %165 {offsets = [0, 8], sizes = [16, 8], strides = [1, 1]} : vector<16x96xf32> to vector<16x8xf32>
    %169 = vector.shape_cast %168 : vector<16x8xf32> to vector<2x8x8xf32>
    %170 = vector.extract_strided_slice %165 {offsets = [0, 16], sizes = [16, 8], strides = [1, 1]} : vector<16x96xf32> to vector<16x8xf32>
    %171 = vector.shape_cast %170 : vector<16x8xf32> to vector<2x8x8xf32>
    %172 = vector.extract_strided_slice %165 {offsets = [0, 24], sizes = [16, 8], strides = [1, 1]} : vector<16x96xf32> to vector<16x8xf32>
    %173 = vector.shape_cast %172 : vector<16x8xf32> to vector<2x8x8xf32>
    %174 = vector.shape_cast %167 : vector<2x8x8xf32> to vector<1x2x8x8xf32>
    %175 = vector.shape_cast %169 : vector<2x8x8xf32> to vector<1x2x8x8xf32>
    %176 = vector.shape_cast %171 : vector<2x8x8xf32> to vector<1x2x8x8xf32>
    %177 = vector.shape_cast %173 : vector<2x8x8xf32> to vector<1x2x8x8xf32>
    %178 = tpu.concatenate %174, %175, %176, %177 in 0 : vector<1x2x8x8xf32>, vector<1x2x8x8xf32>, vector<1x2x8x8xf32>, vector<1x2x8x8xf32> -> vector<4x2x8x8xf32>
    %179 = vector.shape_cast %178 : vector<4x2x8x8xf32> to vector<8x8x8xf32>
    %180 = arith.truncf %179 : vector<8x8x8xf32> to vector<8x8x8xbf16>
    %181 = vector.extract_strided_slice %165 {offsets = [0, 32], sizes = [16, 8], strides = [1, 1]} : vector<16x96xf32> to vector<16x8xf32>
    %182 = vector.shape_cast %181 : vector<16x8xf32> to vector<2x8x8xf32>
    %183 = vector.extract_strided_slice %165 {offsets = [0, 40], sizes = [16, 8], strides = [1, 1]} : vector<16x96xf32> to vector<16x8xf32>
    %184 = vector.shape_cast %183 : vector<16x8xf32> to vector<2x8x8xf32>
    %185 = vector.extract_strided_slice %165 {offsets = [0, 48], sizes = [16, 8], strides = [1, 1]} : vector<16x96xf32> to vector<16x8xf32>
    %186 = vector.shape_cast %185 : vector<16x8xf32> to vector<2x8x8xf32>
    %187 = vector.extract_strided_slice %165 {offsets = [0, 56], sizes = [16, 8], strides = [1, 1]} : vector<16x96xf32> to vector<16x8xf32>
    %188 = vector.shape_cast %187 : vector<16x8xf32> to vector<2x8x8xf32>
    %189 = vector.shape_cast %182 : vector<2x8x8xf32> to vector<1x2x8x8xf32>
    %190 = vector.shape_cast %184 : vector<2x8x8xf32> to vector<1x2x8x8xf32>
    %191 = vector.shape_cast %186 : vector<2x8x8xf32> to vector<1x2x8x8xf32>
    %192 = vector.shape_cast %188 : vector<2x8x8xf32> to vector<1x2x8x8xf32>
    %193 = tpu.concatenate %189, %190, %191, %192 in 0 : vector<1x2x8x8xf32>, vector<1x2x8x8xf32>, vector<1x2x8x8xf32>, vector<1x2x8x8xf32> -> vector<4x2x8x8xf32>
    %194 = vector.shape_cast %193 : vector<4x2x8x8xf32> to vector<8x8x8xf32>
    %195 = arith.truncf %194 : vector<8x8x8xf32> to vector<8x8x8xbf16>
    %196 = vector.extract_strided_slice %165 {offsets = [0, 64], sizes = [16, 8], strides = [1, 1]} : vector<16x96xf32> to vector<16x8xf32>
    %197 = vector.shape_cast %196 : vector<16x8xf32> to vector<2x8x8xf32>
    %198 = vector.extract_strided_slice %165 {offsets = [0, 72], sizes = [16, 8], strides = [1, 1]} : vector<16x96xf32> to vector<16x8xf32>
    %199 = vector.shape_cast %198 : vector<16x8xf32> to vector<2x8x8xf32>
    %200 = vector.extract_strided_slice %165 {offsets = [0, 80], sizes = [16, 8], strides = [1, 1]} : vector<16x96xf32> to vector<16x8xf32>
    %201 = vector.shape_cast %200 : vector<16x8xf32> to vector<2x8x8xf32>
    %202 = vector.extract_strided_slice %165 {offsets = [0, 88], sizes = [16, 8], strides = [1, 1]} : vector<16x96xf32> to vector<16x8xf32>
    %203 = vector.shape_cast %202 : vector<16x8xf32> to vector<2x8x8xf32>
    %204 = vector.shape_cast %197 : vector<2x8x8xf32> to vector<1x2x8x8xf32>
    %205 = vector.shape_cast %199 : vector<2x8x8xf32> to vector<1x2x8x8xf32>
    %206 = vector.shape_cast %201 : vector<2x8x8xf32> to vector<1x2x8x8xf32>
    %207 = vector.shape_cast %203 : vector<2x8x8xf32> to vector<1x2x8x8xf32>
    %208 = tpu.concatenate %204, %205, %206, %207 in 0 : vector<1x2x8x8xf32>, vector<1x2x8x8xf32>, vector<1x2x8x8xf32>, vector<1x2x8x8xf32> -> vector<4x2x8x8xf32>
    %209 = vector.shape_cast %208 : vector<4x2x8x8xf32> to vector<8x8x8xf32>
    %210 = arith.truncf %209 : vector<8x8x8xf32> to vector<8x8x8xbf16>
    "tpu.trace_start"() <{level = 10 : i32, message = "gqe,gke->gqk"}> : () -> ()
    %cst_73 = arith.constant dense<0.000000e+00> : vector<8x8x8xf32>
    %211 = tpu.matmul %180, %195, %cst_73 {dimension_numbers = #tpu.dot_dimension_numbers<[2], [2], [1], [1], [0, 0, 0, 1, 1, 1], [0], [0]>} : vector<8x8x8xbf16>, vector<8x8x8xbf16>, vector<8x8x8xf32> -> vector<8x8x8xf32>
    "tpu.trace_stop"() : () -> ()
    %cst_74 = arith.constant dense<0xFF800000> : vector<8x8xf32>
    %212 = vector.multi_reduction <maximumf>, %211, %cst_74 [2] : vector<8x8x8xf32> to vector<8x8xf32>
    %213 = vector.shape_cast %212 : vector<8x8xf32> to vector<8x8x1xf32>
    %214 = vector.broadcast %213 : vector<8x8x1xf32> to vector<8x8x8xf32>
    %215 = arith.subf %211, %214 : vector<8x8x8xf32>
    %216 = math.exp %215 : vector<8x8x8xf32>
    %cst_75 = arith.constant dense<0.000000e+00> : vector<8x8xf32>
    %217 = vector.multi_reduction <add>, %216, %cst_75 [2] : vector<8x8x8xf32> to vector<8x8xf32>
    %218 = vector.shape_cast %217 : vector<8x8xf32> to vector<8x8x1xf32>
    %219 = tpu.reciprocal %218 {approx = true} : vector<8x8x1xf32> -> vector<8x8x1xf32>
    %220 = vector.broadcast %219 : vector<8x8x1xf32> to vector<8x8x8xf32>
    %221 = arith.mulf %216, %220 : vector<8x8x8xf32>
    %222 = arith.truncf %221 : vector<8x8x8xf32> to vector<8x8x8xbf16>
    "tpu.trace_start"() <{level = 10 : i32, message = "gqk,gke->gqe"}> : () -> ()
    %cst_76 = arith.constant dense<0.000000e+00> : vector<8x8x8xf32>
    %223 = tpu.matmul %222, %210, %cst_76 {dimension_numbers = #tpu.dot_dimension_numbers<[2], [1], [1], [2], [0, 0, 0, 1, 1, 2], [0], [0]>} : vector<8x8x8xbf16>, vector<8x8x8xbf16>, vector<8x8x8xf32> -> vector<8x8x8xf32>
    "tpu.trace_stop"() : () -> ()
    %224 = vector.shape_cast %223 : vector<8x8x8xf32> to vector<4x2x8x8xf32>
    %225 = vector.extract_strided_slice %224 {offsets = [0, 0, 0, 0], sizes = [1, 2, 8, 8], strides = [1, 1, 1, 1]} : vector<4x2x8x8xf32> to vector<1x2x8x8xf32>
    %226 = vector.shape_cast %225 : vector<1x2x8x8xf32> to vector<2x8x8xf32>
    %c0_77 = arith.constant 0 : index
    %c0_78 = arith.constant 0 : index
    %c0_79 = arith.constant 0 : index
    %227 = vector.load %arg15[%c0_77, %c0_78, %c0_79] : memref<2x8x32xf32, #tpu.memory_space<vmem>>, vector<2x8x8xf32>
    tpu.vector_store %arg15[%c0_77, %c0_78, %c0_79], %226 {strides = array<i32>} : memref<2x8x32xf32, #tpu.memory_space<vmem>>, vector<2x8x8xf32>,
    %228 = vector.extract_strided_slice %224 {offsets = [1, 0, 0, 0], sizes = [1, 2, 8, 8], strides = [1, 1, 1, 1]} : vector<4x2x8x8xf32> to vector<1x2x8x8xf32>
    %229 = vector.shape_cast %228 : vector<1x2x8x8xf32> to vector<2x8x8xf32>
    %c0_80 = arith.constant 0 : index
    %c0_81 = arith.constant 0 : index
    %c8_82 = arith.constant 8 : index
    %230 = vector.load %arg15[%c0_80, %c0_81, %c8_82] : memref<2x8x32xf32, #tpu.memory_space<vmem>>, vector<2x8x8xf32>
    tpu.vector_store %arg15[%c0_80, %c0_81, %c8_82], %229 {strides = array<i32>} : memref<2x8x32xf32, #tpu.memory_space<vmem>>, vector<2x8x8xf32>,
    %231 = vector.extract_strided_slice %224 {offsets = [2, 0, 0, 0], sizes = [1, 2, 8, 8], strides = [1, 1, 1, 1]} : vector<4x2x8x8xf32> to vector<1x2x8x8xf32>
    %232 = vector.shape_cast %231 : vector<1x2x8x8xf32> to vector<2x8x8xf32>
    %c0_83 = arith.constant 0 : index
    %c0_84 = arith.constant 0 : index
    %c16_85 = arith.constant 16 : index
    %233 = vector.load %arg15[%c0_83, %c0_84, %c16_85] : memref<2x8x32xf32, #tpu.memory_space<vmem>>, vector<2x8x8xf32>
    tpu.vector_store %arg15[%c0_83, %c0_84, %c16_85], %232 {strides = array<i32>} : memref<2x8x32xf32, #tpu.memory_space<vmem>>, vector<2x8x8xf32>,
    %234 = vector.extract_strided_slice %224 {offsets = [3, 0, 0, 0], sizes = [1, 2, 8, 8], strides = [1, 1, 1, 1]} : vector<4x2x8x8xf32> to vector<1x2x8x8xf32>
    %235 = vector.shape_cast %234 : vector<1x2x8x8xf32> to vector<2x8x8xf32>
    %c0_86 = arith.constant 0 : index
    %c0_87 = arith.constant 0 : index
    %c24_88 = arith.constant 24 : index
    %236 = vector.load %arg15[%c0_86, %c0_87, %c24_88] : memref<2x8x32xf32, #tpu.memory_space<vmem>>, vector<2x8x8xf32>
    tpu.vector_store %arg15[%c0_86, %c0_87, %c24_88], %235 {strides = array<i32>} : memref<2x8x32xf32, #tpu.memory_space<vmem>>, vector<2x8x8xf32>,
    %c0_89 = arith.constant 0 : index
    %c0_90 = arith.constant 0 : index
    %c0_91 = arith.constant 0 : index
    %237 = vector.load %arg15[%c0_89, %c0_90, %c0_91] : memref<2x8x32xf32, #tpu.memory_space<vmem>>, vector<2x8x32xf32>
    %238 = vector.shape_cast %237 : vector<2x8x32xf32> to vector<16x32xf32>
    %c1_92 = arith.constant 1 : index
    %c0_93 = arith.constant 0 : index
    %c0_94 = arith.constant 0 : index
    %239 = vector.load %arg4[%c1_92, %c0_93, %c0_94] : memref<2x32x32xbf16, #tpu.memory_space<vmem>>, vector<1x32x32xbf16>
    %240 = vector.shape_cast %239 : vector<1x32x32xbf16> to vector<32x32xbf16>
    %241 = arith.truncf %238 : vector<16x32xf32> to vector<16x32xbf16>
    %cst_95 = arith.constant dense<0.000000e+00> : vector<16x32xf32>
    %242 = tpu.matmul %241, %240, %cst_95 {dimension_numbers = #tpu.dot_dimension_numbers<[1], [0], [0], [1], [0, 0, 1, 1], [], []>} : vector<16x32xbf16>, vector<32x32xbf16>, vector<16x32xf32> -> vector<16x32xf32>
    %c1_96 = arith.constant 1 : index
    %c0_97 = arith.constant 0 : index
    %c0_98 = arith.constant 0 : index
    %243 = vector.load %arg5[%c1_96, %c0_97, %c0_98] : memref<2x1x32xf32, #tpu.memory_space<vmem>>, vector<1x1x32xf32>
    %244 = vector.shape_cast %243 : vector<1x1x32xf32> to vector<1x32xf32>
    %245 = vector.broadcast %244 : vector<1x32xf32> to vector<16x32xf32>
    %246 = arith.addf %242, %245 : vector<16x32xf32>
    %247 = arith.addf %157, %246 : vector<16x32xf32>
    %c1_99 = arith.constant 1 : index
    %c0_100 = arith.constant 0 : index
    %c0_101 = arith.constant 0 : index
    %248 = vector.load %arg6[%c1_99, %c0_100, %c0_101] : memref<2x1x32xf32, #tpu.memory_space<vmem>>, vector<1x1x32xf32>
    %249 = vector.shape_cast %248 : vector<1x1x32xf32> to vector<1x32xf32>
    %c1_102 = arith.constant 1 : index
    %c0_103 = arith.constant 0 : index
    %c0_104 = arith.constant 0 : index
    %250 = vector.load %arg7[%c1_102, %c0_103, %c0_104] : memref<2x1x32xf32, #tpu.memory_space<vmem>>, vector<1x1x32xf32>
    %251 = vector.shape_cast %250 : vector<1x1x32xf32> to vector<1x32xf32>
    %cst_105 = arith.constant dense<0.000000e+00> : vector<16xf32>
    %252 = vector.multi_reduction <add>, %247, %cst_105 [1] : vector<16x32xf32> to vector<16xf32>
    %253 = vector.shape_cast %252 : vector<16xf32> to vector<16x1xf32>
    %cst_106 = arith.constant 3.200000e+01 : f32
    %254 = vector.broadcast %cst_106 : f32 to vector<16x1xf32>
    %255 = arith.divf %253, %254 : vector<16x1xf32>
    %256 = vector.broadcast %255 : vector<16x1xf32> to vector<16x32xf32>
    %257 = arith.subf %247, %256 : vector<16x32xf32>
    %258 = arith.mulf %257, %257 : vector<16x32xf32>
    %cst_107 = arith.constant dense<0.000000e+00> : vector<16xf32>
    %259 = vector.multi_reduction <add>, %258, %cst_107 [1] : vector<16x32xf32> to vector<16xf32>
    %260 = vector.shape_cast %259 : vector<16xf32> to vector<16x1xf32>
    %cst_108 = arith.constant 3.200000e+01 : f32
    %261 = vector.broadcast %cst_108 : f32 to vector<16x1xf32>
    %262 = arith.divf %260, %261 : vector<16x1xf32>
    %cst_109 = arith.constant 9.99999974E-6 : f32
    %263 = vector.broadcast %cst_109 : f32 to vector<16x1xf32>
    %264 = arith.addf %262, %263 : vector<16x1xf32>
    %265 = math.rsqrt %264 : vector<16x1xf32>
    %266 = vector.broadcast %265 : vector<16x1xf32> to vector<16x32xf32>
    %267 = arith.mulf %257, %266 : vector<16x32xf32>
    %268 = vector.broadcast %249 : vector<1x32xf32> to vector<16x32xf32>
    %269 = arith.mulf %267, %268 : vector<16x32xf32>
    %270 = vector.broadcast %251 : vector<1x32xf32> to vector<16x32xf32>
    %271 = arith.addf %269, %270 : vector<16x32xf32>
    %c1_110 = arith.constant 1 : index
    %c0_111 = arith.constant 0 : index
    %c0_112 = arith.constant 0 : index
    %272 = vector.load %arg8[%c1_110, %c0_111, %c0_112] : memref<2x32x64xbf16, #tpu.memory_space<vmem>>, vector<1x32x64xbf16>
    %273 = vector.shape_cast %272 : vector<1x32x64xbf16> to vector<32x64xbf16>
    %274 = arith.truncf %271 : vector<16x32xf32> to vector<16x32xbf16>
    %cst_113 = arith.constant dense<0.000000e+00> : vector<16x64xf32>
    %275 = tpu.matmul %274, %273, %cst_113 {dimension_numbers = #tpu.dot_dimension_numbers<[1], [0], [0], [1], [0, 0, 1, 1], [], []>} : vector<16x32xbf16>, vector<32x64xbf16>, vector<16x64xf32> -> vector<16x64xf32>
    %c1_114 = arith.constant 1 : index
    %c0_115 = arith.constant 0 : index
    %c0_116 = arith.constant 0 : index
    %276 = vector.load %arg9[%c1_114, %c0_115, %c0_116] : memref<2x1x64xf32, #tpu.memory_space<vmem>>, vector<1x1x64xf32>
    %277 = vector.shape_cast %276 : vector<1x1x64xf32> to vector<1x64xf32>
    %278 = vector.broadcast %277 : vector<1x64xf32> to vector<16x64xf32>
    %279 = arith.addf %275, %278 : vector<16x64xf32>
    %cst_117 = arith.constant 0.000000e+00 : f32
    %280 = vector.broadcast %cst_117 : f32 to vector<16x64xf32>
    %281 = arith.maximumf %279, %280 : vector<16x64xf32>
    %c1_118 = arith.constant 1 : index
    %c0_119 = arith.constant 0 : index
    %c0_120 = arith.constant 0 : index
    %282 = vector.load %arg10[%c1_118, %c0_119, %c0_120] : memref<2x64x32xbf16, #tpu.memory_space<vmem>>, vector<1x64x32xbf16>
    %283 = vector.shape_cast %282 : vector<1x64x32xbf16> to vector<64x32xbf16>
    %284 = arith.truncf %281 : vector<16x64xf32> to vector<16x64xbf16>
    %cst_121 = arith.constant dense<0.000000e+00> : vector<16x32xf32>
    %285 = tpu.matmul %284, %283, %cst_121 {dimension_numbers = #tpu.dot_dimension_numbers<[1], [0], [0], [1], [0, 0, 1, 1], [], []>} : vector<16x64xbf16>, vector<64x32xbf16>, vector<16x32xf32> -> vector<16x32xf32>
    %c1_122 = arith.constant 1 : index
    %c0_123 = arith.constant 0 : index
    %c0_124 = arith.constant 0 : index
    %286 = vector.load %arg11[%c1_122, %c0_123, %c0_124] : memref<2x1x32xf32, #tpu.memory_space<vmem>>, vector<1x1x32xf32>
    %287 = vector.shape_cast %286 : vector<1x1x32xf32> to vector<1x32xf32>
    %288 = vector.broadcast %287 : vector<1x32xf32> to vector<16x32xf32>
    %289 = arith.addf %285, %288 : vector<16x32xf32>
    %290 = arith.addf %271, %289 : vector<16x32xf32>
    %c1_125 = arith.constant 1 : index
    %c0_126 = arith.constant 0 : index
    %c0_127 = arith.constant 0 : index
    %291 = vector.load %arg12[%c1_125, %c0_126, %c0_127] : memref<2x1x32xf32, #tpu.memory_space<vmem>>, vector<1x1x32xf32>
    %292 = vector.shape_cast %291 : vector<1x1x32xf32> to vector<1x32xf32>
    %c1_128 = arith.constant 1 : index
    %c0_129 = arith.constant 0 : index
    %c0_130 = arith.constant 0 : index
    %293 = vector.load %arg13[%c1_128, %c0_129, %c0_130] : memref<2x1x32xf32, #tpu.memory_space<vmem>>, vector<1x1x32xf32>
    %294 = vector.shape_cast %293 : vector<1x1x32xf32> to vector<1x32xf32>
    %cst_131 = arith.constant dense<0.000000e+00> : vector<16xf32>
    %295 = vector.multi_reduction <add>, %290, %cst_131 [1] : vector<16x32xf32> to vector<16xf32>
    %296 = vector.shape_cast %295 : vector<16xf32> to vector<16x1xf32>
    %cst_132 = arith.constant 3.200000e+01 : f32
    %297 = vector.broadcast %cst_132 : f32 to vector<16x1xf32>
    %298 = arith.divf %296, %297 : vector<16x1xf32>
    %299 = vector.broadcast %298 : vector<16x1xf32> to vector<16x32xf32>
    %300 = arith.subf %290, %299 : vector<16x32xf32>
    %301 = arith.mulf %300, %300 : vector<16x32xf32>
    %cst_133 = arith.constant dense<0.000000e+00> : vector<16xf32>
    %302 = vector.multi_reduction <add>, %301, %cst_133 [1] : vector<16x32xf32> to vector<16xf32>
    %303 = vector.shape_cast %302 : vector<16xf32> to vector<16x1xf32>
    %cst_134 = arith.constant 3.200000e+01 : f32
    %304 = vector.broadcast %cst_134 : f32 to vector<16x1xf32>
    %305 = arith.divf %303, %304 : vector<16x1xf32>
    %cst_135 = arith.constant 9.99999974E-6 : f32
    %306 = vector.broadcast %cst_135 : f32 to vector<16x1xf32>
    %307 = arith.addf %305, %306 : vector<16x1xf32>
    %308 = math.rsqrt %307 : vector<16x1xf32>
    %309 = vector.broadcast %308 : vector<16x1xf32> to vector<16x32xf32>
    %310 = arith.mulf %300, %309 : vector<16x32xf32>
    %311 = vector.broadcast %292 : vector<1x32xf32> to vector<16x32xf32>
    %312 = arith.mulf %310, %311 : vector<16x32xf32>
    %313 = vector.broadcast %294 : vector<1x32xf32> to vector<16x32xf32>
    %314 = arith.addf %312, %313 : vector<16x32xf32>
    %c0_136 = arith.constant 0 : index
    %c0_137 = arith.constant 0 : index
    %315 = vector.load %arg14[%c0_136, %c0_137] : memref<16x32xf32, #tpu.memory_space<vmem>>, vector<16x32xf32>
    tpu.vector_store %arg14[%c0_136, %c0_137], %314 {strides = array<i32>} : memref<16x32xf32, #tpu.memory_space<vmem>>, vector<16x32xf32>,
    return
  }
  func.func @transform_0(%arg0: i32) -> (i32, i32) {
    %c0_i32 = arith.constant 0 : i32
    %c0_i32_0 = arith.constant 0 : i32
    %c0_i32_1 = arith.constant 0 : i32
    return %c0_i32, %c0_i32_0 : i32, i32
  }
  func.func @transform_1(%arg0: i32) -> (i32, i32, i32) {
    %c0_i32 = arith.constant 0 : i32
    %c0_i32_0 = arith.constant 0 : i32
    %c0_i32_1 = arith.constant 0 : i32
    %c0_i32_2 = arith.constant 0 : i32
    return %c0_i32, %c0_i32_0, %c0_i32_1 : i32, i32, i32
  }
  func.func @transform_2(%arg0: i32) -> (i32, i32, i32) {
    %c0_i32 = arith.constant 0 : i32
    %c0_i32_0 = arith.constant 0 : i32
    %c0_i32_1 = arith.constant 0 : i32
    %c0_i32_2 = arith.constant 0 : i32
    return %c0_i32, %c0_i32_0, %c0_i32_1 : i32, i32, i32
  }
  func.func @transform_3(%arg0: i32) -> (i32, i32, i32) {
    %c0_i32 = arith.constant 0 : i32
    %c0_i32_0 = arith.constant 0 : i32
    %c0_i32_1 = arith.constant 0 : i32
    %c0_i32_2 = arith.constant 0 : i32
    return %c0_i32, %c0_i32_0, %c0_i32_1 : i32, i32, i32
  }
  func.func @transform_4(%arg0: i32) -> (i32, i32, i32) {
    %c0_i32 = arith.constant 0 : i32
    %c0_i32_0 = arith.constant 0 : i32
    %c0_i32_1 = arith.constant 0 : i32
    %c0_i32_2 = arith.constant 0 : i32
    return %c0_i32, %c0_i32_0, %c0_i32_1 : i32, i32, i32
  }
  func.func @transform_5(%arg0: i32) -> (i32, i32, i32) {
    %c0_i32 = arith.constant 0 : i32
    %c0_i32_0 = arith.constant 0 : i32
    %c0_i32_1 = arith.constant 0 : i32
    %c0_i32_2 = arith.constant 0 : i32
    return %c0_i32, %c0_i32_0, %c0_i32_1 : i32, i32, i32
  }
  func.func @transform_6(%arg0: i32) -> (i32, i32, i32) {
    %c0_i32 = arith.constant 0 : i32
    %c0_i32_0 = arith.constant 0 : i32
    %c0_i32_1 = arith.constant 0 : i32
    %c0_i32_2 = arith.constant 0 : i32
    return %c0_i32, %c0_i32_0, %c0_i32_1 : i32, i32, i32
  }
  func.func @transform_7(%arg0: i32) -> (i32, i32, i32) {
    %c0_i32 = arith.constant 0 : i32
    %c0_i32_0 = arith.constant 0 : i32
    %c0_i32_1 = arith.constant 0 : i32
    %c0_i32_2 = arith.constant 0 : i32
    return %c0_i32, %c0_i32_0, %c0_i32_1 : i32, i32, i32
  }
  func.func @transform_8(%arg0: i32) -> (i32, i32, i32) {
    %c0_i32 = arith.constant 0 : i32
    %c0_i32_0 = arith.constant 0 : i32
    %c0_i32_1 = arith.constant 0 : i32
    %c0_i32_2 = arith.constant 0 : i32
    return %c0_i32, %c0_i32_0, %c0_i32_1 : i32, i32, i32
  }
  func.func @transform_9(%arg0: i32) -> (i32, i32, i32) {
    %c0_i32 = arith.constant 0 : i32
    %c0_i32_0 = arith.constant 0 : i32
    %c0_i32_1 = arith.constant 0 : i32
    %c0_i32_2 = arith.constant 0 : i32
    return %c0_i32, %c0_i32_0, %c0_i32_1 : i32, i32, i32
  }
  func.func @transform_10(%arg0: i32) -> (i32, i32, i32) {
    %c0_i32 = arith.constant 0 : i32
    %c0_i32_0 = arith.constant 0 : i32
    %c0_i32_1 = arith.constant 0 : i32
    %c0_i32_2 = arith.constant 0 : i32
    return %c0_i32, %c0_i32_0, %c0_i32_1 : i32, i32, i32
  }
  func.func @transform_11(%arg0: i32) -> (i32, i32, i32) {
    %c0_i32 = arith.constant 0 : i32
    %c0_i32_0 = arith.constant 0 : i32
    %c0_i32_1 = arith.constant 0 : i32
    %c0_i32_2 = arith.constant 0 : i32
    return %c0_i32, %c0_i32_0, %c0_i32_1 : i32, i32, i32
  }
  func.func @transform_12(%arg0: i32) -> (i32, i32, i32) {
    %c0_i32 = arith.constant 0 : i32
    %c0_i32_0 = arith.constant 0 : i32
    %c0_i32_1 = arith.constant 0 : i32
    %c0_i32_2 = arith.constant 0 : i32
    return %c0_i32, %c0_i32_0, %c0_i32_1 : i32, i32, i32
  }
  func.func @transform_13(%arg0: i32) -> (i32, i32) {
    %c0_i32 = arith.constant 0 : i32
    %c0_i32_0 = arith.constant 0 : i32
    %c0_i32_1 = arith.constant 0 : i32
    return %c0_i32, %c0_i32_0 : i32, i32
  }
}

</mosaic_0001>

<llo_original>
// kernel: transformer_encoder.1
$region0: #{transformer_encoder.1}
  #allocation0 [shape = 'u32[]', space=smem, size = 0x4, offset = 0x4, fixed_abs, tag = 'smem constant byte address 0x4 - core index']
  #allocation1 [shape = 'u32[144,128]{1,0:T(1,128)}', space=vmem, size = 0x12000, scoped, tag = 'internal scratch']
  #allocation2 [shape = 'f32[2,8,32]{2,1,0:T(8,128)}', space=vmem, size = 0x2000, scoped, tag = 'scratch operand']
  %s0 = inlined_call_operand.vmem [shape: f32[16,32], index: 0, kind: input, shape index: {}]
  %s1 = inlined_call_operand.vmem [shape: bf16[2,32,96], index: 1, kind: input, shape index: {}]
  %s2 = inlined_call_operand.vmem [shape: f32[2,1,96], index: 2, kind: input, shape index: {}]
  %s3 = inlined_call_operand.vmem [shape: bf16[2,32,32], index: 3, kind: input, shape index: {}]
  %s4 = inlined_call_operand.vmem [shape: f32[2,1,32], index: 4, kind: input, shape index: {}]
  %s5 = inlined_call_operand.vmem [shape: f32[2,1,32], index: 5, kind: input, shape index: {}]
  %s6 = inlined_call_operand.vmem [shape: f32[2,1,32], index: 6, kind: input, shape index: {}]
  %s7 = inlined_call_operand.vmem [shape: bf16[2,32,64], index: 7, kind: input, shape index: {}]
  %s8 = inlined_call_operand.vmem [shape: f32[2,1,64], index: 8, kind: input, shape index: {}]
  %s9 = inlined_call_operand.vmem [shape: bf16[2,64,32], index: 9, kind: input, shape index: {}]
  %s10 = inlined_call_operand.vmem [shape: f32[2,1,32], index: 10, kind: input, shape index: {}]
  %s11 = inlined_call_operand.vmem [shape: f32[2,1,32], index: 11, kind: input, shape index: {}]
  %s12 = inlined_call_operand.vmem [shape: f32[2,1,32], index: 12, kind: input, shape index: {}]
  %s13 = inlined_call_operand.vmem [shape: f32[16,32], index: 13, kind: output, shape index: {}]
  %s14 = sld [smem:[#allocation0]]
  $region62: #{transformer_encoder.1} parent=0
    _
  %s16 = ssub.s32 1, %s14
  %s17 = scalar_select 0, %s16, %s14
  // Predicated region
  $region2: #{transformer_encoder.1} parent=0 // pred_check
    _
  $region3: #{transformer_encoder.1} parent=0 // pred_check_branch
    %19 = sbr.rel (0) target = $region5
  $region4: #{transformer_encoder.1} parent=0 // pred_region
    _
  $region5: #{transformer_encoder.1} parent=0 // pred_fallthru
    _
  // Predicated region
  $region6: #{transformer_encoder.1} parent=0 // pred_check
    _
  $region7: #{transformer_encoder.1} parent=0 // pred_check_branch
    %21 = sbr.rel (0) target = $region9
  $region8: #{transformer_encoder.1} parent=0 // pred_region
    _
  $region9: #{transformer_encoder.1} parent=0 // pred_fallthru
    _
  // Predicated region
  $region10: #{transformer_encoder.1} parent=0 // pred_check
    _
  $region11: #{transformer_encoder.1} parent=0 // pred_check_branch
    %23 = sbr.rel (0) target = $region13
  $region12: #{transformer_encoder.1} parent=0 // pred_region
    _
  $region13: #{transformer_encoder.1} parent=0 // pred_fallthru
    _
  // Predicated region
  $region14: #{transformer_encoder.1} parent=0 // pred_check
    _
  $region15: #{transformer_encoder.1} parent=0 // pred_check_branch
    %25 = sbr.rel (0) target = $region17
  $region16: #{transformer_encoder.1} parent=0 // pred_region
    _
  $region17: #{transformer_encoder.1} parent=0 // pred_fallthru
    _
  // Predicated region
  $region18: #{transformer_encoder.1} parent=0 // pred_check
    _
  $region19: #{transformer_encoder.1} parent=0 // pred_check_branch
    %27 = sbr.rel (0) target = $region21
  $region20: #{transformer_encoder.1} parent=0 // pred_region
    _
  $region21: #{transformer_encoder.1} parent=0 // pred_fallthru
    _
  // Predicated region
  $region22: #{transformer_encoder.1} parent=0 // pred_check
    _
  $region23: #{transformer_encoder.1} parent=0 // pred_check_branch
    %29 = sbr.rel (0) target = $region25
  $region24: #{transformer_encoder.1} parent=0 // pred_region
    _
  $region25: #{transformer_encoder.1} parent=0 // pred_fallthru
    _
  // Predicated region
  $region26: #{transformer_encoder.1} parent=0 // pred_check
    _
  $region27: #{transformer_encoder.1} parent=0 // pred_check_branch
    %31 = sbr.rel (0) target = $region29
  $region28: #{transformer_encoder.1} parent=0 // pred_region
    _
  $region29: #{transformer_encoder.1} parent=0 // pred_fallthru
    _
  // Predicated region
  $region30: #{transformer_encoder.1} parent=0 // pred_check
    _
  $region31: #{transformer_encoder.1} parent=0 // pred_check_branch
    %33 = sbr.rel (0) target = $region33
  $region32: #{transformer_encoder.1} parent=0 // pred_region
    _
  $region33: #{transformer_encoder.1} parent=0 // pred_fallthru
    _
  // Predicated region
  $region34: #{transformer_encoder.1} parent=0 // pred_check
    _
  $region35: #{transformer_encoder.1} parent=0 // pred_check_branch
    %35 = sbr.rel (0) target = $region37
  $region36: #{transformer_encoder.1} parent=0 // pred_region
    _
  $region37: #{transformer_encoder.1} parent=0 // pred_fallthru
    _
  // Predicated region
  $region38: #{transformer_encoder.1} parent=0 // pred_check
    _
  $region39: #{transformer_encoder.1} parent=0 // pred_check_branch
    %37 = sbr.rel (0) target = $region41
  $region40: #{transformer_encoder.1} parent=0 // pred_region
    _
  $region41: #{transformer_encoder.1} parent=0 // pred_fallthru
    _
  // Predicated region
  $region42: #{transformer_encoder.1} parent=0 // pred_check
    _
  $region43: #{transformer_encoder.1} parent=0 // pred_check_branch
    %39 = sbr.rel (0) target = $region45
  $region44: #{transformer_encoder.1} parent=0 // pred_region
    _
  $region45: #{transformer_encoder.1} parent=0 // pred_fallthru
    _
  // Predicated region
  $region46: #{transformer_encoder.1} parent=0 // pred_check
    _
  $region47: #{transformer_encoder.1} parent=0 // pred_check_branch
    %41 = sbr.rel (0) target = $region49
  $region48: #{transformer_encoder.1} parent=0 // pred_region
    _
  $region49: #{transformer_encoder.1} parent=0 // pred_fallthru
    _
  // Predicated region
  $region50: #{transformer_encoder.1} parent=0 // pred_check
    _
  $region51: #{transformer_encoder.1} parent=0 // pred_check_branch
    %43 = sbr.rel (0) target = $region53
  $region52: #{transformer_encoder.1} parent=0 // pred_region
    _
  $region53: #{transformer_encoder.1} parent=0 // pred_fallthru
    _
  %v45 = vld [vmem:[%s0] sm:$0xff]
  %v46 = vld [vmem:[%s0 + $0x8] sm:$0xff]
  %v47 = vld [vmem:[%s1] sm:$0xf]
  %v48 = vld [vmem:[%s1 + $0x4] sm:$0xf]
  %v49 = vld [vmem:[%s1 + $0x8] sm:$0xf]
  %v50 = vld [vmem:[%s1 + $0xc] sm:$0xf]
  %v51 = vpack.c.bf16 %v46, %v45
  %v52 = vld [vmem:[%s2] sm:$0x1]
  %v54 = vlaneseq
  %v55 = vshrl.u32 %v54, 7
  %v56 = vsub.s32 0, %v55
  %v57 = vrot.slane %v52, %v56
  %v63 = vunpack.c.l.b16 %v47
  %v64 = vunpack.c.l.b16 %v48
  %v65 = vunpack.c.l.b16 %v49
  %v66 = vunpack.c.l.b16 %v50
  %v67 = vpack.c.b16 %v64, %v63
  %v68 = vpack.c.b16 %v66, %v65
  %vm71 = vcmask 261120
  %v73 = vsel %vm71, %v51, 0
  %75 = vmatprep.subr.bf16.mxu0 0
  %76 = vmatpush1.bf16.msra.mxu0 %v67
  %77 = vmatprep.subr.bf16.mxu0 0
  %78 = vmatpush1.bf16.msra.mxu0 %v68
  %79 = vmatprep.subr.bf16.mxu0 0
  %80 = vmatpush1.bf16.msra.mxu0 0
  %81 = vmatprep.subr.bf16.mxu0 0
  %82 = vmatpush1.bf16.msra.mxu0 0
  %83 = vmatprep.subr.bf16.mxu0 0
  %84 = vmatpush1.bf16.msra.mxu0 0
  %85 = vmatprep.subr.bf16.mxu0 0
  %86 = vmatpush1.bf16.msra.mxu0 0
  %87 = vmatprep.subr.bf16.mxu0 0
  %88 = vmatpush1.bf16.msra.mxu0 0
  %89 = vmatprep.subr.bf16.mxu0 0
  %90 = vmatpush1.bf16.msra.mxu0 0
  %91 = vmatprep.subr.bf16.mxu0 0
  %92 = vmatpush1.bf16.msra.mxu0 0
  %93 = vmatprep.subr.bf16.mxu0 0
  %94 = vmatpush1.bf16.msra.mxu0 0
  %95 = vmatprep.subr.bf16.mxu0 0
  %96 = vmatpush1.bf16.msra.mxu0 0
  %97 = vmatprep.subr.bf16.mxu0 0
  %98 = vmatpush1.bf16.msra.mxu0 0
  %99 = vmatprep.subr.bf16.mxu0 0
  %100 = vmatpush1.bf16.msra.mxu0 0
  %101 = vmatprep.subr.bf16.mxu0 0
  %102 = vmatpush1.bf16.msra.mxu0 0
  %103 = vmatprep.subr.bf16.mxu0 0
  %104 = vmatpush1.bf16.msra.mxu0 0
  %105 = vmatprep.subr.bf16.mxu0 0
  %106 = vmatpush1.bf16.msra.mxu0 0
  %107 = vmatprep.mubr.bf16.mxu0 0
  %108 = vmatmul.mubr.bf16.gmra.mrb[0].mxu0 %v73
  %v109 = vpop.f32.mrb[0].mxu0
  %v110 = vadd.f32 %v57, %v109
  %v111 = vpop.f32.mrb[0].mxu0
  %v112 = vpop.f32.mrb[0].mxu0
  %v113 = vadd.f32 %v57, %v112
  %v114 = vpop.f32.mrb[0].mxu0
  %115 = vdwg.mxu0
  %118 = vrot.lane.b32.xlu0 %v110, 120
  %v119 = vpop.permute.xlu0 %118
  %120 = vrot.lane.b32.xlu0 %v113, 120
  %v121 = vpop.permute.xlu0 %120
  %124 = vrot.lane.b32.xlu0 %v110, 112
  %v125 = vpop.permute.xlu0 %124
  %126 = vrot.lane.b32.xlu0 %v113, 112
  %v127 = vpop.permute.xlu0 %126
  %130 = vrot.lane.b32.xlu0 %v110, 104
  %v131 = vpop.permute.xlu0 %130
  %132 = vrot.lane.b32.xlu0 %v113, 104
  %v133 = vpop.permute.xlu0 %132
  %v136 = vpack.c.bf16 %v110, %v110
  %v137 = vpack.c.bf16 %v113, %v113
  %v138 = vpack.c.bf16 %v119, %v119
  %v139 = vpack.c.bf16 %v121, %v121
  %v140 = vpack.c.bf16 %v125, %v125
  %v141 = vpack.c.bf16 %v127, %v127
  %v142 = vpack.c.bf16 %v131, %v131
  %v143 = vpack.c.bf16 %v133, %v133
  %145 = vrot.lane.b32.xlu0 %v136, 96
  %v146 = vpop.permute.xlu0 %145
  %vm147 = vcmask 64512
  %v149 = vsel %vm147, %v136, 0
  %v152 = vsel %vm147, %v146, 0
  %154 = vmatprep.subr.bf16.mxu0 0
  %155 = vmatpush1.bf16.xpose.msra.mxu0 %v152
  %156 = vmatprep.subr.bf16.mxu0 0
  %157 = vmatpush1.bf16.xpose.msra.mxu0 0
  %158 = vmatprep.subr.bf16.mxu0 0
  %159 = vmatpush1.bf16.xpose.msra.mxu0 0
  %160 = vmatprep.subr.bf16.mxu0 0
  %161 = vmatpush1.bf16.xpose.msra.mxu0 0
  %162 = vmatprep.subr.bf16.mxu0 0
  %163 = vmatpush1.bf16.xpose.msra.mxu0 0
  %164 = vmatprep.subr.bf16.mxu0 0
  %165 = vmatpush1.bf16.xpose.msra.mxu0 0
  %166 = vmatprep.subr.bf16.mxu0 0
  %167 = vmatpush1.bf16.xpose.msra.mxu0 0
  %168 = vmatprep.subr.bf16.mxu0 0
  %169 = vmatpush1.bf16.xpose.msra.mxu0 0
  %170 = vmatprep.subr.bf16.mxu0 0
  %171 = vmatpush1.bf16.xpose.msra.mxu0 0
  %172 = vmatprep.subr.bf16.mxu0 0
  %173 = vmatpush1.bf16.xpose.msra.mxu0 0
  %174 = vmatprep.subr.bf16.mxu0 0
  %175 = vmatpush1.bf16.xpose.msra.mxu0 0
  %176 = vmatprep.subr.bf16.mxu0 0
  %177 = vmatpush1.bf16.xpose.msra.mxu0 0
  %178 = vmatprep.subr.bf16.mxu0 0
  %179 = vmatpush1.bf16.xpose.msra.mxu0 0
  %180 = vmatprep.subr.bf16.mxu0 0
  %181 = vmatpush1.bf16.xpose.msra.mxu0 0
  %182 = vmatprep.subr.bf16.mxu0 0
  %183 = vmatpush1.bf16.xpose.msra.mxu0 0
  %184 = vmatprep.subr.bf16.mxu0 0
  %185 = vmatpush1.bf16.xpose.msra.mxu0 0
  %186 = vmatprep.mubr.bf16.mxu0 0
  %187 = vmatmul.mubr.bf16.gmra.mrb[0].mxu0 %v149
  %v188 = vpop.f32.mrb[0].mxu0
  %v189 = vadd.f32 0.0, %v188
  %v190 = vpop.f32.mrb[0].mxu0
  %v191 = vpop.f32.mrb[0].mxu0
  %v192 = vpop.f32.mrb[0].mxu0
  %193 = vdwg.mxu0
  %195 = vrot.lane.b32.xlu0 %v137, 96
  %v196 = vpop.permute.xlu0 %195
  %v198 = vsel %vm147, %v137, 0
  %v201 = vsel %vm147, %v196, 0
  %203 = vmatprep.subr.bf16.mxu0 0
  %204 = vmatpush1.bf16.xpose.msra.mxu0 %v201
  %205 = vmatprep.subr.bf16.mxu0 0
  %206 = vmatpush1.bf16.xpose.msra.mxu0 0
  %207 = vmatprep.subr.bf16.mxu0 0
  %208 = vmatpush1.bf16.xpose.msra.mxu0 0
  %209 = vmatprep.subr.bf16.mxu0 0
  %210 = vmatpush1.bf16.xpose.msra.mxu0 0
  %211 = vmatprep.subr.bf16.mxu0 0
  %212 = vmatpush1.bf16.xpose.msra.mxu0 0
  %213 = vmatprep.subr.bf16.mxu0 0
  %214 = vmatpush1.bf16.xpose.msra.mxu0 0
  %215 = vmatprep.subr.bf16.mxu0 0
  %216 = vmatpush1.bf16.xpose.msra.mxu0 0
  %217 = vmatprep.subr.bf16.mxu0 0
  %218 = vmatpush1.bf16.xpose.msra.mxu0 0
  %219 = vmatprep.subr.bf16.mxu0 0
  %220 = vmatpush1.bf16.xpose.msra.mxu0 0
  %221 = vmatprep.subr.bf16.mxu0 0
  %222 = vmatpush1.bf16.xpose.msra.mxu0 0
  %223 = vmatprep.subr.bf16.mxu0 0
  %224 = vmatpush1.bf16.xpose.msra.mxu0 0
  %225 = vmatprep.subr.bf16.mxu0 0
  %226 = vmatpush1.bf16.xpose.msra.mxu0 0
  %227 = vmatprep.subr.bf16.mxu0 0
  %228 = vmatpush1.bf16.xpose.msra.mxu0 0
  %229 = vmatprep.subr.bf16.mxu0 0
  %230 = vmatpush1.bf16.xpose.msra.mxu0 0
  %231 = vmatprep.subr.bf16.mxu0 0
  %232 = vmatpush1.bf16.xpose.msra.mxu0 0
  %233 = vmatprep.subr.bf16.mxu0 0
  %234 = vmatpush1.bf16.xpose.msra.mxu0 0
  %235 = vmatprep.mubr.bf16.mxu0 0
  %236 = vmatmul.mubr.bf16.gmra.mrb[0].mxu0 %v198
  %v237 = vpop.f32.mrb[0].mxu0
  %v238 = vadd.f32 0.0, %v237
  %v239 = vpop.f32.mrb[0].mxu0
  %v240 = vpop.f32.mrb[0].mxu0
  %v241 = vpop.f32.mrb[0].mxu0
  %242 = vdwg.mxu0
  %244 = vrot.lane.b32.xlu0 %v138, 96
  %v245 = vpop.permute.xlu0 %244
  %v247 = vsel %vm147, %v138, 0
  %v250 = vsel %vm147, %v245, 0
  %252 = vmatprep.subr.bf16.mxu0 0
  %253 = vmatpush1.bf16.xpose.msra.mxu0 %v250
  %254 = vmatprep.subr.bf16.mxu0 0
  %255 = vmatpush1.bf16.xpose.msra.mxu0 0
  %256 = vmatprep.subr.bf16.mxu0 0
  %257 = vmatpush1.bf16.xpose.msra.mxu0 0
  %258 = vmatprep.subr.bf16.mxu0 0
  %259 = vmatpush1.bf16.xpose.msra.mxu0 0
  %260 = vmatprep.subr.bf16.mxu0 0
  %261 = vmatpush1.bf16.xpose.msra.mxu0 0
  %262 = vmatprep.subr.bf16.mxu0 0
  %263 = vmatpush1.bf16.xpose.msra.mxu0 0
  %264 = vmatprep.subr.bf16.mxu0 0
  %265 = vmatpush1.bf16.xpose.msra.mxu0 0
  %266 = vmatprep.subr.bf16.mxu0 0
  %267 = vmatpush1.bf16.xpose.msra.mxu0 0
  %268 = vmatprep.subr.bf16.mxu0 0
  %269 = vmatpush1.bf16.xpose.msra.mxu0 0
  %270 = vmatprep.subr.bf16.mxu0 0
  %271 = vmatpush1.bf16.xpose.msra.mxu0 0
  %272 = vmatprep.subr.bf16.mxu0 0
  %273 = vmatpush1.bf16.xpose.msra.mxu0 0
  %274 = vmatprep.subr.bf16.mxu0 0
  %275 = vmatpush1.bf16.xpose.msra.mxu0 0
  %276 = vmatprep.subr.bf16.mxu0 0
  %277 = vmatpush1.bf16.xpose.msra.mxu0 0
  %278 = vmatprep.subr.bf16.mxu0 0
  %279 = vmatpush1.bf16.xpose.msra.mxu0 0
  %280 = vmatprep.subr.bf16.mxu0 0
  %281 = vmatpush1.bf16.xpose.msra.mxu0 0
  %282 = vmatprep.subr.bf16.mxu0 0
  %283 = vmatpush1.bf16.xpose.msra.mxu0 0
  %284 = vmatprep.mubr.bf16.mxu0 0
  %285 = vmatmul.mubr.bf16.gmra.mrb[0].mxu0 %v247
  %v286 = vpop.f32.mrb[0].mxu0
  %v287 = vadd.f32 0.0, %v286
  %v288 = vpop.f32.mrb[0].mxu0
  %v289 = vpop.f32.mrb[0].mxu0
  %v290 = vpop.f32.mrb[0].mxu0
  %291 = vdwg.mxu0
  %293 = vrot.lane.b32.xlu0 %v139, 96
  %v294 = vpop.permute.xlu0 %293
  %v296 = vsel %vm147, %v139, 0
  %v299 = vsel %vm147, %v294, 0
  %301 = vmatprep.subr.bf16.mxu0 0
  %302 = vmatpush1.bf16.xpose.msra.mxu0 %v299
  %303 = vmatprep.subr.bf16.mxu0 0
  %304 = vmatpush1.bf16.xpose.msra.mxu0 0
  %305 = vmatprep.subr.bf16.mxu0 0
  %306 = vmatpush1.bf16.xpose.msra.mxu0 0
  %307 = vmatprep.subr.bf16.mxu0 0
  %308 = vmatpush1.bf16.xpose.msra.mxu0 0
  %309 = vmatprep.subr.bf16.mxu0 0
  %310 = vmatpush1.bf16.xpose.msra.mxu0 0
  %311 = vmatprep.subr.bf16.mxu0 0
  %312 = vmatpush1.bf16.xpose.msra.mxu0 0
  %313 = vmatprep.subr.bf16.mxu0 0
  %314 = vmatpush1.bf16.xpose.msra.mxu0 0
  %315 = vmatprep.subr.bf16.mxu0 0
  %316 = vmatpush1.bf16.xpose.msra.mxu0 0
  %317 = vmatprep.subr.bf16.mxu0 0
  %318 = vmatpush1.bf16.xpose.msra.mxu0 0
  %319 = vmatprep.subr.bf16.mxu0 0
  %320 = vmatpush1.bf16.xpose.msra.mxu0 0
  %321 = vmatprep.subr.bf16.mxu0 0
  %322 = vmatpush1.bf16.xpose.msra.mxu0 0
  %323 = vmatprep.subr.bf16.mxu0 0
  %324 = vmatpush1.bf16.xpose.msra.mxu0 0
  %325 = vmatprep.subr.bf16.mxu0 0
  %326 = vmatpush1.bf16.xpose.msra.mxu0 0
  %327 = vmatprep.subr.bf16.mxu0 0
  %328 = vmatpush1.bf16.xpose.msra.mxu0 0
  %329 = vmatprep.subr.bf16.mxu0 0
  %330 = vmatpush1.bf16.xpose.msra.mxu0 0
  %331 = vmatprep.subr.bf16.mxu0 0
  %332 = vmatpush1.bf16.xpose.msra.mxu0 0
  %333 = vmatprep.mubr.bf16.mxu0 0
  %334 = vmatmul.mubr.bf16.gmra.mrb[0].mxu0 %v296
  %v335 = vpop.f32.mrb[0].mxu0
  %v336 = vadd.f32 0.0, %v335
  %v337 = vpop.f32.mrb[0].mxu0
  %v338 = vpop.f32.mrb[0].mxu0
  %v339 = vpop.f32.mrb[0].mxu0
  %340 = vdwg.mxu0
  %342 = vrot.lane.b32.xlu0 %v140, 96
  %v343 = vpop.permute.xlu0 %342
  %v345 = vsel %vm147, %v140, 0
  %v348 = vsel %vm147, %v343, 0
  %350 = vmatprep.subr.bf16.mxu0 0
  %351 = vmatpush1.bf16.xpose.msra.mxu0 %v348
  %352 = vmatprep.subr.bf16.mxu0 0
  %353 = vmatpush1.bf16.xpose.msra.mxu0 0
  %354 = vmatprep.subr.bf16.mxu0 0
  %355 = vmatpush1.bf16.xpose.msra.mxu0 0
  %356 = vmatprep.subr.bf16.mxu0 0
  %357 = vmatpush1.bf16.xpose.msra.mxu0 0
  %358 = vmatprep.subr.bf16.mxu0 0
  %359 = vmatpush1.bf16.xpose.msra.mxu0 0
  %360 = vmatprep.subr.bf16.mxu0 0
  %361 = vmatpush1.bf16.xpose.msra.mxu0 0
  %362 = vmatprep.subr.bf16.mxu0 0
  %363 = vmatpush1.bf16.xpose.msra.mxu0 0
  %364 = vmatprep.subr.bf16.mxu0 0
  %365 = vmatpush1.bf16.xpose.msra.mxu0 0
  %366 = vmatprep.subr.bf16.mxu0 0
  %367 = vmatpush1.bf16.xpose.msra.mxu0 0
  %368 = vmatprep.subr.bf16.mxu0 0
  %369 = vmatpush1.bf16.xpose.msra.mxu0 0
  %370 = vmatprep.subr.bf16.mxu0 0
  %371 = vmatpush1.bf16.xpose.msra.mxu0 0
  %372 = vmatprep.subr.bf16.mxu0 0
  %373 = vmatpush1.bf16.xpose.msra.mxu0 0
  %374 = vmatprep.subr.bf16.mxu0 0
  %375 = vmatpush1.bf16.xpose.msra.mxu0 0
  %376 = vmatprep.subr.bf16.mxu0 0
  %377 = vmatpush1.bf16.xpose.msra.mxu0 0
  %378 = vmatprep.subr.bf16.mxu0 0
  %379 = vmatpush1.bf16.xpose.msra.mxu0 0
  %380 = vmatprep.subr.bf16.mxu0 0
  %381 = vmatpush1.bf16.xpose.msra.mxu0 0
  %382 = vmatprep.mubr.bf16.mxu0 0
  %383 = vmatmul.mubr.bf16.gmra.mrb[0].mxu0 %v345
  %v384 = vpop.f32.mrb[0].mxu0
  %v385 = vadd.f32 0.0, %v384
  %v386 = vpop.f32.mrb[0].mxu0
  %v387 = vpop.f32.mrb[0].mxu0
  %v388 = vpop.f32.mrb[0].mxu0
  %389 = vdwg.mxu0
  %391 = vrot.lane.b32.xlu0 %v141, 96
  %v392 = vpop.permute.xlu0 %391
  %v394 = vsel %vm147, %v141, 0
  %v397 = vsel %vm147, %v392, 0
  %399 = vmatprep.subr.bf16.mxu0 0
  %400 = vmatpush1.bf16.xpose.msra.mxu0 %v397
  %401 = vmatprep.subr.bf16.mxu0 0
  %402 = vmatpush1.bf16.xpose.msra.mxu0 0
  %403 = vmatprep.subr.bf16.mxu0 0
  %404 = vmatpush1.bf16.xpose.msra.mxu0 0
  %405 = vmatprep.subr.bf16.mxu0 0
  %406 = vmatpush1.bf16.xpose.msra.mxu0 0
  %407 = vmatprep.subr.bf16.mxu0 0
  %408 = vmatpush1.bf16.xpose.msra.mxu0 0
  %409 = vmatprep.subr.bf16.mxu0 0
  %410 = vmatpush1.bf16.xpose.msra.mxu0 0
  %411 = vmatprep.subr.bf16.mxu0 0
  %412 = vmatpush1.bf16.xpose.msra.mxu0 0
  %413 = vmatprep.subr.bf16.mxu0 0
  %414 = vmatpush1.bf16.xpose.msra.mxu0 0
  %415 = vmatprep.subr.bf16.mxu0 0
  %416 = vmatpush1.bf16.xpose.msra.mxu0 0
  %417 = vmatprep.subr.bf16.mxu0 0
  %418 = vmatpush1.bf16.xpose.msra.mxu0 0
  %419 = vmatprep.subr.bf16.mxu0 0
  %420 = vmatpush1.bf16.xpose.msra.mxu0 0
  %421 = vmatprep.subr.bf16.mxu0 0
  %422 = vmatpush1.bf16.xpose.msra.mxu0 0
  %423 = vmatprep.subr.bf16.mxu0 0
  %424 = vmatpush1.bf16.xpose.msra.mxu0 0
  %425 = vmatprep.subr.bf16.mxu0 0
  %426 = vmatpush1.bf16.xpose.msra.mxu0 0
  %427 = vmatprep.subr.bf16.mxu0 0
  %428 = vmatpush1.bf16.xpose.msra.mxu0 0
  %429 = vmatprep.subr.bf16.mxu0 0
  %430 = vmatpush1.bf16.xpose.msra.mxu0 0
  %431 = vmatprep.mubr.bf16.mxu0 0
  %432 = vmatmul.mubr.bf16.gmra.mrb[0].mxu0 %v394
  %v433 = vpop.f32.mrb[0].mxu0
  %v434 = vadd.f32 0.0, %v433
  %v435 = vpop.f32.mrb[0].mxu0
  %v436 = vpop.f32.mrb[0].mxu0
  %v437 = vpop.f32.mrb[0].mxu0
  %438 = vdwg.mxu0
  %440 = vrot.lane.b32.xlu0 %v142, 96
  %v441 = vpop.permute.xlu0 %440
  %v443 = vsel %vm147, %v142, 0
  %v446 = vsel %vm147, %v441, 0
  %448 = vmatprep.subr.bf16.mxu0 0
  %449 = vmatpush1.bf16.xpose.msra.mxu0 %v446
  %450 = vmatprep.subr.bf16.mxu0 0
  %451 = vmatpush1.bf16.xpose.msra.mxu0 0
  %452 = vmatprep.subr.bf16.mxu0 0
  %453 = vmatpush1.bf16.xpose.msra.mxu0 0
  %454 = vmatprep.subr.bf16.mxu0 0
  %455 = vmatpush1.bf16.xpose.msra.mxu0 0
  %456 = vmatprep.subr.bf16.mxu0 0
  %457 = vmatpush1.bf16.xpose.msra.mxu0 0
  %458 = vmatprep.subr.bf16.mxu0 0
  %459 = vmatpush1.bf16.xpose.msra.mxu0 0
  %460 = vmatprep.subr.bf16.mxu0 0
  %461 = vmatpush1.bf16.xpose.msra.mxu0 0
  %462 = vmatprep.subr.bf16.mxu0 0
  %463 = vmatpush1.bf16.xpose.msra.mxu0 0
  %464 = vmatprep.subr.bf16.mxu0 0
  %465 = vmatpush1.bf16.xpose.msra.mxu0 0
  %466 = vmatprep.subr.bf16.mxu0 0
  %467 = vmatpush1.bf16.xpose.msra.mxu0 0
  %468 = vmatprep.subr.bf16.mxu0 0
  %469 = vmatpush1.bf16.xpose.msra.mxu0 0
  %470 = vmatprep.subr.bf16.mxu0 0
  %471 = vmatpush1.bf16.xpose.msra.mxu0 0
  %472 = vmatprep.subr.bf16.mxu0 0
  %473 = vmatpush1.bf16.xpose.msra.mxu0 0
  %474 = vmatprep.subr.bf16.mxu0 0
  %475 = vmatpush1.bf16.xpose.msra.mxu0 0
  %476 = vmatprep.subr.bf16.mxu0 0
  %477 = vmatpush1.bf16.xpose.msra.mxu0 0
  %478 = vmatprep.subr.bf16.mxu0 0
  %479 = vmatpush1.bf16.xpose.msra.mxu0 0
  %480 = vmatprep.mubr.bf16.mxu0 0
  %481 = vmatmul.mubr.bf16.gmra.mrb[0].mxu0 %v443
  %v482 = vpop.f32.mrb[0].mxu0
  %v483 = vadd.f32 0.0, %v482
  %v484 = vpop.f32.mrb[0].mxu0
  %v485 = vpop.f32.mrb[0].mxu0
  %v486 = vpop.f32.mrb[0].mxu0
  %487 = vdwg.mxu0
  %489 = vrot.lane.b32.xlu0 %v143, 96
  %v490 = vpop.permute.xlu0 %489
  %v492 = vsel %vm147, %v143, 0
  %v495 = vsel %vm147, %v490, 0
  %497 = vmatprep.subr.bf16.mxu0 0
  %498 = vmatpush1.bf16.xpose.msra.mxu0 %v495
  %499 = vmatprep.subr.bf16.mxu0 0
  %500 = vmatpush1.bf16.xpose.msra.mxu0 0
  %501 = vmatprep.subr.bf16.mxu0 0
  %502 = vmatpush1.bf16.xpose.msra.mxu0 0
  %503 = vmatprep.subr.bf16.mxu0 0
  %504 = vmatpush1.bf16.xpose.msra.mxu0 0
  %505 = vmatprep.subr.bf16.mxu0 0
  %506 = vmatpush1.bf16.xpose.msra.mxu0 0
  %507 = vmatprep.subr.bf16.mxu0 0
  %508 = vmatpush1.bf16.xpose.msra.mxu0 0
  %509 = vmatprep.subr.bf16.mxu0 0
  %510 = vmatpush1.bf16.xpose.msra.mxu0 0
  %511 = vmatprep.subr.bf16.mxu0 0
  %512 = vmatpush1.bf16.xpose.msra.mxu0 0
  %513 = vmatprep.subr.bf16.mxu0 0
  %514 = vmatpush1.bf16.xpose.msra.mxu0 0
  %515 = vmatprep.subr.bf16.mxu0 0
  %516 = vmatpush1.bf16.xpose.msra.mxu0 0
  %517 = vmatprep.subr.bf16.mxu0 0
  %518 = vmatpush1.bf16.xpose.msra.mxu0 0
  %519 = vmatprep.subr.bf16.mxu0 0
  %520 = vmatpush1.bf16.xpose.msra.mxu0 0
  %521 = vmatprep.subr.bf16.mxu0 0
  %522 = vmatpush1.bf16.xpose.msra.mxu0 0
  %523 = vmatprep.subr.bf16.mxu0 0
  %524 = vmatpush1.bf16.xpose.msra.mxu0 0
  %525 = vmatprep.subr.bf16.mxu0 0
  %526 = vmatpush1.bf16.xpose.msra.mxu0 0
  %527 = vmatprep.subr.bf16.mxu0 0
  %528 = vmatpush1.bf16.xpose.msra.mxu0 0
  %529 = vmatprep.mubr.bf16.mxu0 0
  %530 = vmatmul.mubr.bf16.gmra.mrb[0].mxu0 %v492
  %v531 = vpop.f32.mrb[0].mxu0
  %v532 = vadd.f32 0.0, %v531
  %v533 = vpop.f32.mrb[0].mxu0
  %v534 = vpop.f32.mrb[0].mxu0
  %v535 = vpop.f32.mrb[0].mxu0
  %536 = vdwg.mxu0
  %v537 = vsel %vm147, %v189, -inf
  %538 = vmax.xlane.f32.xlu0 %v537
  %v539 = vpop.xlane.xlu0 %538
  %v540 = vsel %vm147, %v238, -inf
  %541 = vmax.xlane.f32.xlu0 %v540
  %v542 = vpop.xlane.xlu0 %541
  %v543 = vsel %vm147, %v287, -inf
  %544 = vmax.xlane.f32.xlu0 %v543
  %v545 = vpop.xlane.xlu0 %544
  %v546 = vsel %vm147, %v336, -inf
  %547 = vmax.xlane.f32.xlu0 %v546
  %v548 = vpop.xlane.xlu0 %547
  %v549 = vsel %vm147, %v385, -inf
  %550 = vmax.xlane.f32.xlu0 %v549
  %v551 = vpop.xlane.xlu0 %550
  %v552 = vsel %vm147, %v434, -inf
  %553 = vmax.xlane.f32.xlu0 %v552
  %v554 = vpop.xlane.xlu0 %553
  %v555 = vsel %vm147, %v483, -inf
  %556 = vmax.xlane.f32.xlu0 %v555
  %v557 = vpop.xlane.xlu0 %556
  %v558 = vsel %vm147, %v532, -inf
  %559 = vmax.xlane.f32.xlu0 %v558
  %v560 = vpop.xlane.xlu0 %559
  %v561 = vsub.f32 %v189, %v539
  %v562 = vsub.f32 %v238, %v542
  %v563 = vsub.f32 %v287, %v545
  %v564 = vsub.f32 %v336, %v548
  %v565 = vsub.f32 %v385, %v551
  %v566 = vsub.f32 %v434, %v554
  %v567 = vsub.f32 %v483, %v557
  %v568 = vsub.f32 %v532, %v560
  %v569 = vmul.f32 %v561, 1.442695
  %v570 = vpow.pop %v569
  %v571 = vmul.f32 %v562, 1.442695
  %v572 = vpow.pop %v571
  %v573 = vmul.f32 %v563, 1.442695
  %v574 = vpow.pop %v573
  %v575 = vmul.f32 %v564, 1.442695
  %v576 = vpow.pop %v575
  %v577 = vmul.f32 %v565, 1.442695
  %v578 = vpow.pop %v577
  %v579 = vmul.f32 %v566, 1.442695
  %v580 = vpow.pop %v579
  %v581 = vmul.f32 %v567, 1.442695
  %v582 = vpow.pop %v581
  %v583 = vmul.f32 %v568, 1.442695
  %v584 = vpow.pop %v583
  %v585 = vsel %vm147, %v570, 0.0
  %586 = vadd.xlane.f32.xlu0 %v585
  %v587 = vpop.xlane.xlu0 %586
  %v588 = vsel %vm147, %v572, 0.0
  %589 = vadd.xlane.f32.xlu0 %v588
  %v590 = vpop.xlane.xlu0 %589
  %v591 = vsel %vm147, %v574, 0.0
  %592 = vadd.xlane.f32.xlu0 %v591
  %v593 = vpop.xlane.xlu0 %592
  %v594 = vsel %vm147, %v576, 0.0
  %595 = vadd.xlane.f32.xlu0 %v594
  %v596 = vpop.xlane.xlu0 %595
  %v597 = vsel %vm147, %v578, 0.0
  %598 = vadd.xlane.f32.xlu0 %v597
  %v599 = vpop.xlane.xlu0 %598
  %v600 = vsel %vm147, %v580, 0.0
  %601 = vadd.xlane.f32.xlu0 %v600
  %v602 = vpop.xlane.xlu0 %601
  %v603 = vsel %vm147, %v582, 0.0
  %604 = vadd.xlane.f32.xlu0 %v603
  %v605 = vpop.xlane.xlu0 %604
  %v606 = vsel %vm147, %v584, 0.0
  %607 = vadd.xlane.f32.xlu0 %v606
  %v608 = vpop.xlane.xlu0 %607
  %v609 = vrcp.pop %v587
  %v610 = vrcp.pop %v590
  %v611 = vrcp.pop %v593
  %v612 = vrcp.pop %v596
  %v613 = vrcp.pop %v599
  %v614 = vrcp.pop %v602
  %v615 = vrcp.pop %v605
  %v616 = vrcp.pop %v608
  %v617 = vmul.f32 %v570, %v609
  %v618 = vmul.f32 %v572, %v610
  %v619 = vmul.f32 %v574, %v611
  %v620 = vmul.f32 %v576, %v612
  %v621 = vmul.f32 %v578, %v613
  %v622 = vmul.f32 %v580, %v614
  %v623 = vmul.f32 %v582, %v615
  %v624 = vmul.f32 %v584, %v616
  %v625 = vpack.c.bf16 %v617, %v617
  %v626 = vpack.c.bf16 %v618, %v618
  %v627 = vpack.c.bf16 %v619, %v619
  %v628 = vpack.c.bf16 %v620, %v620
  %v629 = vpack.c.bf16 %v621, %v621
  %v630 = vpack.c.bf16 %v622, %v622
  %v631 = vpack.c.bf16 %v623, %v623
  %v632 = vpack.c.bf16 %v624, %v624
  %633 = vrot.lane.b32.xlu0 %v136, 64
  %v634 = vpop.permute.xlu0 %633
  %v636 = vsel %vm147, %v625, 0
  %vm638 = vcmask 1043456
  %v640 = vsel %vm638, %v634, 0
  %642 = vmatprep.subr.bf16.mxu0 0
  %643 = vmatpush1.bf16.msra.mxu0 %v640
  %644 = vmatprep.subr.bf16.mxu0 0
  %645 = vmatpush1.bf16.msra.mxu0 0
  %646 = vmatprep.subr.bf16.mxu0 0
  %647 = vmatpush1.bf16.msra.mxu0 0
  %648 = vmatprep.subr.bf16.mxu0 0
  %649 = vmatpush1.bf16.msra.mxu0 0
  %650 = vmatprep.subr.bf16.mxu0 0
  %651 = vmatpush1.bf16.msra.mxu0 0
  %652 = vmatprep.subr.bf16.mxu0 0
  %653 = vmatpush1.bf16.msra.mxu0 0
  %654 = vmatprep.subr.bf16.mxu0 0
  %655 = vmatpush1.bf16.msra.mxu0 0
  %656 = vmatprep.subr.bf16.mxu0 0
  %657 = vmatpush1.bf16.msra.mxu0 0
  %658 = vmatprep.subr.bf16.mxu0 0
  %659 = vmatpush1.bf16.msra.mxu0 0
  %660 = vmatprep.subr.bf16.mxu0 0
  %661 = vmatpush1.bf16.msra.mxu0 0
  %662 = vmatprep.subr.bf16.mxu0 0
  %663 = vmatpush1.bf16.msra.mxu0 0
  %664 = vmatprep.subr.bf16.mxu0 0
  %665 = vmatpush1.bf16.msra.mxu0 0
  %666 = vmatprep.subr.bf16.mxu0 0
  %667 = vmatpush1.bf16.msra.mxu0 0
  %668 = vmatprep.subr.bf16.mxu0 0
  %669 = vmatpush1.bf16.msra.mxu0 0
  %670 = vmatprep.subr.bf16.mxu0 0
  %671 = vmatpush1.bf16.msra.mxu0 0
  %672 = vmatprep.subr.bf16.mxu0 0
  %673 = vmatpush1.bf16.msra.mxu0 0
  %674 = vmatprep.mubr.bf16.mxu0 0
  %675 = vmatmul.mubr.bf16.gmra.mrb[0].mxu0 %v636
  %v676 = vpop.f32.mrb[0].mxu0
  %v677 = vadd.f32 0.0, %v676
  %v678 = vpop.f32.mrb[0].mxu0
  %v679 = vpop.f32.mrb[0].mxu0
  %v680 = vpop.f32.mrb[0].mxu0
  %681 = vdwg.mxu0
  %682 = vrot.lane.b32.xlu0 %v137, 64
  %v683 = vpop.permute.xlu0 %682
  %v685 = vsel %vm147, %v626, 0
  %v688 = vsel %vm638, %v683, 0
  %690 = vmatprep.subr.bf16.mxu0 0
  %691 = vmatpush1.bf16.msra.mxu0 %v688
  %692 = vmatprep.subr.bf16.mxu0 0
  %693 = vmatpush1.bf16.msra.mxu0 0
  %694 = vmatprep.subr.bf16.mxu0 0
  %695 = vmatpush1.bf16.msra.mxu0 0
  %696 = vmatprep.subr.bf16.mxu0 0
  %697 = vmatpush1.bf16.msra.mxu0 0
  %698 = vmatprep.subr.bf16.mxu0 0
  %699 = vmatpush1.bf16.msra.mxu0 0
  %700 = vmatprep.subr.bf16.mxu0 0
  %701 = vmatpush1.bf16.msra.mxu0 0
  %702 = vmatprep.subr.bf16.mxu0 0
  %703 = vmatpush1.bf16.msra.mxu0 0
  %704 = vmatprep.subr.bf16.mxu0 0
  %705 = vmatpush1.bf16.msra.mxu0 0
  %706 = vmatprep.subr.bf16.mxu0 0
  %707 = vmatpush1.bf16.msra.mxu0 0
  %708 = vmatprep.subr.bf16.mxu0 0
  %709 = vmatpush1.bf16.msra.mxu0 0
  %710 = vmatprep.subr.bf16.mxu0 0
  %711 = vmatpush1.bf16.msra.mxu0 0
  %712 = vmatprep.subr.bf16.mxu0 0
  %713 = vmatpush1.bf16.msra.mxu0 0
  %714 = vmatprep.subr.bf16.mxu0 0
  %715 = vmatpush1.bf16.msra.mxu0 0
  %716 = vmatprep.subr.bf16.mxu0 0
  %717 = vmatpush1.bf16.msra.mxu0 0
  %718 = vmatprep.subr.bf16.mxu0 0
  %719 = vmatpush1.bf16.msra.mxu0 0
  %720 = vmatprep.subr.bf16.mxu0 0
  %721 = vmatpush1.bf16.msra.mxu0 0
  %722 = vmatprep.mubr.bf16.mxu0 0
  %723 = vmatmul.mubr.bf16.gmra.mrb[0].mxu0 %v685
  %v724 = vpop.f32.mrb[0].mxu0
  %v725 = vadd.f32 0.0, %v724
  %v726 = vpop.f32.mrb[0].mxu0
  %v727 = vpop.f32.mrb[0].mxu0
  %v728 = vpop.f32.mrb[0].mxu0
  %729 = vdwg.mxu0
  %730 = vrot.lane.b32.xlu0 %v138, 64
  %v731 = vpop.permute.xlu0 %730
  %v733 = vsel %vm147, %v627, 0
  %v736 = vsel %vm638, %v731, 0
  %738 = vmatprep.subr.bf16.mxu0 0
  %739 = vmatpush1.bf16.msra.mxu0 %v736
  %740 = vmatprep.subr.bf16.mxu0 0
  %741 = vmatpush1.bf16.msra.mxu0 0
  %742 = vmatprep.subr.bf16.mxu0 0
  %743 = vmatpush1.bf16.msra.mxu0 0
  %744 = vmatprep.subr.bf16.mxu0 0
  %745 = vmatpush1.bf16.msra.mxu0 0
  %746 = vmatprep.subr.bf16.mxu0 0
  %747 = vmatpush1.bf16.msra.mxu0 0
  %748 = vmatprep.subr.bf16.mxu0 0
  %749 = vmatpush1.bf16.msra.mxu0 0
  %750 = vmatprep.subr.bf16.mxu0 0
  %751 = vmatpush1.bf16.msra.mxu0 0
  %752 = vmatprep.subr.bf16.mxu0 0
  %753 = vmatpush1.bf16.msra.mxu0 0
  %754 = vmatprep.subr.bf16.mxu0 0
  %755 = vmatpush1.bf16.msra.mxu0 0
  %756 = vmatprep.subr.bf16.mxu0 0
  %757 = vmatpush1.bf16.msra.mxu0 0
  %758 = vmatprep.subr.bf16.mxu0 0
  %759 = vmatpush1.bf16.msra.mxu0 0
  %760 = vmatprep.subr.bf16.mxu0 0
  %761 = vmatpush1.bf16.msra.mxu0 0
  %762 = vmatprep.subr.bf16.mxu0 0
  %763 = vmatpush1.bf16.msra.mxu0 0
  %764 = vmatprep.subr.bf16.mxu0 0
  %765 = vmatpush1.bf16.msra.mxu0 0
  %766 = vmatprep.subr.bf16.mxu0 0
  %767 = vmatpush1.bf16.msra.mxu0 0
  %768 = vmatprep.subr.bf16.mxu0 0
  %769 = vmatpush1.bf16.msra.mxu0 0
  %770 = vmatprep.mubr.bf16.mxu0 0
  %771 = vmatmul.mubr.bf16.gmra.mrb[0].mxu0 %v733
  %v772 = vpop.f32.mrb[0].mxu0
  %v773 = vadd.f32 0.0, %v772
  %v774 = vpop.f32.mrb[0].mxu0
  %v775 = vpop.f32.mrb[0].mxu0
  %v776 = vpop.f32.mrb[0].mxu0
  %777 = vdwg.mxu0
  %778 = vrot.lane.b32.xlu0 %v139, 64
  %v779 = vpop.permute.xlu0 %778
  %v781 = vsel %vm147, %v628, 0
  %v784 = vsel %vm638, %v779, 0
  %786 = vmatprep.subr.bf16.mxu0 0
  %787 = vmatpush1.bf16.msra.mxu0 %v784
  %788 = vmatprep.subr.bf16.mxu0 0
  %789 = vmatpush1.bf16.msra.mxu0 0
  %790 = vmatprep.subr.bf16.mxu0 0
  %791 = vmatpush1.bf16.msra.mxu0 0
  %792 = vmatprep.subr.bf16.mxu0 0
  %793 = vmatpush1.bf16.msra.mxu0 0
  %794 = vmatprep.subr.bf16.mxu0 0
  %795 = vmatpush1.bf16.msra.mxu0 0
  %796 = vmatprep.subr.bf16.mxu0 0
  %797 = vmatpush1.bf16.msra.mxu0 0
  %798 = vmatprep.subr.bf16.mxu0 0
  %799 = vmatpush1.bf16.msra.mxu0 0
  %800 = vmatprep.subr.bf16.mxu0 0
  %801 = vmatpush1.bf16.msra.mxu0 0
  %802 = vmatprep.subr.bf16.mxu0 0
  %803 = vmatpush1.bf16.msra.mxu0 0
  %804 = vmatprep.subr.bf16.mxu0 0
  %805 = vmatpush1.bf16.msra.mxu0 0
  %806 = vmatprep.subr.bf16.mxu0 0
  %807 = vmatpush1.bf16.msra.mxu0 0
  %808 = vmatprep.subr.bf16.mxu0 0
  %809 = vmatpush1.bf16.msra.mxu0 0
  %810 = vmatprep.subr.bf16.mxu0 0
  %811 = vmatpush1.bf16.msra.mxu0 0
  %812 = vmatprep.subr.bf16.mxu0 0
  %813 = vmatpush1.bf16.msra.mxu0 0
  %814 = vmatprep.subr.bf16.mxu0 0
  %815 = vmatpush1.bf16.msra.mxu0 0
  %816 = vmatprep.subr.bf16.mxu0 0
  %817 = vmatpush1.bf16.msra.mxu0 0
  %818 = vmatprep.mubr.bf16.mxu0 0
  %819 = vmatmul.mubr.bf16.gmra.mrb[0].mxu0 %v781
  %v820 = vpop.f32.mrb[0].mxu0
  %v821 = vadd.f32 0.0, %v820
  %v822 = vpop.f32.mrb[0].mxu0
  %v823 = vpop.f32.mrb[0].mxu0
  %v824 = vpop.f32.mrb[0].mxu0
  %825 = vdwg.mxu0
  %826 = vrot.lane.b32.xlu0 %v140, 64
  %v827 = vpop.permute.xlu0 %826
  %v829 = vsel %vm147, %v629, 0
  %v832 = vsel %vm638, %v827, 0
  %834 = vmatprep.subr.bf16.mxu0 0
  %835 = vmatpush1.bf16.msra.mxu0 %v832
  %836 = vmatprep.subr.bf16.mxu0 0
  %837 = vmatpush1.bf16.msra.mxu0 0
  %838 = vmatprep.subr.bf16.mxu0 0
  %839 = vmatpush1.bf16.msra.mxu0 0
  %840 = vmatprep.subr.bf16.mxu0 0
  %841 = vmatpush1.bf16.msra.mxu0 0
  %842 = vmatprep.subr.bf16.mxu0 0
  %843 = vmatpush1.bf16.msra.mxu0 0
  %844 = vmatprep.subr.bf16.mxu0 0
  %845 = vmatpush1.bf16.msra.mxu0 0
  %846 = vmatprep.subr.bf16.mxu0 0
  %847 = vmatpush1.bf16.msra.mxu0 0
  %848 = vmatprep.subr.bf16.mxu0 0
  %849 = vmatpush1.bf16.msra.mxu0 0
  %850 = vmatprep.subr.bf16.mxu0 0
  %851 = vmatpush1.bf16.msra.mxu0 0
  %852 = vmatprep.subr.bf16.mxu0 0
  %853 = vmatpush1.bf16.msra.mxu0 0
  %854 = vmatprep.subr.bf16.mxu0 0
  %855 = vmatpush1.bf16.msra.mxu0 0
  %856 = vmatprep.subr.bf16.mxu0 0
  %857 = vmatpush1.bf16.msra.mxu0 0
  %858 = vmatprep.subr.bf16.mxu0 0
  %859 = vmatpush1.bf16.msra.mxu0 0
  %860 = vmatprep.subr.bf16.mxu0 0
  %861 = vmatpush1.bf16.msra.mxu0 0
  %862 = vmatprep.subr.bf16.mxu0 0
  %863 = vmatpush1.bf16.msra.mxu0 0
  %864 = vmatprep.subr.bf16.mxu0 0
  %865 = vmatpush1.bf16.msra.mxu0 0
  %866 = vmatprep.mubr.bf16.mxu0 0
  %867 = vmatmul.mubr.bf16.gmra.mrb[0].mxu0 %v829
  %v868 = vpop.f32.mrb[0].mxu0
  %v869 = vadd.f32 0.0, %v868
  %v870 = vpop.f32.mrb[0].mxu0
  %v871 = vpop.f32.mrb[0].mxu0
  %v872 = vpop.f32.mrb[0].mxu0
  %873 = vdwg.mxu0
  %874 = vrot.lane.b32.xlu0 %v141, 64
  %v875 = vpop.permute.xlu0 %874
  %v877 = vsel %vm147, %v630, 0
  %v880 = vsel %vm638, %v875, 0
  %882 = vmatprep.subr.bf16.mxu0 0
  %883 = vmatpush1.bf16.msra.mxu0 %v880
  %884 = vmatprep.subr.bf16.mxu0 0
  %885 = vmatpush1.bf16.msra.mxu0 0
  %886 = vmatprep.subr.bf16.mxu0 0
  %887 = vmatpush1.bf16.msra.mxu0 0
  %888 = vmatprep.subr.bf16.mxu0 0
  %889 = vmatpush1.bf16.msra.mxu0 0
  %890 = vmatprep.subr.bf16.mxu0 0
  %891 = vmatpush1.bf16.msra.mxu0 0
  %892 = vmatprep.subr.bf16.mxu0 0
  %893 = vmatpush1.bf16.msra.mxu0 0
  %894 = vmatprep.subr.bf16.mxu0 0
  %895 = vmatpush1.bf16.msra.mxu0 0
  %896 = vmatprep.subr.bf16.mxu0 0
  %897 = vmatpush1.bf16.msra.mxu0 0
  %898 = vmatprep.subr.bf16.mxu0 0
  %899 = vmatpush1.bf16.msra.mxu0 0
  %900 = vmatprep.subr.bf16.mxu0 0
  %901 = vmatpush1.bf16.msra.mxu0 0
  %902 = vmatprep.subr.bf16.mxu0 0
  %903 = vmatpush1.bf16.msra.mxu0 0
  %904 = vmatprep.subr.bf16.mxu0 0
  %905 = vmatpush1.bf16.msra.mxu0 0
  %906 = vmatprep.subr.bf16.mxu0 0
  %907 = vmatpush1.bf16.msra.mxu0 0
  %908 = vmatprep.subr.bf16.mxu0 0
  %909 = vmatpush1.bf16.msra.mxu0 0
  %910 = vmatprep.subr.bf16.mxu0 0
  %911 = vmatpush1.bf16.msra.mxu0 0
  %912 = vmatprep.subr.bf16.mxu0 0
  %913 = vmatpush1.bf16.msra.mxu0 0
  %914 = vmatprep.mubr.bf16.mxu0 0
  %915 = vmatmul.mubr.bf16.gmra.mrb[0].mxu0 %v877
  %v916 = vpop.f32.mrb[0].mxu0
  %v917 = vadd.f32 0.0, %v916
  %v918 = vpop.f32.mrb[0].mxu0
  %v919 = vpop.f32.mrb[0].mxu0
  %v920 = vpop.f32.mrb[0].mxu0
  %921 = vdwg.mxu0
  %922 = vrot.lane.b32.xlu0 %v142, 64
  %v923 = vpop.permute.xlu0 %922
  %v925 = vsel %vm147, %v631, 0
  %v928 = vsel %vm638, %v923, 0
  %930 = vmatprep.subr.bf16.mxu0 0
  %931 = vmatpush1.bf16.msra.mxu0 %v928
  %932 = vmatprep.subr.bf16.mxu0 0
  %933 = vmatpush1.bf16.msra.mxu0 0
  %934 = vmatprep.subr.bf16.mxu0 0
  %935 = vmatpush1.bf16.msra.mxu0 0
  %936 = vmatprep.subr.bf16.mxu0 0
  %937 = vmatpush1.bf16.msra.mxu0 0
  %938 = vmatprep.subr.bf16.mxu0 0
  %939 = vmatpush1.bf16.msra.mxu0 0
  %940 = vmatprep.subr.bf16.mxu0 0
  %941 = vmatpush1.bf16.msra.mxu0 0
  %942 = vmatprep.subr.bf16.mxu0 0
  %943 = vmatpush1.bf16.msra.mxu0 0
  %944 = vmatprep.subr.bf16.mxu0 0
  %945 = vmatpush1.bf16.msra.mxu0 0
  %946 = vmatprep.subr.bf16.mxu0 0
  %947 = vmatpush1.bf16.msra.mxu0 0
  %948 = vmatprep.subr.bf16.mxu0 0
  %949 = vmatpush1.bf16.msra.mxu0 0
  %950 = vmatprep.subr.bf16.mxu0 0
  %951 = vmatpush1.bf16.msra.mxu0 0
  %952 = vmatprep.subr.bf16.mxu0 0
  %953 = vmatpush1.bf16.msra.mxu0 0
  %954 = vmatprep.subr.bf16.mxu0 0
  %955 = vmatpush1.bf16.msra.mxu0 0
  %956 = vmatprep.subr.bf16.mxu0 0
  %957 = vmatpush1.bf16.msra.mxu0 0
  %958 = vmatprep.subr.bf16.mxu0 0
  %959 = vmatpush1.bf16.msra.mxu0 0
  %960 = vmatprep.subr.bf16.mxu0 0
  %961 = vmatpush1.bf16.msra.mxu0 0
  %962 = vmatprep.mubr.bf16.mxu0 0
  %963 = vmatmul.mubr.bf16.gmra.mrb[0].mxu0 %v925
  %v964 = vpop.f32.mrb[0].mxu0
  %v965 = vadd.f32 0.0, %v964
  %v966 = vpop.f32.mrb[0].mxu0
  %v967 = vpop.f32.mrb[0].mxu0
  %v968 = vpop.f32.mrb[0].mxu0
  %969 = vdwg.mxu0
  %970 = vrot.lane.b32.xlu0 %v143, 64
  %v971 = vpop.permute.xlu0 %970
  %v973 = vsel %vm147, %v632, 0
  %v976 = vsel %vm638, %v971, 0
  %978 = vmatprep.subr.bf16.mxu0 0
  %979 = vmatpush1.bf16.msra.mxu0 %v976
  %980 = vmatprep.subr.bf16.mxu0 0
  %981 = vmatpush1.bf16.msra.mxu0 0
  %982 = vmatprep.subr.bf16.mxu0 0
  %983 = vmatpush1.bf16.msra.mxu0 0
  %984 = vmatprep.subr.bf16.mxu0 0
  %985 = vmatpush1.bf16.msra.mxu0 0
  %986 = vmatprep.subr.bf16.mxu0 0
  %987 = vmatpush1.bf16.msra.mxu0 0
  %988 = vmatprep.subr.bf16.mxu0 0
  %989 = vmatpush1.bf16.msra.mxu0 0
  %990 = vmatprep.subr.bf16.mxu0 0
  %991 = vmatpush1.bf16.msra.mxu0 0
  %992 = vmatprep.subr.bf16.mxu0 0
  %993 = vmatpush1.bf16.msra.mxu0 0
  %994 = vmatprep.subr.bf16.mxu0 0
  %995 = vmatpush1.bf16.msra.mxu0 0
  %996 = vmatprep.subr.bf16.mxu0 0
  %997 = vmatpush1.bf16.msra.mxu0 0
  %998 = vmatprep.subr.bf16.mxu0 0
  %999 = vmatpush1.bf16.msra.mxu0 0
  %1000 = vmatprep.subr.bf16.mxu0 0
  %1001 = vmatpush1.bf16.msra.mxu0 0
  %1002 = vmatprep.subr.bf16.mxu0 0
  %1003 = vmatpush1.bf16.msra.mxu0 0
  %1004 = vmatprep.subr.bf16.mxu0 0
  %1005 = vmatpush1.bf16.msra.mxu0 0
  %1006 = vmatprep.subr.bf16.mxu0 0
  %1007 = vmatpush1.bf16.msra.mxu0 0
  %1008 = vmatprep.subr.bf16.mxu0 0
  %1009 = vmatpush1.bf16.msra.mxu0 0
  %1010 = vmatprep.mubr.bf16.mxu0 0
  %1011 = vmatmul.mubr.bf16.gmra.mrb[0].mxu0 %v973
  %v1012 = vpop.f32.mrb[0].mxu0
  %v1013 = vadd.f32 0.0, %v1012
  %v1014 = vpop.f32.mrb[0].mxu0
  %v1015 = vpop.f32.mrb[0].mxu0
  %v1016 = vpop.f32.mrb[0].mxu0
  %1017 = vdwg.mxu0
  %1018 = vst.msk [vmem:[#allocation2] sm:$0xff] %vm147, %v677
  %1019 = vst.msk [vmem:[#allocation2 + $0x8] sm:$0xff] %vm147, %v725
  %1022 = vrot.lane.b32.xlu0 %v773, 8
  %v1023 = vpop.permute.xlu0 %1022
  %1024 = vrot.lane.b32.xlu0 %v821, 8
  %v1025 = vpop.permute.xlu0 %1024
  %vm1028 = vcmask 130112
  %1029 = vst.msk [vmem:[#allocation2] sm:$0xff] %vm1028, %v1023
  %1030 = vst.msk [vmem:[#allocation2 + $0x8] sm:$0xff] %vm1028, %v1025
  %1033 = vrot.lane.b32.xlu0 %v869, 16
  %v1034 = vpop.permute.xlu0 %1033
  %1035 = vrot.lane.b32.xlu0 %v917, 16
  %v1036 = vpop.permute.xlu0 %1035
  %vm1039 = vcmask 195712
  %1040 = vst.msk [vmem:[#allocation2] sm:$0xff] %vm1039, %v1034
  %1041 = vst.msk [vmem:[#allocation2 + $0x8] sm:$0xff] %vm1039, %v1036
  %1044 = vrot.lane.b32.xlu0 %v965, 24
  %v1045 = vpop.permute.xlu0 %1044
  %1046 = vrot.lane.b32.xlu0 %v1013, 24
  %v1047 = vpop.permute.xlu0 %1046
  %vm1050 = vcmask 261312
  %1051 = vst.msk [vmem:[#allocation2] sm:$0xff] %vm1050, %v1045
  %1052 = vst.msk [vmem:[#allocation2 + $0x8] sm:$0xff] %vm1050, %v1047
  %v1053 = vld [vmem:[#allocation2] sm:$0xff]
  %v1054 = vld [vmem:[#allocation2 + $0x8] sm:$0xff]
  %v1055 = vld [vmem:[%s3] sm:$0xf]
  %v1056 = vld [vmem:[%s3 + $0x4] sm:$0xf]
  %v1057 = vld [vmem:[%s3 + $0x8] sm:$0xf]
  %v1058 = vld [vmem:[%s3 + $0xc] sm:$0xf]
  %v1059 = vpack.c.bf16 %v1054, %v1053
  %v1060 = vld [vmem:[%s4] sm:$0x1]
  %v1062 = vlaneseq
  %v1063 = vshrl.u32 %v1062, 7
  %v1064 = vsub.s32 0, %v1063
  %v1065 = vrot.slane %v1060, %v1064
  %v1071 = vunpack.c.l.b16 %v1055
  %v1072 = vunpack.c.l.b16 %v1056
  %v1073 = vunpack.c.l.b16 %v1057
  %v1074 = vunpack.c.l.b16 %v1058
  %v1075 = vpack.c.b16 %v1072, %v1071
  %v1076 = vpack.c.b16 %v1074, %v1073
  %v1080 = vsel %vm71, %v1059, 0
  %1082 = vmatprep.subr.bf16.mxu0 0
  %1083 = vmatpush1.bf16.msra.mxu0 %v1075
  %1084 = vmatprep.subr.bf16.mxu0 0
  %1085 = vmatpush1.bf16.msra.mxu0 %v1076
  %1086 = vmatprep.subr.bf16.mxu0 0
  %1087 = vmatpush1.bf16.msra.mxu0 0
  %1088 = vmatprep.subr.bf16.mxu0 0
  %1089 = vmatpush1.bf16.msra.mxu0 0
  %1090 = vmatprep.subr.bf16.mxu0 0
  %1091 = vmatpush1.bf16.msra.mxu0 0
  %1092 = vmatprep.subr.bf16.mxu0 0
  %1093 = vmatpush1.bf16.msra.mxu0 0
  %1094 = vmatprep.subr.bf16.mxu0 0
  %1095 = vmatpush1.bf16.msra.mxu0 0
  %1096 = vmatprep.subr.bf16.mxu0 0
  %1097 = vmatpush1.bf16.msra.mxu0 0
  %1098 = vmatprep.subr.bf16.mxu0 0
  %1099 = vmatpush1.bf16.msra.mxu0 0
  %1100 = vmatprep.subr.bf16.mxu0 0
  %1101 = vmatpush1.bf16.msra.mxu0 0
  %1102 = vmatprep.subr.bf16.mxu0 0
  %1103 = vmatpush1.bf16.msra.mxu0 0
  %1104 = vmatprep.subr.bf16.mxu0 0
  %1105 = vmatpush1.bf16.msra.mxu0 0
  %1106 = vmatprep.subr.bf16.mxu0 0
  %1107 = vmatpush1.bf16.msra.mxu0 0
  %1108 = vmatprep.subr.bf16.mxu0 0
  %1109 = vmatpush1.bf16.msra.mxu0 0
  %1110 = vmatprep.subr.bf16.mxu0 0
  %1111 = vmatpush1.bf16.msra.mxu0 0
  %1112 = vmatprep.subr.bf16.mxu0 0
  %1113 = vmatpush1.bf16.msra.mxu0 0
  %1114 = vmatprep.mubr.bf16.mxu0 0
  %1115 = vmatmul.mubr.bf16.gmra.mrb[0].mxu0 %v1080
  %v1116 = vpop.f32.mrb[0].mxu0
  %v1117 = vadd.f32 %v1065, %v1116
  %v1118 = vpop.f32.mrb[0].mxu0
  %v1119 = vpop.f32.mrb[0].mxu0
  %v1120 = vadd.f32 %v1065, %v1119
  %v1121 = vpop.f32.mrb[0].mxu0
  %1122 = vdwg.mxu0
  %v1123 = vadd.f32 %v45, %v1117
  %v1124 = vadd.f32 %v46, %v1120
  %v1125 = vld [vmem:[%s5] sm:$0x1]
  %v1126 = vld [vmem:[%s6] sm:$0x1]
  %v1127 = vsel %vm71, %v1123, 0.0
  %1128 = vadd.xlane.f32.xlu0 %v1127
  %v1129 = vpop.xlane.xlu0 %1128
  %v1130 = vsel %vm71, %v1124, 0.0
  %1131 = vadd.xlane.f32.xlu0 %v1130
  %v1132 = vpop.xlane.xlu0 %1131
  %v1133 = vrcp.pop 32.0
  %v1134 = vmul.f32 %v1129, %v1133
  %v1135 = vmul.f32 %v1132, %v1133
  %v1136 = vsub.f32 %v1123, %v1134
  %v1137 = vsub.f32 %v1124, %v1135
  %v1138 = vmul.f32 %v1136, %v1136
  %v1139 = vmul.f32 %v1137, %v1137
  %v1140 = vsel %vm71, %v1138, 0.0
  %1141 = vadd.xlane.f32.xlu0 %v1140
  %v1142 = vpop.xlane.xlu0 %1141
  %v1143 = vsel %vm71, %v1139, 0.0
  %1144 = vadd.xlane.f32.xlu0 %v1143
  %v1145 = vpop.xlane.xlu0 %1144
  %v1146 = vmul.f32 %v1142, %v1133
  %v1147 = vmul.f32 %v1145, %v1133
  %v1148 = vadd.f32 %v1146, 1e-05
  %v1149 = vadd.f32 %v1147, 1e-05
  %v1150 = vrsqrt.pop %v1148
  %v1151 = vrsqrt.pop %v1149
  %v1152 = vmul.f32 %v1136, %v1150
  %v1153 = vmul.f32 %v1137, %v1151
  %v1155 = vlaneseq
  %v1156 = vshrl.u32 %v1155, 7
  %v1157 = vsub.s32 0, %v1156
  %v1158 = vrot.slane %v1125, %v1157
  %v1160 = vmul.f32 %v1152, %v1158
  %v1161 = vmul.f32 %v1153, %v1158
  %v1163 = vlaneseq
  %v1164 = vshrl.u32 %v1163, 7
  %v1165 = vsub.s32 0, %v1164
  %v1166 = vrot.slane %v1126, %v1165
  %v1168 = vadd.f32 %v1160, %v1166
  %v1169 = vadd.f32 %v1161, %v1166
  %v1170 = vld [vmem:[%s7] sm:$0xf]
  %v1171 = vld [vmem:[%s7 + $0x4] sm:$0xf]
  %v1172 = vld [vmem:[%s7 + $0x8] sm:$0xf]
  %v1173 = vld [vmem:[%s7 + $0xc] sm:$0xf]
  %v1174 = vpack.c.bf16 %v1169, %v1168
  %v1175 = vld [vmem:[%s8] sm:$0x1]
  %v1177 = vlaneseq
  %v1178 = vshrl.u32 %v1177, 7
  %v1179 = vsub.s32 0, %v1178
  %v1180 = vrot.slane %v1175, %v1179
  %v1186 = vunpack.c.l.b16 %v1170
  %v1187 = vunpack.c.l.b16 %v1171
  %v1188 = vunpack.c.l.b16 %v1172
  %v1189 = vunpack.c.l.b16 %v1173
  %v1190 = vpack.c.b16 %v1187, %v1186
  %v1191 = vpack.c.b16 %v1189, %v1188
  %v1195 = vsel %vm71, %v1174, 0
  %1197 = vmatprep.subr.bf16.mxu0 0
  %1198 = vmatpush1.bf16.msra.mxu0 %v1190
  %1199 = vmatprep.subr.bf16.mxu0 0
  %1200 = vmatpush1.bf16.msra.mxu0 %v1191
  %1201 = vmatprep.subr.bf16.mxu0 0
  %1202 = vmatpush1.bf16.msra.mxu0 0
  %1203 = vmatprep.subr.bf16.mxu0 0
  %1204 = vmatpush1.bf16.msra.mxu0 0
  %1205 = vmatprep.subr.bf16.mxu0 0
  %1206 = vmatpush1.bf16.msra.mxu0 0
  %1207 = vmatprep.subr.bf16.mxu0 0
  %1208 = vmatpush1.bf16.msra.mxu0 0
  %1209 = vmatprep.subr.bf16.mxu0 0
  %1210 = vmatpush1.bf16.msra.mxu0 0
  %1211 = vmatprep.subr.bf16.mxu0 0
  %1212 = vmatpush1.bf16.msra.mxu0 0
  %1213 = vmatprep.subr.bf16.mxu0 0
  %1214 = vmatpush1.bf16.msra.mxu0 0
  %1215 = vmatprep.subr.bf16.mxu0 0
  %1216 = vmatpush1.bf16.msra.mxu0 0
  %1217 = vmatprep.subr.bf16.mxu0 0
  %1218 = vmatpush1.bf16.msra.mxu0 0
  %1219 = vmatprep.subr.bf16.mxu0 0
  %1220 = vmatpush1.bf16.msra.mxu0 0
  %1221 = vmatprep.subr.bf16.mxu0 0
  %1222 = vmatpush1.bf16.msra.mxu0 0
  %1223 = vmatprep.subr.bf16.mxu0 0
  %1224 = vmatpush1.bf16.msra.mxu0 0
  %1225 = vmatprep.subr.bf16.mxu0 0
  %1226 = vmatpush1.bf16.msra.mxu0 0
  %1227 = vmatprep.subr.bf16.mxu0 0
  %1228 = vmatpush1.bf16.msra.mxu0 0
  %1229 = vmatprep.mubr.bf16.mxu0 0
  %1230 = vmatmul.mubr.bf16.gmra.mrb[0].mxu0 %v1195
  %v1231 = vpop.f32.mrb[0].mxu0
  %v1232 = vadd.f32 %v1180, %v1231
  %v1233 = vpop.f32.mrb[0].mxu0
  %v1234 = vpop.f32.mrb[0].mxu0
  %v1235 = vadd.f32 %v1180, %v1234
  %v1236 = vpop.f32.mrb[0].mxu0
  %1237 = vdwg.mxu0
  %v1238 = vmax.f32 %v1232, 0.0
  %v1239 = vmax.f32 %v1235, 0.0
  %v1240 = vld [vmem:[%s9] sm:$0xf]
  %v1241 = vld [vmem:[%s9 + $0x4] sm:$0xf]
  %v1242 = vld [vmem:[%s9 + $0x8] sm:$0xf]
  %v1243 = vld [vmem:[%s9 + $0xc] sm:$0xf]
  %v1244 = vld [vmem:[%s9 + $0x10] sm:$0xf]
  %v1245 = vld [vmem:[%s9 + $0x14] sm:$0xf]
  %v1246 = vld [vmem:[%s9 + $0x18] sm:$0xf]
  %v1247 = vld [vmem:[%s9 + $0x1c] sm:$0xf]
  %v1248 = vpack.c.bf16 %v1239, %v1238
  %v1249 = vld [vmem:[%s10] sm:$0x1]
  %v1251 = vlaneseq
  %v1252 = vshrl.u32 %v1251, 7
  %v1253 = vsub.s32 0, %v1252
  %v1254 = vrot.slane %v1249, %v1253
  %v1264 = vunpack.c.l.b16 %v1240
  %v1265 = vunpack.c.l.b16 %v1241
  %v1266 = vunpack.c.l.b16 %v1242
  %v1267 = vunpack.c.l.b16 %v1243
  %v1268 = vunpack.c.l.b16 %v1244
  %v1269 = vunpack.c.l.b16 %v1245
  %v1270 = vunpack.c.l.b16 %v1246
  %v1271 = vunpack.c.l.b16 %v1247
  %v1272 = vpack.c.b16 %v1265, %v1264
  %v1273 = vpack.c.b16 %v1267, %v1266
  %v1274 = vpack.c.b16 %v1269, %v1268
  %v1275 = vpack.c.b16 %v1271, %v1270
  %vm1280 = vcmask 523264
  %v1282 = vsel %vm1280, %v1248, 0
  %1284 = vmatprep.subr.bf16.mxu0 0
  %1285 = vmatpush1.bf16.msra.mxu0 %v1272
  %1286 = vmatprep.subr.bf16.mxu0 0
  %1287 = vmatpush1.bf16.msra.mxu0 %v1273
  %1288 = vmatprep.subr.bf16.mxu0 0
  %1289 = vmatpush1.bf16.msra.mxu0 %v1274
  %1290 = vmatprep.subr.bf16.mxu0 0
  %1291 = vmatpush1.bf16.msra.mxu0 %v1275
  %1292 = vmatprep.subr.bf16.mxu0 0
  %1293 = vmatpush1.bf16.msra.mxu0 0
  %1294 = vmatprep.subr.bf16.mxu0 0
  %1295 = vmatpush1.bf16.msra.mxu0 0
  %1296 = vmatprep.subr.bf16.mxu0 0
  %1297 = vmatpush1.bf16.msra.mxu0 0
  %1298 = vmatprep.subr.bf16.mxu0 0
  %1299 = vmatpush1.bf16.msra.mxu0 0
  %1300 = vmatprep.subr.bf16.mxu0 0
  %1301 = vmatpush1.bf16.msra.mxu0 0
  %1302 = vmatprep.subr.bf16.mxu0 0
  %1303 = vmatpush1.bf16.msra.mxu0 0
  %1304 = vmatprep.subr.bf16.mxu0 0
  %1305 = vmatpush1.bf16.msra.mxu0 0
  %1306 = vmatprep.subr.bf16.mxu0 0
  %1307 = vmatpush1.bf16.msra.mxu0 0
  %1308 = vmatprep.subr.bf16.mxu0 0
  %1309 = vmatpush1.bf16.msra.mxu0 0
  %1310 = vmatprep.subr.bf16.mxu0 0
  %1311 = vmatpush1.bf16.msra.mxu0 0
  %1312 = vmatprep.subr.bf16.mxu0 0
  %1313 = vmatpush1.bf16.msra.mxu0 0
  %1314 = vmatprep.subr.bf16.mxu0 0
  %1315 = vmatpush1.bf16.msra.mxu0 0
  %1316 = vmatprep.mubr.bf16.mxu0 0
  %1317 = vmatmul.mubr.bf16.gmra.mrb[0].mxu0 %v1282
  %v1318 = vpop.f32.mrb[0].mxu0
  %v1319 = vadd.f32 %v1254, %v1318
  %v1320 = vpop.f32.mrb[0].mxu0
  %v1321 = vpop.f32.mrb[0].mxu0
  %v1322 = vadd.f32 %v1254, %v1321
  %v1323 = vpop.f32.mrb[0].mxu0
  %1324 = vdwg.mxu0
  %v1325 = vadd.f32 %v1168, %v1319
  %v1326 = vadd.f32 %v1169, %v1322
  %v1327 = vld [vmem:[%s11] sm:$0x1]
  %v1328 = vld [vmem:[%s12] sm:$0x1]
  %v1329 = vsel %vm71, %v1325, 0.0
  %1330 = vadd.xlane.f32.xlu0 %v1329
  %v1331 = vpop.xlane.xlu0 %1330
  %v1332 = vsel %vm71, %v1326, 0.0
  %1333 = vadd.xlane.f32.xlu0 %v1332
  %v1334 = vpop.xlane.xlu0 %1333
  %v1335 = vmul.f32 %v1331, %v1133
  %v1336 = vmul.f32 %v1334, %v1133
  %v1337 = vsub.f32 %v1325, %v1335
  %v1338 = vsub.f32 %v1326, %v1336
  %v1339 = vmul.f32 %v1337, %v1337
  %v1340 = vmul.f32 %v1338, %v1338
  %v1341 = vsel %vm71, %v1339, 0.0
  %1342 = vadd.xlane.f32.xlu0 %v1341
  %v1343 = vpop.xlane.xlu0 %1342
  %v1344 = vsel %vm71, %v1340, 0.0
  %1345 = vadd.xlane.f32.xlu0 %v1344
  %v1346 = vpop.xlane.xlu0 %1345
  %v1347 = vmul.f32 %v1343, %v1133
  %v1348 = vmul.f32 %v1346, %v1133
  %v1349 = vadd.f32 %v1347, 1e-05
  %v1350 = vadd.f32 %v1348, 1e-05
  %v1351 = vrsqrt.pop %v1349
  %v1352 = vrsqrt.pop %v1350
  %v1353 = vmul.f32 %v1337, %v1351
  %v1354 = vmul.f32 %v1338, %v1352
  %v1356 = vlaneseq
  %v1357 = vshrl.u32 %v1356, 7
  %v1358 = vsub.s32 0, %v1357
  %v1359 = vrot.slane %v1327, %v1358
  %v1361 = vmul.f32 %v1353, %v1359
  %v1362 = vmul.f32 %v1354, %v1359
  %v1364 = vlaneseq
  %v1365 = vshrl.u32 %v1364, 7
  %v1366 = vsub.s32 0, %v1365
  %v1367 = vrot.slane %v1328, %v1366
  %v1369 = vadd.f32 %v1361, %v1367
  %v1370 = vadd.f32 %v1362, %v1367
  %s1371 = scalar_lea.vmem %s1, 16
  %v1372 = vld [vmem:[%s1371] sm:$0xf]
  %v1373 = vld [vmem:[%s1371 + $0x4] sm:$0xf]
  %v1374 = vld [vmem:[%s1371 + $0x8] sm:$0xf]
  %v1375 = vld [vmem:[%s1371 + $0xc] sm:$0xf]
  %v1376 = vpack.c.bf16 %v1370, %v1369
  %s1377 = scalar_lea.vmem %s2, 1
  %v1378 = vld [vmem:[%s1377] sm:$0x1]
  %v1380 = vlaneseq
  %v1381 = vshrl.u32 %v1380, 7
  %v1382 = vsub.s32 0, %v1381
  %v1383 = vrot.slane %v1378, %v1382
  %v1389 = vunpack.c.l.b16 %v1372
  %v1390 = vunpack.c.l.b16 %v1373
  %v1391 = vunpack.c.l.b16 %v1374
  %v1392 = vunpack.c.l.b16 %v1375
  %v1393 = vpack.c.b16 %v1390, %v1389
  %v1394 = vpack.c.b16 %v1392, %v1391
  %v1398 = vsel %vm71, %v1376, 0
  %1400 = vmatprep.subr.bf16.mxu0 0
  %1401 = vmatpush1.bf16.msra.mxu0 %v1393
  %1402 = vmatprep.subr.bf16.mxu0 0
  %1403 = vmatpush1.bf16.msra.mxu0 %v1394
  %1404 = vmatprep.subr.bf16.mxu0 0
  %1405 = vmatpush1.bf16.msra.mxu0 0
  %1406 = vmatprep.subr.bf16.mxu0 0
  %1407 = vmatpush1.bf16.msra.mxu0 0
  %1408 = vmatprep.subr.bf16.mxu0 0
  %1409 = vmatpush1.bf16.msra.mxu0 0
  %1410 = vmatprep.subr.bf16.mxu0 0
  %1411 = vmatpush1.bf16.msra.mxu0 0
  %1412 = vmatprep.subr.bf16.mxu0 0
  %1413 = vmatpush1.bf16.msra.mxu0 0
  %1414 = vmatprep.subr.bf16.mxu0 0
  %1415 = vmatpush1.bf16.msra.mxu0 0
  %1416 = vmatprep.subr.bf16.mxu0 0
  %1417 = vmatpush1.bf16.msra.mxu0 0
  %1418 = vmatprep.subr.bf16.mxu0 0
  %1419 = vmatpush1.bf16.msra.mxu0 0
  %1420 = vmatprep.subr.bf16.mxu0 0
  %1421 = vmatpush1.bf16.msra.mxu0 0
  %1422 = vmatprep.subr.bf16.mxu0 0
  %1423 = vmatpush1.bf16.msra.mxu0 0
  %1424 = vmatprep.subr.bf16.mxu0 0
  %1425 = vmatpush1.bf16.msra.mxu0 0
  %1426 = vmatprep.subr.bf16.mxu0 0
  %1427 = vmatpush1.bf16.msra.mxu0 0
  %1428 = vmatprep.subr.bf16.mxu0 0
  %1429 = vmatpush1.bf16.msra.mxu0 0
  %1430 = vmatprep.subr.bf16.mxu0 0
  %1431 = vmatpush1.bf16.msra.mxu0 0
  %1432 = vmatprep.mubr.bf16.mxu0 0
  %1433 = vmatmul.mubr.bf16.gmra.mrb[0].mxu0 %v1398
  %v1434 = vpop.f32.mrb[0].mxu0
  %v1435 = vadd.f32 %v1383, %v1434
  %v1436 = vpop.f32.mrb[0].mxu0
  %v1437 = vpop.f32.mrb[0].mxu0
  %v1438 = vadd.f32 %v1383, %v1437
  %v1439 = vpop.f32.mrb[0].mxu0
  %1440 = vdwg.mxu0
  %1443 = vrot.lane.b32.xlu0 %v1435, 120
  %v1444 = vpop.permute.xlu0 %1443
  %1445 = vrot.lane.b32.xlu0 %v1438, 120
  %v1446 = vpop.permute.xlu0 %1445
  %1449 = vrot.lane.b32.xlu0 %v1435, 112
  %v1450 = vpop.permute.xlu0 %1449
  %1451 = vrot.lane.b32.xlu0 %v1438, 112
  %v1452 = vpop.permute.xlu0 %1451
  %1455 = vrot.lane.b32.xlu0 %v1435, 104
  %v1456 = vpop.permute.xlu0 %1455
  %1457 = vrot.lane.b32.xlu0 %v1438, 104
  %v1458 = vpop.permute.xlu0 %1457
  %v1461 = vpack.c.bf16 %v1435, %v1435
  %v1462 = vpack.c.bf16 %v1438, %v1438
  %v1463 = vpack.c.bf16 %v1444, %v1444
  %v1464 = vpack.c.bf16 %v1446, %v1446
  %v1465 = vpack.c.bf16 %v1450, %v1450
  %v1466 = vpack.c.bf16 %v1452, %v1452
  %v1467 = vpack.c.bf16 %v1456, %v1456
  %v1468 = vpack.c.bf16 %v1458, %v1458
  %1470 = vrot.lane.b32.xlu0 %v1461, 96
  %v1471 = vpop.permute.xlu0 %1470
  %v1473 = vsel %vm147, %v1461, 0
  %v1476 = vsel %vm147, %v1471, 0
  %1478 = vmatprep.subr.bf16.mxu0 0
  %1479 = vmatpush1.bf16.xpose.msra.mxu0 %v1476
  %1480 = vmatprep.subr.bf16.mxu0 0
  %1481 = vmatpush1.bf16.xpose.msra.mxu0 0
  %1482 = vmatprep.subr.bf16.mxu0 0
  %1483 = vmatpush1.bf16.xpose.msra.mxu0 0
  %1484 = vmatprep.subr.bf16.mxu0 0
  %1485 = vmatpush1.bf16.xpose.msra.mxu0 0
  %1486 = vmatprep.subr.bf16.mxu0 0
  %1487 = vmatpush1.bf16.xpose.msra.mxu0 0
  %1488 = vmatprep.subr.bf16.mxu0 0
  %1489 = vmatpush1.bf16.xpose.msra.mxu0 0
  %1490 = vmatprep.subr.bf16.mxu0 0
  %1491 = vmatpush1.bf16.xpose.msra.mxu0 0
  %1492 = vmatprep.subr.bf16.mxu0 0
  %1493 = vmatpush1.bf16.xpose.msra.mxu0 0
  %1494 = vmatprep.subr.bf16.mxu0 0
  %1495 = vmatpush1.bf16.xpose.msra.mxu0 0
  %1496 = vmatprep.subr.bf16.mxu0 0
  %1497 = vmatpush1.bf16.xpose.msra.mxu0 0
  %1498 = vmatprep.subr.bf16.mxu0 0
  %1499 = vmatpush1.bf16.xpose.msra.mxu0 0
  %1500 = vmatprep.subr.bf16.mxu0 0
  %1501 = vmatpush1.bf16.xpose.msra.mxu0 0
  %1502 = vmatprep.subr.bf16.mxu0 0
  %1503 = vmatpush1.bf16.xpose.msra.mxu0 0
  %1504 = vmatprep.subr.bf16.mxu0 0
  %1505 = vmatpush1.bf16.xpose.msra.mxu0 0
  %1506 = vmatprep.subr.bf16.mxu0 0
  %1507 = vmatpush1.bf16.xpose.msra.mxu0 0
  %1508 = vmatprep.subr.bf16.mxu0 0
  %1509 = vmatpush1.bf16.xpose.msra.mxu0 0
  %1510 = vmatprep.mubr.bf16.mxu0 0
  %1511 = vmatmul.mubr.bf16.gmra.mrb[0].mxu0 %v1473
  %v1512 = vpop.f32.mrb[0].mxu0
  %v1513 = vadd.f32 0.0, %v1512
  %v1514 = vpop.f32.mrb[0].mxu0
  %v1515 = vpop.f32.mrb[0].mxu0
  %v1516 = vpop.f32.mrb[0].mxu0
  %1517 = vdwg.mxu0
  %1519 = vrot.lane.b32.xlu0 %v1462, 96
  %v1520 = vpop.permute.xlu0 %1519
  %v1522 = vsel %vm147, %v1462, 0
  %v1525 = vsel %vm147, %v1520, 0
  %1527 = vmatprep.subr.bf16.mxu0 0
  %1528 = vmatpush1.bf16.xpose.msra.mxu0 %v1525
  %1529 = vmatprep.subr.bf16.mxu0 0
  %1530 = vmatpush1.bf16.xpose.msra.mxu0 0
  %1531 = vmatprep.subr.bf16.mxu0 0
  %1532 = vmatpush1.bf16.xpose.msra.mxu0 0
  %1533 = vmatprep.subr.bf16.mxu0 0
  %1534 = vmatpush1.bf16.xpose.msra.mxu0 0
  %1535 = vmatprep.subr.bf16.mxu0 0
  %1536 = vmatpush1.bf16.xpose.msra.mxu0 0
  %1537 = vmatprep.subr.bf16.mxu0 0
  %1538 = vmatpush1.bf16.xpose.msra.mxu0 0
  %1539 = vmatprep.subr.bf16.mxu0 0
  %1540 = vmatpush1.bf16.xpose.msra.mxu0 0
  %1541 = vmatprep.subr.bf16.mxu0 0
  %1542 = vmatpush1.bf16.xpose.msra.mxu0 0
  %1543 = vmatprep.subr.bf16.mxu0 0
  %1544 = vmatpush1.bf16.xpose.msra.mxu0 0
  %1545 = vmatprep.subr.bf16.mxu0 0
  %1546 = vmatpush1.bf16.xpose.msra.mxu0 0
  %1547 = vmatprep.subr.bf16.mxu0 0
  %1548 = vmatpush1.bf16.xpose.msra.mxu0 0
  %1549 = vmatprep.subr.bf16.mxu0 0
  %1550 = vmatpush1.bf16.xpose.msra.mxu0 0
  %1551 = vmatprep.subr.bf16.mxu0 0
  %1552 = vmatpush1.bf16.xpose.msra.mxu0 0
  %1553 = vmatprep.subr.bf16.mxu0 0
  %1554 = vmatpush1.bf16.xpose.msra.mxu0 0
  %1555 = vmatprep.subr.bf16.mxu0 0
  %1556 = vmatpush1.bf16.xpose.msra.mxu0 0
  %1557 = vmatprep.subr.bf16.mxu0 0
  %1558 = vmatpush1.bf16.xpose.msra.mxu0 0
  %1559 = vmatprep.mubr.bf16.mxu0 0
  %1560 = vmatmul.mubr.bf16.gmra.mrb[0].mxu0 %v1522
  %v1561 = vpop.f32.mrb[0].mxu0
  %v1562 = vadd.f32 0.0, %v1561
  %v1563 = vpop.f32.mrb[0].mxu0
  %v1564 = vpop.f32.mrb[0].mxu0
  %v1565 = vpop.f32.mrb[0].mxu0
  %1566 = vdwg.mxu0
  %1568 = vrot.lane.b32.xlu0 %v1463, 96
  %v1569 = vpop.permute.xlu0 %1568
  %v1571 = vsel %vm147, %v1463, 0
  %v1574 = vsel %vm147, %v1569, 0
  %1576 = vmatprep.subr.bf16.mxu0 0
  %1577 = vmatpush1.bf16.xpose.msra.mxu0 %v1574
  %1578 = vmatprep.subr.bf16.mxu0 0
  %1579 = vmatpush1.bf16.xpose.msra.mxu0 0
  %1580 = vmatprep.subr.bf16.mxu0 0
  %1581 = vmatpush1.bf16.xpose.msra.mxu0 0
  %1582 = vmatprep.subr.bf16.mxu0 0
  %1583 = vmatpush1.bf16.xpose.msra.mxu0 0
  %1584 = vmatprep.subr.bf16.mxu0 0
  %1585 = vmatpush1.bf16.xpose.msra.mxu0 0
  %1586 = vmatprep.subr.bf16.mxu0 0
  %1587 = vmatpush1.bf16.xpose.msra.mxu0 0
  %1588 = vmatprep.subr.bf16.mxu0 0
  %1589 = vmatpush1.bf16.xpose.msra.mxu0 0
  %1590 = vmatprep.subr.bf16.mxu0 0
  %1591 = vmatpush1.bf16.xpose.msra.mxu0 0
  %1592 = vmatprep.subr.bf16.mxu0 0
  %1593 = vmatpush1.bf16.xpose.msra.mxu0 0
  %1594 = vmatprep.subr.bf16.mxu0 0
  %1595 = vmatpush1.bf16.xpose.msra.mxu0 0
  %1596 = vmatprep.subr.bf16.mxu0 0
  %1597 = vmatpush1.bf16.xpose.msra.mxu0 0
  %1598 = vmatprep.subr.bf16.mxu0 0
  %1599 = vmatpush1.bf16.xpose.msra.mxu0 0
  %1600 = vmatprep.subr.bf16.mxu0 0
  %1601 = vmatpush1.bf16.xpose.msra.mxu0 0
  %1602 = vmatprep.subr.bf16.mxu0 0
  %1603 = vmatpush1.bf16.xpose.msra.mxu0 0
  %1604 = vmatprep.subr.bf16.mxu0 0
  %1605 = vmatpush1.bf16.xpose.msra.mxu0 0
  %1606 = vmatprep.subr.bf16.mxu0 0
  %1607 = vmatpush1.bf16.xpose.msra.mxu0 0
  %1608 = vmatprep.mubr.bf16.mxu0 0
  %1609 = vmatmul.mubr.bf16.gmra.mrb[0].mxu0 %v1571
  %v1610 = vpop.f32.mrb[0].mxu0
  %v1611 = vadd.f32 0.0, %v1610
  %v1612 = vpop.f32.mrb[0].mxu0
  %v1613 = vpop.f32.mrb[0].mxu0
  %v1614 = vpop.f32.mrb[0].mxu0
  %1615 = vdwg.mxu0
  %1617 = vrot.lane.b32.xlu0 %v1464, 96
  %v1618 = vpop.permute.xlu0 %1617
  %v1620 = vsel %vm147, %v1464, 0
  %v1623 = vsel %vm147, %v1618, 0
  %1625 = vmatprep.subr.bf16.mxu0 0
  %1626 = vmatpush1.bf16.xpose.msra.mxu0 %v1623
  %1627 = vmatprep.subr.bf16.mxu0 0
  %1628 = vmatpush1.bf16.xpose.msra.mxu0 0
  %1629 = vmatprep.subr.bf16.mxu0 0
  %1630 = vmatpush1.bf16.xpose.msra.mxu0 0
  %1631 = vmatprep.subr.bf16.mxu0 0
  %1632 = vmatpush1.bf16.xpose.msra.mxu0 0
  %1633 = vmatprep.subr.bf16.mxu0 0
  %1634 = vmatpush1.bf16.xpose.msra.mxu0 0
  %1635 = vmatprep.subr.bf16.mxu0 0
  %1636 = vmatpush1.bf16.xpose.msra.mxu0 0
  %1637 = vmatprep.subr.bf16.mxu0 0
  %1638 = vmatpush1.bf16.xpose.msra.mxu0 0
  %1639 = vmatprep.subr.bf16.mxu0 0
  %1640 = vmatpush1.bf16.xpose.msra.mxu0 0
  %1641 = vmatprep.subr.bf16.mxu0 0
  %1642 = vmatpush1.bf16.xpose.msra.mxu0 0
  %1643 = vmatprep.subr.bf16.mxu0 0
  %1644 = vmatpush1.bf16.xpose.msra.mxu0 0
  %1645 = vmatprep.subr.bf16.mxu0 0
  %1646 = vmatpush1.bf16.xpose.msra.mxu0 0
  %1647 = vmatprep.subr.bf16.mxu0 0
  %1648 = vmatpush1.bf16.xpose.msra.mxu0 0
  %1649 = vmatprep.subr.bf16.mxu0 0
  %1650 = vmatpush1.bf16.xpose.msra.mxu0 0
  %1651 = vmatprep.subr.bf16.mxu0 0
  %1652 = vmatpush1.bf16.xpose.msra.mxu0 0
  %1653 = vmatprep.subr.bf16.mxu0 0
  %1654 = vmatpush1.bf16.xpose.msra.mxu0 0
  %1655 = vmatprep.subr.bf16.mxu0 0
  %1656 = vmatpush1.bf16.xpose.msra.mxu0 0
  %1657 = vmatprep.mubr.bf16.mxu0 0
  %1658 = vmatmul.mubr.bf16.gmra.mrb[0].mxu0 %v1620
  %v1659 = vpop.f32.mrb[0].mxu0
  %v1660 = vadd.f32 0.0, %v1659
  %v1661 = vpop.f32.mrb[0].mxu0
  %v1662 = vpop.f32.mrb[0].mxu0
  %v1663 = vpop.f32.mrb[0].mxu0
  %1664 = vdwg.mxu0
  %1666 = vrot.lane.b32.xlu0 %v1465, 96
  %v1667 = vpop.permute.xlu0 %1666
  %v1669 = vsel %vm147, %v1465, 0
  %v1672 = vsel %vm147, %v1667, 0
  %1674 = vmatprep.subr.bf16.mxu0 0
  %1675 = vmatpush1.bf16.xpose.msra.mxu0 %v1672
  %1676 = vmatprep.subr.bf16.mxu0 0
  %1677 = vmatpush1.bf16.xpose.msra.mxu0 0
  %1678 = vmatprep.subr.bf16.mxu0 0
  %1679 = vmatpush1.bf16.xpose.msra.mxu0 0
  %1680 = vmatprep.subr.bf16.mxu0 0
  %1681 = vmatpush1.bf16.xpose.msra.mxu0 0
  %1682 = vmatprep.subr.bf16.mxu0 0
  %1683 = vmatpush1.bf16.xpose.msra.mxu0 0
  %1684 = vmatprep.subr.bf16.mxu0 0
  %1685 = vmatpush1.bf16.xpose.msra.mxu0 0
  %1686 = vmatprep.subr.bf16.mxu0 0
  %1687 = vmatpush1.bf16.xpose.msra.mxu0 0
  %1688 = vmatprep.subr.bf16.mxu0 0
  %1689 = vmatpush1.bf16.xpose.msra.mxu0 0
  %1690 = vmatprep.subr.bf16.mxu0 0
  %1691 = vmatpush1.bf16.xpose.msra.mxu0 0
  %1692 = vmatprep.subr.bf16.mxu0 0
  %1693 = vmatpush1.bf16.xpose.msra.mxu0 0
  %1694 = vmatprep.subr.bf16.mxu0 0
  %1695 = vmatpush1.bf16.xpose.msra.mxu0 0
  %1696 = vmatprep.subr.bf16.mxu0 0
  %1697 = vmatpush1.bf16.xpose.msra.mxu0 0
  %1698 = vmatprep.subr.bf16.mxu0 0
  %1699 = vmatpush1.bf16.xpose.msra.mxu0 0
  %1700 = vmatprep.subr.bf16.mxu0 0
  %1701 = vmatpush1.bf16.xpose.msra.mxu0 0
  %1702 = vmatprep.subr.bf16.mxu0 0
  %1703 = vmatpush1.bf16.xpose.msra.mxu0 0
  %1704 = vmatprep.subr.bf16.mxu0 0
  %1705 = vmatpush1.bf16.xpose.msra.mxu0 0
  %1706 = vmatprep.mubr.bf16.mxu0 0
  %1707 = vmatmul.mubr.bf16.gmra.mrb[0].mxu0 %v1669
  %v1708 = vpop.f32.mrb[0].mxu0
  %v1709 = vadd.f32 0.0, %v1708
  %v1710 = vpop.f32.mrb[0].mxu0
  %v1711 = vpop.f32.mrb[0].mxu0
  %v1712 = vpop.f32.mrb[0].mxu0
  %1713 = vdwg.mxu0
  %1715 = vrot.lane.b32.xlu0 %v1466, 96
  %v1716 = vpop.permute.xlu0 %1715
  %v1718 = vsel %vm147, %v1466, 0
  %v1721 = vsel %vm147, %v1716, 0
  %1723 = vmatprep.subr.bf16.mxu0 0
  %1724 = vmatpush1.bf16.xpose.msra.mxu0 %v1721
  %1725 = vmatprep.subr.bf16.mxu0 0
  %1726 = vmatpush1.bf16.xpose.msra.mxu0 0
  %1727 = vmatprep.subr.bf16.mxu0 0
  %1728 = vmatpush1.bf16.xpose.msra.mxu0 0
  %1729 = vmatprep.subr.bf16.mxu0 0
  %1730 = vmatpush1.bf16.xpose.msra.mxu0 0
  %1731 = vmatprep.subr.bf16.mxu0 0
  %1732 = vmatpush1.bf16.xpose.msra.mxu0 0
  %1733 = vmatprep.subr.bf16.mxu0 0
  %1734 = vmatpush1.bf16.xpose.msra.mxu0 0
  %1735 = vmatprep.subr.bf16.mxu0 0
  %1736 = vmatpush1.bf16.xpose.msra.mxu0 0
  %1737 = vmatprep.subr.bf16.mxu0 0
  %1738 = vmatpush1.bf16.xpose.msra.mxu0 0
  %1739 = vmatprep.subr.bf16.mxu0 0
  %1740 = vmatpush1.bf16.xpose.msra.mxu0 0
  %1741 = vmatprep.subr.bf16.mxu0 0
  %1742 = vmatpush1.bf16.xpose.msra.mxu0 0
  %1743 = vmatprep.subr.bf16.mxu0 0
  %1744 = vmatpush1.bf16.xpose.msra.mxu0 0
  %1745 = vmatprep.subr.bf16.mxu0 0
  %1746 = vmatpush1.bf16.xpose.msra.mxu0 0
  %1747 = vmatprep.subr.bf16.mxu0 0
  %1748 = vmatpush1.bf16.xpose.msra.mxu0 0
  %1749 = vmatprep.subr.bf16.mxu0 0
  %1750 = vmatpush1.bf16.xpose.msra.mxu0 0
  %1751 = vmatprep.subr.bf16.mxu0 0
  %1752 = vmatpush1.bf16.xpose.msra.mxu0 0
  %1753 = vmatprep.subr.bf16.mxu0 0
  %1754 = vmatpush1.bf16.xpose.msra.mxu0 0
  %1755 = vmatprep.mubr.bf16.mxu0 0
  %1756 = vmatmul.mubr.bf16.gmra.mrb[0].mxu0 %v1718
  %v1757 = vpop.f32.mrb[0].mxu0
  %v1758 = vadd.f32 0.0, %v1757
  %v1759 = vpop.f32.mrb[0].mxu0
  %v1760 = vpop.f32.mrb[0].mxu0
  %v1761 = vpop.f32.mrb[0].mxu0
  %1762 = vdwg.mxu0
  %1764 = vrot.lane.b32.xlu0 %v1467, 96
  %v1765 = vpop.permute.xlu0 %1764
  %v1767 = vsel %vm147, %v1467, 0
  %v1770 = vsel %vm147, %v1765, 0
  %1772 = vmatprep.subr.bf16.mxu0 0
  %1773 = vmatpush1.bf16.xpose.msra.mxu0 %v1770
  %1774 = vmatprep.subr.bf16.mxu0 0
  %1775 = vmatpush1.bf16.xpose.msra.mxu0 0
  %1776 = vmatprep.subr.bf16.mxu0 0
  %1777 = vmatpush1.bf16.xpose.msra.mxu0 0
  %1778 = vmatprep.subr.bf16.mxu0 0
  %1779 = vmatpush1.bf16.xpose.msra.mxu0 0
  %1780 = vmatprep.subr.bf16.mxu0 0
  %1781 = vmatpush1.bf16.xpose.msra.mxu0 0
  %1782 = vmatprep.subr.bf16.mxu0 0
  %1783 = vmatpush1.bf16.xpose.msra.mxu0 0
  %1784 = vmatprep.subr.bf16.mxu0 0
  %1785 = vmatpush1.bf16.xpose.msra.mxu0 0
  %1786 = vmatprep.subr.bf16.mxu0 0
  %1787 = vmatpush1.bf16.xpose.msra.mxu0 0
  %1788 = vmatprep.subr.bf16.mxu0 0
  %1789 = vmatpush1.bf16.xpose.msra.mxu0 0
  %1790 = vmatprep.subr.bf16.mxu0 0
  %1791 = vmatpush1.bf16.xpose.msra.mxu0 0
  %1792 = vmatprep.subr.bf16.mxu0 0
  %1793 = vmatpush1.bf16.xpose.msra.mxu0 0
  %1794 = vmatprep.subr.bf16.mxu0 0
  %1795 = vmatpush1.bf16.xpose.msra.mxu0 0
  %1796 = vmatprep.subr.bf16.mxu0 0
  %1797 = vmatpush1.bf16.xpose.msra.mxu0 0
  %1798 = vmatprep.subr.bf16.mxu0 0
  %1799 = vmatpush1.bf16.xpose.msra.mxu0 0
  %1800 = vmatprep.subr.bf16.mxu0 0
  %1801 = vmatpush1.bf16.xpose.msra.mxu0 0
  %1802 = vmatprep.subr.bf16.mxu0 0
  %1803 = vmatpush1.bf16.xpose.msra.mxu0 0
  %1804 = vmatprep.mubr.bf16.mxu0 0
  %1805 = vmatmul.mubr.bf16.gmra.mrb[0].mxu0 %v1767
  %v1806 = vpop.f32.mrb[0].mxu0
  %v1807 = vadd.f32 0.0, %v1806
  %v1808 = vpop.f32.mrb[0].mxu0
  %v1809 = vpop.f32.mrb[0].mxu0
  %v1810 = vpop.f32.mrb[0].mxu0
  %1811 = vdwg.mxu0
  %1813 = vrot.lane.b32.xlu0 %v1468, 96
  %v1814 = vpop.permute.xlu0 %1813
  %v1816 = vsel %vm147, %v1468, 0
  %v1819 = vsel %vm147, %v1814, 0
  %1821 = vmatprep.subr.bf16.mxu0 0
  %1822 = vmatpush1.bf16.xpose.msra.mxu0 %v1819
  %1823 = vmatprep.subr.bf16.mxu0 0
  %1824 = vmatpush1.bf16.xpose.msra.mxu0 0
  %1825 = vmatprep.subr.bf16.mxu0 0
  %1826 = vmatpush1.bf16.xpose.msra.mxu0 0
  %1827 = vmatprep.subr.bf16.mxu0 0
  %1828 = vmatpush1.bf16.xpose.msra.mxu0 0
  %1829 = vmatprep.subr.bf16.mxu0 0
  %1830 = vmatpush1.bf16.xpose.msra.mxu0 0
  %1831 = vmatprep.subr.bf16.mxu0 0
  %1832 = vmatpush1.bf16.xpose.msra.mxu0 0
  %1833 = vmatprep.subr.bf16.mxu0 0
  %1834 = vmatpush1.bf16.xpose.msra.mxu0 0
  %1835 = vmatprep.subr.bf16.mxu0 0
  %1836 = vmatpush1.bf16.xpose.msra.mxu0 0
  %1837 = vmatprep.subr.bf16.mxu0 0
  %1838 = vmatpush1.bf16.xpose.msra.mxu0 0
  %1839 = vmatprep.subr.bf16.mxu0 0
  %1840 = vmatpush1.bf16.xpose.msra.mxu0 0
  %1841 = vmatprep.subr.bf16.mxu0 0
  %1842 = vmatpush1.bf16.xpose.msra.mxu0 0
  %1843 = vmatprep.subr.bf16.mxu0 0
  %1844 = vmatpush1.bf16.xpose.msra.mxu0 0
  %1845 = vmatprep.subr.bf16.mxu0 0
  %1846 = vmatpush1.bf16.xpose.msra.mxu0 0
  %1847 = vmatprep.subr.bf16.mxu0 0
  %1848 = vmatpush1.bf16.xpose.msra.mxu0 0
  %1849 = vmatprep.subr.bf16.mxu0 0
  %1850 = vmatpush1.bf16.xpose.msra.mxu0 0
  %1851 = vmatprep.subr.bf16.mxu0 0
  %1852 = vmatpush1.bf16.xpose.msra.mxu0 0
  %1853 = vmatprep.mubr.bf16.mxu0 0
  %1854 = vmatmul.mubr.bf16.gmra.mrb[0].mxu0 %v1816
  %v1855 = vpop.f32.mrb[0].mxu0
  %v1856 = vadd.f32 0.0, %v1855
  %v1857 = vpop.f32.mrb[0].mxu0
  %v1858 = vpop.f32.mrb[0].mxu0
  %v1859 = vpop.f32.mrb[0].mxu0
  %1860 = vdwg.mxu0
  %v1861 = vsel %vm147, %v1513, -inf
  %1862 = vmax.xlane.f32.xlu0 %v1861
  %v1863 = vpop.xlane.xlu0 %1862
  %v1864 = vsel %vm147, %v1562, -inf
  %1865 = vmax.xlane.f32.xlu0 %v1864
  %v1866 = vpop.xlane.xlu0 %1865
  %v1867 = vsel %vm147, %v1611, -inf
  %1868 = vmax.xlane.f32.xlu0 %v1867
  %v1869 = vpop.xlane.xlu0 %1868
  %v1870 = vsel %vm147, %v1660, -inf
  %1871 = vmax.xlane.f32.xlu0 %v1870
  %v1872 = vpop.xlane.xlu0 %1871
  %v1873 = vsel %vm147, %v1709, -inf
  %1874 = vmax.xlane.f32.xlu0 %v1873
  %v1875 = vpop.xlane.xlu0 %1874
  %v1876 = vsel %vm147, %v1758, -inf
  %1877 = vmax.xlane.f32.xlu0 %v1876
  %v1878 = vpop.xlane.xlu0 %1877
  %v1879 = vsel %vm147, %v1807, -inf
  %1880 = vmax.xlane.f32.xlu0 %v1879
  %v1881 = vpop.xlane.xlu0 %1880
  %v1882 = vsel %vm147, %v1856, -inf
  %1883 = vmax.xlane.f32.xlu0 %v1882
  %v1884 = vpop.xlane.xlu0 %1883
  %v1885 = vsub.f32 %v1513, %v1863
  %v1886 = vsub.f32 %v1562, %v1866
  %v1887 = vsub.f32 %v1611, %v1869
  %v1888 = vsub.f32 %v1660, %v1872
  %v1889 = vsub.f32 %v1709, %v1875
  %v1890 = vsub.f32 %v1758, %v1878
  %v1891 = vsub.f32 %v1807, %v1881
  %v1892 = vsub.f32 %v1856, %v1884
  %v1893 = vmul.f32 %v1885, 1.442695
  %v1894 = vpow.pop %v1893
  %v1895 = vmul.f32 %v1886, 1.442695
  %v1896 = vpow.pop %v1895
  %v1897 = vmul.f32 %v1887, 1.442695
  %v1898 = vpow.pop %v1897
  %v1899 = vmul.f32 %v1888, 1.442695
  %v1900 = vpow.pop %v1899
  %v1901 = vmul.f32 %v1889, 1.442695
  %v1902 = vpow.pop %v1901
  %v1903 = vmul.f32 %v1890, 1.442695
  %v1904 = vpow.pop %v1903
  %v1905 = vmul.f32 %v1891, 1.442695
  %v1906 = vpow.pop %v1905
  %v1907 = vmul.f32 %v1892, 1.442695
  %v1908 = vpow.pop %v1907
  %v1909 = vsel %vm147, %v1894, 0.0
  %1910 = vadd.xlane.f32.xlu0 %v1909
  %v1911 = vpop.xlane.xlu0 %1910
  %v1912 = vsel %vm147, %v1896, 0.0
  %1913 = vadd.xlane.f32.xlu0 %v1912
  %v1914 = vpop.xlane.xlu0 %1913
  %v1915 = vsel %vm147, %v1898, 0.0
  %1916 = vadd.xlane.f32.xlu0 %v1915
  %v1917 = vpop.xlane.xlu0 %1916
  %v1918 = vsel %vm147, %v1900, 0.0
  %1919 = vadd.xlane.f32.xlu0 %v1918
  %v1920 = vpop.xlane.xlu0 %1919
  %v1921 = vsel %vm147, %v1902, 0.0
  %1922 = vadd.xlane.f32.xlu0 %v1921
  %v1923 = vpop.xlane.xlu0 %1922
  %v1924 = vsel %vm147, %v1904, 0.0
  %1925 = vadd.xlane.f32.xlu0 %v1924
  %v1926 = vpop.xlane.xlu0 %1925
  %v1927 = vsel %vm147, %v1906, 0.0
  %1928 = vadd.xlane.f32.xlu0 %v1927
  %v1929 = vpop.xlane.xlu0 %1928
  %v1930 = vsel %vm147, %v1908, 0.0
  %1931 = vadd.xlane.f32.xlu0 %v1930
  %v1932 = vpop.xlane.xlu0 %1931
  %v1933 = vrcp.pop %v1911
  %v1934 = vrcp.pop %v1914
  %v1935 = vrcp.pop %v1917
  %v1936 = vrcp.pop %v1920
  %v1937 = vrcp.pop %v1923
  %v1938 = vrcp.pop %v1926
  %v1939 = vrcp.pop %v1929
  %v1940 = vrcp.pop %v1932
  %v1941 = vmul.f32 %v1894, %v1933
  %v1942 = vmul.f32 %v1896, %v1934
  %v1943 = vmul.f32 %v1898, %v1935
  %v1944 = vmul.f32 %v1900, %v1936
  %v1945 = vmul.f32 %v1902, %v1937
  %v1946 = vmul.f32 %v1904, %v1938
  %v1947 = vmul.f32 %v1906, %v1939
  %v1948 = vmul.f32 %v1908, %v1940
  %v1949 = vpack.c.bf16 %v1941, %v1941
  %v1950 = vpack.c.bf16 %v1942, %v1942
  %v1951 = vpack.c.bf16 %v1943, %v1943
  %v1952 = vpack.c.bf16 %v1944, %v1944
  %v1953 = vpack.c.bf16 %v1945, %v1945
  %v1954 = vpack.c.bf16 %v1946, %v1946
  %v1955 = vpack.c.bf16 %v1947, %v1947
  %v1956 = vpack.c.bf16 %v1948, %v1948
  %1957 = vrot.lane.b32.xlu0 %v1461, 64
  %v1958 = vpop.permute.xlu0 %1957
  %v1960 = vsel %vm147, %v1949, 0
  %v1963 = vsel %vm638, %v1958, 0
  %1965 = vmatprep.subr.bf16.mxu0 0
  %1966 = vmatpush1.bf16.msra.mxu0 %v1963
  %1967 = vmatprep.subr.bf16.mxu0 0
  %1968 = vmatpush1.bf16.msra.mxu0 0
  %1969 = vmatprep.subr.bf16.mxu0 0
  %1970 = vmatpush1.bf16.msra.mxu0 0
  %1971 = vmatprep.subr.bf16.mxu0 0
  %1972 = vmatpush1.bf16.msra.mxu0 0
  %1973 = vmatprep.subr.bf16.mxu0 0
  %1974 = vmatpush1.bf16.msra.mxu0 0
  %1975 = vmatprep.subr.bf16.mxu0 0
  %1976 = vmatpush1.bf16.msra.mxu0 0
  %1977 = vmatprep.subr.bf16.mxu0 0
  %1978 = vmatpush1.bf16.msra.mxu0 0
  %1979 = vmatprep.subr.bf16.mxu0 0
  %1980 = vmatpush1.bf16.msra.mxu0 0
  %1981 = vmatprep.subr.bf16.mxu0 0
  %1982 = vmatpush1.bf16.msra.mxu0 0
  %1983 = vmatprep.subr.bf16.mxu0 0
  %1984 = vmatpush1.bf16.msra.mxu0 0
  %1985 = vmatprep.subr.bf16.mxu0 0
  %1986 = vmatpush1.bf16.msra.mxu0 0
  %1987 = vmatprep.subr.bf16.mxu0 0
  %1988 = vmatpush1.bf16.msra.mxu0 0
  %1989 = vmatprep.subr.bf16.mxu0 0
  %1990 = vmatpush1.bf16.msra.mxu0 0
  %1991 = vmatprep.subr.bf16.mxu0 0
  %1992 = vmatpush1.bf16.msra.mxu0 0
  %1993 = vmatprep.subr.bf16.mxu0 0
  %1994 = vmatpush1.bf16.msra.mxu0 0
  %1995 = vmatprep.subr.bf16.mxu0 0
  %1996 = vmatpush1.bf16.msra.mxu0 0
  %1997 = vmatprep.mubr.bf16.mxu0 0
  %1998 = vmatmul.mubr.bf16.gmra.mrb[0].mxu0 %v1960
  %v1999 = vpop.f32.mrb[0].mxu0
  %v2000 = vadd.f32 0.0, %v1999
  %v2001 = vpop.f32.mrb[0].mxu0
  %v2002 = vpop.f32.mrb[0].mxu0
  %v2003 = vpop.f32.mrb[0].mxu0
  %2004 = vdwg.mxu0
  %2005 = vrot.lane.b32.xlu0 %v1462, 64
  %v2006 = vpop.permute.xlu0 %2005
  %v2008 = vsel %vm147, %v1950, 0
  %v2011 = vsel %vm638, %v2006, 0
  %2013 = vmatprep.subr.bf16.mxu0 0
  %2014 = vmatpush1.bf16.msra.mxu0 %v2011
  %2015 = vmatprep.subr.bf16.mxu0 0
  %2016 = vmatpush1.bf16.msra.mxu0 0
  %2017 = vmatprep.subr.bf16.mxu0 0
  %2018 = vmatpush1.bf16.msra.mxu0 0
  %2019 = vmatprep.subr.bf16.mxu0 0
  %2020 = vmatpush1.bf16.msra.mxu0 0
  %2021 = vmatprep.subr.bf16.mxu0 0
  %2022 = vmatpush1.bf16.msra.mxu0 0
  %2023 = vmatprep.subr.bf16.mxu0 0
  %2024 = vmatpush1.bf16.msra.mxu0 0
  %2025 = vmatprep.subr.bf16.mxu0 0
  %2026 = vmatpush1.bf16.msra.mxu0 0
  %2027 = vmatprep.subr.bf16.mxu0 0
  %2028 = vmatpush1.bf16.msra.mxu0 0
  %2029 = vmatprep.subr.bf16.mxu0 0
  %2030 = vmatpush1.bf16.msra.mxu0 0
  %2031 = vmatprep.subr.bf16.mxu0 0
  %2032 = vmatpush1.bf16.msra.mxu0 0
  %2033 = vmatprep.subr.bf16.mxu0 0
  %2034 = vmatpush1.bf16.msra.mxu0 0
  %2035 = vmatprep.subr.bf16.mxu0 0
  %2036 = vmatpush1.bf16.msra.mxu0 0
  %2037 = vmatprep.subr.bf16.mxu0 0
  %2038 = vmatpush1.bf16.msra.mxu0 0
  %2039 = vmatprep.subr.bf16.mxu0 0
  %2040 = vmatpush1.bf16.msra.mxu0 0
  %2041 = vmatprep.subr.bf16.mxu0 0
  %2042 = vmatpush1.bf16.msra.mxu0 0
  %2043 = vmatprep.subr.bf16.mxu0 0
  %2044 = vmatpush1.bf16.msra.mxu0 0
  %2045 = vmatprep.mubr.bf16.mxu0 0
  %2046 = vmatmul.mubr.bf16.gmra.mrb[0].mxu0 %v2008
  %v2047 = vpop.f32.mrb[0].mxu0
  %v2048 = vadd.f32 0.0, %v2047
  %v2049 = vpop.f32.mrb[0].mxu0
  %v2050 = vpop.f32.mrb[0].mxu0
  %v2051 = vpop.f32.mrb[0].mxu0
  %2052 = vdwg.mxu0
  %2053 = vrot.lane.b32.xlu0 %v1463, 64
  %v2054 = vpop.permute.xlu0 %2053
  %v2056 = vsel %vm147, %v1951, 0
  %v2059 = vsel %vm638, %v2054, 0
  %2061 = vmatprep.subr.bf16.mxu0 0
  %2062 = vmatpush1.bf16.msra.mxu0 %v2059
  %2063 = vmatprep.subr.bf16.mxu0 0
  %2064 = vmatpush1.bf16.msra.mxu0 0
  %2065 = vmatprep.subr.bf16.mxu0 0
  %2066 = vmatpush1.bf16.msra.mxu0 0
  %2067 = vmatprep.subr.bf16.mxu0 0
  %2068 = vmatpush1.bf16.msra.mxu0 0
  %2069 = vmatprep.subr.bf16.mxu0 0
  %2070 = vmatpush1.bf16.msra.mxu0 0
  %2071 = vmatprep.subr.bf16.mxu0 0
  %2072 = vmatpush1.bf16.msra.mxu0 0
  %2073 = vmatprep.subr.bf16.mxu0 0
  %2074 = vmatpush1.bf16.msra.mxu0 0
  %2075 = vmatprep.subr.bf16.mxu0 0
  %2076 = vmatpush1.bf16.msra.mxu0 0
  %2077 = vmatprep.subr.bf16.mxu0 0
  %2078 = vmatpush1.bf16.msra.mxu0 0
  %2079 = vmatprep.subr.bf16.mxu0 0
  %2080 = vmatpush1.bf16.msra.mxu0 0
  %2081 = vmatprep.subr.bf16.mxu0 0
  %2082 = vmatpush1.bf16.msra.mxu0 0
  %2083 = vmatprep.subr.bf16.mxu0 0
  %2084 = vmatpush1.bf16.msra.mxu0 0
  %2085 = vmatprep.subr.bf16.mxu0 0
  %2086 = vmatpush1.bf16.msra.mxu0 0
  %2087 = vmatprep.subr.bf16.mxu0 0
  %2088 = vmatpush1.bf16.msra.mxu0 0
  %2089 = vmatprep.subr.bf16.mxu0 0
  %2090 = vmatpush1.bf16.msra.mxu0 0
  %2091 = vmatprep.subr.bf16.mxu0 0
  %2092 = vmatpush1.bf16.msra.mxu0 0
  %2093 = vmatprep.mubr.bf16.mxu0 0
  %2094 = vmatmul.mubr.bf16.gmra.mrb[0].mxu0 %v2056
  %v2095 = vpop.f32.mrb[0].mxu0
  %v2096 = vadd.f32 0.0, %v2095
  %v2097 = vpop.f32.mrb[0].mxu0
  %v2098 = vpop.f32.mrb[0].mxu0
  %v2099 = vpop.f32.mrb[0].mxu0
  %2100 = vdwg.mxu0
  %2101 = vrot.lane.b32.xlu0 %v1464, 64
  %v2102 = vpop.permute.xlu0 %2101
  %v2104 = vsel %vm147, %v1952, 0
  %v2107 = vsel %vm638, %v2102, 0
  %2109 = vmatprep.subr.bf16.mxu0 0
  %2110 = vmatpush1.bf16.msra.mxu0 %v2107
  %2111 = vmatprep.subr.bf16.mxu0 0
  %2112 = vmatpush1.bf16.msra.mxu0 0
  %2113 = vmatprep.subr.bf16.mxu0 0
  %2114 = vmatpush1.bf16.msra.mxu0 0
  %2115 = vmatprep.subr.bf16.mxu0 0
  %2116 = vmatpush1.bf16.msra.mxu0 0
  %2117 = vmatprep.subr.bf16.mxu0 0
  %2118 = vmatpush1.bf16.msra.mxu0 0
  %2119 = vmatprep.subr.bf16.mxu0 0
  %2120 = vmatpush1.bf16.msra.mxu0 0
  %2121 = vmatprep.subr.bf16.mxu0 0
  %2122 = vmatpush1.bf16.msra.mxu0 0
  %2123 = vmatprep.subr.bf16.mxu0 0
  %2124 = vmatpush1.bf16.msra.mxu0 0
  %2125 = vmatprep.subr.bf16.mxu0 0
  %2126 = vmatpush1.bf16.msra.mxu0 0
  %2127 = vmatprep.subr.bf16.mxu0 0
  %2128 = vmatpush1.bf16.msra.mxu0 0
  %2129 = vmatprep.subr.bf16.mxu0 0
  %2130 = vmatpush1.bf16.msra.mxu0 0
  %2131 = vmatprep.subr.bf16.mxu0 0
  %2132 = vmatpush1.bf16.msra.mxu0 0
  %2133 = vmatprep.subr.bf16.mxu0 0
  %2134 = vmatpush1.bf16.msra.mxu0 0
  %2135 = vmatprep.subr.bf16.mxu0 0
  %2136 = vmatpush1.bf16.msra.mxu0 0
  %2137 = vmatprep.subr.bf16.mxu0 0
  %2138 = vmatpush1.bf16.msra.mxu0 0
  %2139 = vmatprep.subr.bf16.mxu0 0
  %2140 = vmatpush1.bf16.msra.mxu0 0
  %2141 = vmatprep.mubr.bf16.mxu0 0
  %2142 = vmatmul.mubr.bf16.gmra.mrb[0].mxu0 %v2104
  %v2143 = vpop.f32.mrb[0].mxu0
  %v2144 = vadd.f32 0.0, %v2143
  %v2145 = vpop.f32.mrb[0].mxu0
  %v2146 = vpop.f32.mrb[0].mxu0
  %v2147 = vpop.f32.mrb[0].mxu0
  %2148 = vdwg.mxu0
  %2149 = vrot.lane.b32.xlu0 %v1465, 64
  %v2150 = vpop.permute.xlu0 %2149
  %v2152 = vsel %vm147, %v1953, 0
  %v2155 = vsel %vm638, %v2150, 0
  %2157 = vmatprep.subr.bf16.mxu0 0
  %2158 = vmatpush1.bf16.msra.mxu0 %v2155
  %2159 = vmatprep.subr.bf16.mxu0 0
  %2160 = vmatpush1.bf16.msra.mxu0 0
  %2161 = vmatprep.subr.bf16.mxu0 0
  %2162 = vmatpush1.bf16.msra.mxu0 0
  %2163 = vmatprep.subr.bf16.mxu0 0
  %2164 = vmatpush1.bf16.msra.mxu0 0
  %2165 = vmatprep.subr.bf16.mxu0 0
  %2166 = vmatpush1.bf16.msra.mxu0 0
  %2167 = vmatprep.subr.bf16.mxu0 0
  %2168 = vmatpush1.bf16.msra.mxu0 0
  %2169 = vmatprep.subr.bf16.mxu0 0
  %2170 = vmatpush1.bf16.msra.mxu0 0
  %2171 = vmatprep.subr.bf16.mxu0 0
  %2172 = vmatpush1.bf16.msra.mxu0 0
  %2173 = vmatprep.subr.bf16.mxu0 0
  %2174 = vmatpush1.bf16.msra.mxu0 0
  %2175 = vmatprep.subr.bf16.mxu0 0
  %2176 = vmatpush1.bf16.msra.mxu0 0
  %2177 = vmatprep.subr.bf16.mxu0 0
  %2178 = vmatpush1.bf16.msra.mxu0 0
  %2179 = vmatprep.subr.bf16.mxu0 0
  %2180 = vmatpush1.bf16.msra.mxu0 0
  %2181 = vmatprep.subr.bf16.mxu0 0
  %2182 = vmatpush1.bf16.msra.mxu0 0
  %2183 = vmatprep.subr.bf16.mxu0 0
  %2184 = vmatpush1.bf16.msra.mxu0 0
  %2185 = vmatprep.subr.bf16.mxu0 0
  %2186 = vmatpush1.bf16.msra.mxu0 0
  %2187 = vmatprep.subr.bf16.mxu0 0
  %2188 = vmatpush1.bf16.msra.mxu0 0
  %2189 = vmatprep.mubr.bf16.mxu0 0
  %2190 = vmatmul.mubr.bf16.gmra.mrb[0].mxu0 %v2152
  %v2191 = vpop.f32.mrb[0].mxu0
  %v2192 = vadd.f32 0.0, %v2191
  %v2193 = vpop.f32.mrb[0].mxu0
  %v2194 = vpop.f32.mrb[0].mxu0
  %v2195 = vpop.f32.mrb[0].mxu0
  %2196 = vdwg.mxu0
  %2197 = vrot.lane.b32.xlu0 %v1466, 64
  %v2198 = vpop.permute.xlu0 %2197
  %v2200 = vsel %vm147, %v1954, 0
  %v2203 = vsel %vm638, %v2198, 0
  %2205 = vmatprep.subr.bf16.mxu0 0
  %2206 = vmatpush1.bf16.msra.mxu0 %v2203
  %2207 = vmatprep.subr.bf16.mxu0 0
  %2208 = vmatpush1.bf16.msra.mxu0 0
  %2209 = vmatprep.subr.bf16.mxu0 0
  %2210 = vmatpush1.bf16.msra.mxu0 0
  %2211 = vmatprep.subr.bf16.mxu0 0
  %2212 = vmatpush1.bf16.msra.mxu0 0
  %2213 = vmatprep.subr.bf16.mxu0 0
  %2214 = vmatpush1.bf16.msra.mxu0 0
  %2215 = vmatprep.subr.bf16.mxu0 0
  %2216 = vmatpush1.bf16.msra.mxu0 0
  %2217 = vmatprep.subr.bf16.mxu0 0
  %2218 = vmatpush1.bf16.msra.mxu0 0
  %2219 = vmatprep.subr.bf16.mxu0 0
  %2220 = vmatpush1.bf16.msra.mxu0 0
  %2221 = vmatprep.subr.bf16.mxu0 0
  %2222 = vmatpush1.bf16.msra.mxu0 0
  %2223 = vmatprep.subr.bf16.mxu0 0
  %2224 = vmatpush1.bf16.msra.mxu0 0
  %2225 = vmatprep.subr.bf16.mxu0 0
  %2226 = vmatpush1.bf16.msra.mxu0 0
  %2227 = vmatprep.subr.bf16.mxu0 0
  %2228 = vmatpush1.bf16.msra.mxu0 0
  %2229 = vmatprep.subr.bf16.mxu0 0
  %2230 = vmatpush1.bf16.msra.mxu0 0
  %2231 = vmatprep.subr.bf16.mxu0 0
  %2232 = vmatpush1.bf16.msra.mxu0 0
  %2233 = vmatprep.subr.bf16.mxu0 0
  %2234 = vmatpush1.bf16.msra.mxu0 0
  %2235 = vmatprep.subr.bf16.mxu0 0
  %2236 = vmatpush1.bf16.msra.mxu0 0
  %2237 = vmatprep.mubr.bf16.mxu0 0
  %2238 = vmatmul.mubr.bf16.gmra.mrb[0].mxu0 %v2200
  %v2239 = vpop.f32.mrb[0].mxu0
  %v2240 = vadd.f32 0.0, %v2239
  %v2241 = vpop.f32.mrb[0].mxu0
  %v2242 = vpop.f32.mrb[0].mxu0
  %v2243 = vpop.f32.mrb[0].mxu0
  %2244 = vdwg.mxu0
  %2245 = vrot.lane.b32.xlu0 %v1467, 64
  %v2246 = vpop.permute.xlu0 %2245
  %v2248 = vsel %vm147, %v1955, 0
  %v2251 = vsel %vm638, %v2246, 0
  %2253 = vmatprep.subr.bf16.mxu0 0
  %2254 = vmatpush1.bf16.msra.mxu0 %v2251
  %2255 = vmatprep.subr.bf16.mxu0 0
  %2256 = vmatpush1.bf16.msra.mxu0 0
  %2257 = vmatprep.subr.bf16.mxu0 0
  %2258 = vmatpush1.bf16.msra.mxu0 0
  %2259 = vmatprep.subr.bf16.mxu0 0
  %2260 = vmatpush1.bf16.msra.mxu0 0
  %2261 = vmatprep.subr.bf16.mxu0 0
  %2262 = vmatpush1.bf16.msra.mxu0 0
  %2263 = vmatprep.subr.bf16.mxu0 0
  %2264 = vmatpush1.bf16.msra.mxu0 0
  %2265 = vmatprep.subr.bf16.mxu0 0
  %2266 = vmatpush1.bf16.msra.mxu0 0
  %2267 = vmatprep.subr.bf16.mxu0 0
  %2268 = vmatpush1.bf16.msra.mxu0 0
  %2269 = vmatprep.subr.bf16.mxu0 0
  %2270 = vmatpush1.bf16.msra.mxu0 0
  %2271 = vmatprep.subr.bf16.mxu0 0
  %2272 = vmatpush1.bf16.msra.mxu0 0
  %2273 = vmatprep.subr.bf16.mxu0 0
  %2274 = vmatpush1.bf16.msra.mxu0 0
  %2275 = vmatprep.subr.bf16.mxu0 0
  %2276 = vmatpush1.bf16.msra.mxu0 0
  %2277 = vmatprep.subr.bf16.mxu0 0
  %2278 = vmatpush1.bf16.msra.mxu0 0
  %2279 = vmatprep.subr.bf16.mxu0 0
  %2280 = vmatpush1.bf16.msra.mxu0 0
  %2281 = vmatprep.subr.bf16.mxu0 0
  %2282 = vmatpush1.bf16.msra.mxu0 0
  %2283 = vmatprep.subr.bf16.mxu0 0
  %2284 = vmatpush1.bf16.msra.mxu0 0
  %2285 = vmatprep.mubr.bf16.mxu0 0
  %2286 = vmatmul.mubr.bf16.gmra.mrb[0].mxu0 %v2248
  %v2287 = vpop.f32.mrb[0].mxu0
  %v2288 = vadd.f32 0.0, %v2287
  %v2289 = vpop.f32.mrb[0].mxu0
  %v2290 = vpop.f32.mrb[0].mxu0
  %v2291 = vpop.f32.mrb[0].mxu0
  %2292 = vdwg.mxu0
  %2293 = vrot.lane.b32.xlu0 %v1468, 64
  %v2294 = vpop.permute.xlu0 %2293
  %v2296 = vsel %vm147, %v1956, 0
  %v2299 = vsel %vm638, %v2294, 0
  %2301 = vmatprep.subr.bf16.mxu0 0
  %2302 = vmatpush1.bf16.msra.mxu0 %v2299
  %2303 = vmatprep.subr.bf16.mxu0 0
  %2304 = vmatpush1.bf16.msra.mxu0 0
  %2305 = vmatprep.subr.bf16.mxu0 0
  %2306 = vmatpush1.bf16.msra.mxu0 0
  %2307 = vmatprep.subr.bf16.mxu0 0
  %2308 = vmatpush1.bf16.msra.mxu0 0
  %2309 = vmatprep.subr.bf16.mxu0 0
  %2310 = vmatpush1.bf16.msra.mxu0 0
  %2311 = vmatprep.subr.bf16.mxu0 0
  %2312 = vmatpush1.bf16.msra.mxu0 0
  %2313 = vmatprep.subr.bf16.mxu0 0
  %2314 = vmatpush1.bf16.msra.mxu0 0
  %2315 = vmatprep.subr.bf16.mxu0 0
  %2316 = vmatpush1.bf16.msra.mxu0 0
  %2317 = vmatprep.subr.bf16.mxu0 0
  %2318 = vmatpush1.bf16.msra.mxu0 0
  %2319 = vmatprep.subr.bf16.mxu0 0
  %2320 = vmatpush1.bf16.msra.mxu0 0
  %2321 = vmatprep.subr.bf16.mxu0 0
  %2322 = vmatpush1.bf16.msra.mxu0 0
  %2323 = vmatprep.subr.bf16.mxu0 0
  %2324 = vmatpush1.bf16.msra.mxu0 0
  %2325 = vmatprep.subr.bf16.mxu0 0
  %2326 = vmatpush1.bf16.msra.mxu0 0
  %2327 = vmatprep.subr.bf16.mxu0 0
  %2328 = vmatpush1.bf16.msra.mxu0 0
  %2329 = vmatprep.subr.bf16.mxu0 0
  %2330 = vmatpush1.bf16.msra.mxu0 0
  %2331 = vmatprep.subr.bf16.mxu0 0
  %2332 = vmatpush1.bf16.msra.mxu0 0
  %2333 = vmatprep.mubr.bf16.mxu0 0
  %2334 = vmatmul.mubr.bf16.gmra.mrb[0].mxu0 %v2296
  %v2335 = vpop.f32.mrb[0].mxu0
  %v2336 = vadd.f32 0.0, %v2335
  %v2337 = vpop.f32.mrb[0].mxu0
  %v2338 = vpop.f32.mrb[0].mxu0
  %v2339 = vpop.f32.mrb[0].mxu0
  %2340 = vdwg.mxu0
  %2341 = vst.msk [vmem:[#allocation2] sm:$0xff] %vm147, %v2000
  %2342 = vst.msk [vmem:[#allocation2 + $0x8] sm:$0xff] %vm147, %v2048
  %2345 = vrot.lane.b32.xlu0 %v2096, 8
  %v2346 = vpop.permute.xlu0 %2345
  %2347 = vrot.lane.b32.xlu0 %v2144, 8
  %v2348 = vpop.permute.xlu0 %2347
  %2351 = vst.msk [vmem:[#allocation2] sm:$0xff] %vm1028, %v2346
  %2352 = vst.msk [vmem:[#allocation2 + $0x8] sm:$0xff] %vm1028, %v2348
  %2355 = vrot.lane.b32.xlu0 %v2192, 16
  %v2356 = vpop.permute.xlu0 %2355
  %2357 = vrot.lane.b32.xlu0 %v2240, 16
  %v2358 = vpop.permute.xlu0 %2357
  %2361 = vst.msk [vmem:[#allocation2] sm:$0xff] %vm1039, %v2356
  %2362 = vst.msk [vmem:[#allocation2 + $0x8] sm:$0xff] %vm1039, %v2358
  %2365 = vrot.lane.b32.xlu0 %v2288, 24
  %v2366 = vpop.permute.xlu0 %2365
  %2367 = vrot.lane.b32.xlu0 %v2336, 24
  %v2368 = vpop.permute.xlu0 %2367
  %2371 = vst.msk [vmem:[#allocation2] sm:$0xff] %vm1050, %v2366
  %2372 = vst.msk [vmem:[#allocation2 + $0x8] sm:$0xff] %vm1050, %v2368
  %v2373 = vld [vmem:[#allocation2] sm:$0xff]
  %v2374 = vld [vmem:[#allocation2 + $0x8] sm:$0xff]
  %s2375 = scalar_lea.vmem %s3, 16
  %v2376 = vld [vmem:[%s2375] sm:$0xf]
  %v2377 = vld [vmem:[%s2375 + $0x4] sm:$0xf]
  %v2378 = vld [vmem:[%s2375 + $0x8] sm:$0xf]
  %v2379 = vld [vmem:[%s2375 + $0xc] sm:$0xf]
  %v2380 = vpack.c.bf16 %v2374, %v2373
  %s2381 = scalar_lea.vmem %s4, 1
  %v2382 = vld [vmem:[%s2381] sm:$0x1]
  %v2384 = vlaneseq
  %v2385 = vshrl.u32 %v2384, 7
  %v2386 = vsub.s32 0, %v2385
  %v2387 = vrot.slane %v2382, %v2386
  %v2393 = vunpack.c.l.b16 %v2376
  %v2394 = vunpack.c.l.b16 %v2377
  %v2395 = vunpack.c.l.b16 %v2378
  %v2396 = vunpack.c.l.b16 %v2379
  %v2397 = vpack.c.b16 %v2394, %v2393
  %v2398 = vpack.c.b16 %v2396, %v2395
  %v2402 = vsel %vm71, %v2380, 0
  %2404 = vmatprep.subr.bf16.mxu0 0
  %2405 = vmatpush1.bf16.msra.mxu0 %v2397
  %2406 = vmatprep.subr.bf16.mxu0 0
  %2407 = vmatpush1.bf16.msra.mxu0 %v2398
  %2408 = vmatprep.subr.bf16.mxu0 0
  %2409 = vmatpush1.bf16.msra.mxu0 0
  %2410 = vmatprep.subr.bf16.mxu0 0
  %2411 = vmatpush1.bf16.msra.mxu0 0
  %2412 = vmatprep.subr.bf16.mxu0 0
  %2413 = vmatpush1.bf16.msra.mxu0 0
  %2414 = vmatprep.subr.bf16.mxu0 0
  %2415 = vmatpush1.bf16.msra.mxu0 0
  %2416 = vmatprep.subr.bf16.mxu0 0
  %2417 = vmatpush1.bf16.msra.mxu0 0
  %2418 = vmatprep.subr.bf16.mxu0 0
  %2419 = vmatpush1.bf16.msra.mxu0 0
  %2420 = vmatprep.subr.bf16.mxu0 0
  %2421 = vmatpush1.bf16.msra.mxu0 0
  %2422 = vmatprep.subr.bf16.mxu0 0
  %2423 = vmatpush1.bf16.msra.mxu0 0
  %2424 = vmatprep.subr.bf16.mxu0 0
  %2425 = vmatpush1.bf16.msra.mxu0 0
  %2426 = vmatprep.subr.bf16.mxu0 0
  %2427 = vmatpush1.bf16.msra.mxu0 0
  %2428 = vmatprep.subr.bf16.mxu0 0
  %2429 = vmatpush1.bf16.msra.mxu0 0
  %2430 = vmatprep.subr.bf16.mxu0 0
  %2431 = vmatpush1.bf16.msra.mxu0 0
  %2432 = vmatprep.subr.bf16.mxu0 0
  %2433 = vmatpush1.bf16.msra.mxu0 0
  %2434 = vmatprep.subr.bf16.mxu0 0
  %2435 = vmatpush1.bf16.msra.mxu0 0
  %2436 = vmatprep.mubr.bf16.mxu0 0
  %2437 = vmatmul.mubr.bf16.gmra.mrb[0].mxu0 %v2402
  %v2438 = vpop.f32.mrb[0].mxu0
  %v2439 = vadd.f32 %v2387, %v2438
  %v2440 = vpop.f32.mrb[0].mxu0
  %v2441 = vpop.f32.mrb[0].mxu0
  %v2442 = vadd.f32 %v2387, %v2441
  %v2443 = vpop.f32.mrb[0].mxu0
  %2444 = vdwg.mxu0
  %v2445 = vadd.f32 %v1369, %v2439
  %v2446 = vadd.f32 %v1370, %v2442
  %s2447 = scalar_lea.vmem %s5, 1
  %v2448 = vld [vmem:[%s2447] sm:$0x1]
  %s2449 = scalar_lea.vmem %s6, 1
  %v2450 = vld [vmem:[%s2449] sm:$0x1]
  %v2451 = vsel %vm71, %v2445, 0.0
  %2452 = vadd.xlane.f32.xlu0 %v2451
  %v2453 = vpop.xlane.xlu0 %2452
  %v2454 = vsel %vm71, %v2446, 0.0
  %2455 = vadd.xlane.f32.xlu0 %v2454
  %v2456 = vpop.xlane.xlu0 %2455
  %v2457 = vmul.f32 %v2453, %v1133
  %v2458 = vmul.f32 %v2456, %v1133
  %v2459 = vsub.f32 %v2445, %v2457
  %v2460 = vsub.f32 %v2446, %v2458
  %v2461 = vmul.f32 %v2459, %v2459
  %v2462 = vmul.f32 %v2460, %v2460
  %v2463 = vsel %vm71, %v2461, 0.0
  %2464 = vadd.xlane.f32.xlu0 %v2463
  %v2465 = vpop.xlane.xlu0 %2464
  %v2466 = vsel %vm71, %v2462, 0.0
  %2467 = vadd.xlane.f32.xlu0 %v2466
  %v2468 = vpop.xlane.xlu0 %2467
  %v2469 = vmul.f32 %v2465, %v1133
  %v2470 = vmul.f32 %v2468, %v1133
  %v2471 = vadd.f32 %v2469, 1e-05
  %v2472 = vadd.f32 %v2470, 1e-05
  %v2473 = vrsqrt.pop %v2471
  %v2474 = vrsqrt.pop %v2472
  %v2475 = vmul.f32 %v2459, %v2473
  %v2476 = vmul.f32 %v2460, %v2474
  %v2478 = vlaneseq
  %v2479 = vshrl.u32 %v2478, 7
  %v2480 = vsub.s32 0, %v2479
  %v2481 = vrot.slane %v2448, %v2480
  %v2483 = vmul.f32 %v2475, %v2481
  %v2484 = vmul.f32 %v2476, %v2481
  %v2486 = vlaneseq
  %v2487 = vshrl.u32 %v2486, 7
  %v2488 = vsub.s32 0, %v2487
  %v2489 = vrot.slane %v2450, %v2488
  %v2491 = vadd.f32 %v2483, %v2489
  %v2492 = vadd.f32 %v2484, %v2489
  %s2493 = scalar_lea.vmem %s7, 16
  %v2494 = vld [vmem:[%s2493] sm:$0xf]
  %v2495 = vld [vmem:[%s2493 + $0x4] sm:$0xf]
  %v2496 = vld [vmem:[%s2493 + $0x8] sm:$0xf]
  %v2497 = vld [vmem:[%s2493 + $0xc] sm:$0xf]
  %v2498 = vpack.c.bf16 %v2492, %v2491
  %s2499 = scalar_lea.vmem %s8, 1
  %v2500 = vld [vmem:[%s2499] sm:$0x1]
  %v2502 = vlaneseq
  %v2503 = vshrl.u32 %v2502, 7
  %v2504 = vsub.s32 0, %v2503
  %v2505 = vrot.slane %v2500, %v2504
  %v2511 = vunpack.c.l.b16 %v2494
  %v2512 = vunpack.c.l.b16 %v2495
  %v2513 = vunpack.c.l.b16 %v2496
  %v2514 = vunpack.c.l.b16 %v2497
  %v2515 = vpack.c.b16 %v2512, %v2511
  %v2516 = vpack.c.b16 %v2514, %v2513
  %v2520 = vsel %vm71, %v2498, 0
  %2522 = vmatprep.subr.bf16.mxu0 0
  %2523 = vmatpush1.bf16.msra.mxu0 %v2515
  %2524 = vmatprep.subr.bf16.mxu0 0
  %2525 = vmatpush1.bf16.msra.mxu0 %v2516
  %2526 = vmatprep.subr.bf16.mxu0 0
  %2527 = vmatpush1.bf16.msra.mxu0 0
  %2528 = vmatprep.subr.bf16.mxu0 0
  %2529 = vmatpush1.bf16.msra.mxu0 0
  %2530 = vmatprep.subr.bf16.mxu0 0
  %2531 = vmatpush1.bf16.msra.mxu0 0
  %2532 = vmatprep.subr.bf16.mxu0 0
  %2533 = vmatpush1.bf16.msra.mxu0 0
  %2534 = vmatprep.subr.bf16.mxu0 0
  %2535 = vmatpush1.bf16.msra.mxu0 0
  %2536 = vmatprep.subr.bf16.mxu0 0
  %2537 = vmatpush1.bf16.msra.mxu0 0
  %2538 = vmatprep.subr.bf16.mxu0 0
  %2539 = vmatpush1.bf16.msra.mxu0 0
  %2540 = vmatprep.subr.bf16.mxu0 0
  %2541 = vmatpush1.bf16.msra.mxu0 0
  %2542 = vmatprep.subr.bf16.mxu0 0
  %2543 = vmatpush1.bf16.msra.mxu0 0
  %2544 = vmatprep.subr.bf16.mxu0 0
  %2545 = vmatpush1.bf16.msra.mxu0 0
  %2546 = vmatprep.subr.bf16.mxu0 0
  %2547 = vmatpush1.bf16.msra.mxu0 0
  %2548 = vmatprep.subr.bf16.mxu0 0
  %2549 = vmatpush1.bf16.msra.mxu0 0
  %2550 = vmatprep.subr.bf16.mxu0 0
  %2551 = vmatpush1.bf16.msra.mxu0 0
  %2552 = vmatprep.subr.bf16.mxu0 0
  %2553 = vmatpush1.bf16.msra.mxu0 0
  %2554 = vmatprep.mubr.bf16.mxu0 0
  %2555 = vmatmul.mubr.bf16.gmra.mrb[0].mxu0 %v2520
  %v2556 = vpop.f32.mrb[0].mxu0
  %v2557 = vadd.f32 %v2505, %v2556
  %v2558 = vpop.f32.mrb[0].mxu0
  %v2559 = vpop.f32.mrb[0].mxu0
  %v2560 = vadd.f32 %v2505, %v2559
  %v2561 = vpop.f32.mrb[0].mxu0
  %2562 = vdwg.mxu0
  %v2563 = vmax.f32 %v2557, 0.0
  %v2564 = vmax.f32 %v2560, 0.0
  %s2565 = scalar_lea.vmem %s9, 32
  %v2566 = vld [vmem:[%s2565] sm:$0xf]
  %v2567 = vld [vmem:[%s2565 + $0x4] sm:$0xf]
  %v2568 = vld [vmem:[%s2565 + $0x8] sm:$0xf]
  %v2569 = vld [vmem:[%s2565 + $0xc] sm:$0xf]
  %v2570 = vld [vmem:[%s2565 + $0x10] sm:$0xf]
  %v2571 = vld [vmem:[%s2565 + $0x14] sm:$0xf]
  %v2572 = vld [vmem:[%s2565 + $0x18] sm:$0xf]
  %v2573 = vld [vmem:[%s2565 + $0x1c] sm:$0xf]
  %v2574 = vpack.c.bf16 %v2564, %v2563
  %s2575 = scalar_lea.vmem %s10, 1
  %v2576 = vld [vmem:[%s2575] sm:$0x1]
  %v2578 = vlaneseq
  %v2579 = vshrl.u32 %v2578, 7
  %v2580 = vsub.s32 0, %v2579
  %v2581 = vrot.slane %v2576, %v2580
  %v2591 = vunpack.c.l.b16 %v2566
  %v2592 = vunpack.c.l.b16 %v2567
  %v2593 = vunpack.c.l.b16 %v2568
  %v2594 = vunpack.c.l.b16 %v2569
  %v2595 = vunpack.c.l.b16 %v2570
  %v2596 = vunpack.c.l.b16 %v2571
  %v2597 = vunpack.c.l.b16 %v2572
  %v2598 = vunpack.c.l.b16 %v2573
  %v2599 = vpack.c.b16 %v2592, %v2591
  %v2600 = vpack.c.b16 %v2594, %v2593
  %v2601 = vpack.c.b16 %v2596, %v2595
  %v2602 = vpack.c.b16 %v2598, %v2597
  %v2608 = vsel %vm1280, %v2574, 0
  %2610 = vmatprep.subr.bf16.mxu0 0
  %2611 = vmatpush1.bf16.msra.mxu0 %v2599
  %2612 = vmatprep.subr.bf16.mxu0 0
  %2613 = vmatpush1.bf16.msra.mxu0 %v2600
  %2614 = vmatprep.subr.bf16.mxu0 0
  %2615 = vmatpush1.bf16.msra.mxu0 %v2601
  %2616 = vmatprep.subr.bf16.mxu0 0
  %2617 = vmatpush1.bf16.msra.mxu0 %v2602
  %2618 = vmatprep.subr.bf16.mxu0 0
  %2619 = vmatpush1.bf16.msra.mxu0 0
  %2620 = vmatprep.subr.bf16.mxu0 0
  %2621 = vmatpush1.bf16.msra.mxu0 0
  %2622 = vmatprep.subr.bf16.mxu0 0
  %2623 = vmatpush1.bf16.msra.mxu0 0
  %2624 = vmatprep.subr.bf16.mxu0 0
  %2625 = vmatpush1.bf16.msra.mxu0 0
  %2626 = vmatprep.subr.bf16.mxu0 0
  %2627 = vmatpush1.bf16.msra.mxu0 0
  %2628 = vmatprep.subr.bf16.mxu0 0
  %2629 = vmatpush1.bf16.msra.mxu0 0
  %2630 = vmatprep.subr.bf16.mxu0 0
  %2631 = vmatpush1.bf16.msra.mxu0 0
  %2632 = vmatprep.subr.bf16.mxu0 0
  %2633 = vmatpush1.bf16.msra.mxu0 0
  %2634 = vmatprep.subr.bf16.mxu0 0
  %2635 = vmatpush1.bf16.msra.mxu0 0
  %2636 = vmatprep.subr.bf16.mxu0 0
  %2637 = vmatpush1.bf16.msra.mxu0 0
  %2638 = vmatprep.subr.bf16.mxu0 0
  %2639 = vmatpush1.bf16.msra.mxu0 0
  %2640 = vmatprep.subr.bf16.mxu0 0
  %2641 = vmatpush1.bf16.msra.mxu0 0
  %2642 = vmatprep.mubr.bf16.mxu0 0
  %2643 = vmatmul.mubr.bf16.gmra.mrb[0].mxu0 %v2608
  %v2644 = vpop.f32.mrb[0].mxu0
  %v2645 = vadd.f32 %v2581, %v2644
  %v2646 = vpop.f32.mrb[0].mxu0
  %v2647 = vpop.f32.mrb[0].mxu0
  %v2648 = vadd.f32 %v2581, %v2647
  %v2649 = vpop.f32.mrb[0].mxu0
  %2650 = vdwg.mxu0
  %v2651 = vadd.f32 %v2491, %v2645
  %v2652 = vadd.f32 %v2492, %v2648
  %s2653 = scalar_lea.vmem %s11, 1
  %v2654 = vld [vmem:[%s2653] sm:$0x1]
  %s2655 = scalar_lea.vmem %s12, 1
  %v2656 = vld [vmem:[%s2655] sm:$0x1]
  %v2657 = vsel %vm71, %v2651, 0.0
  %2658 = vadd.xlane.f32.xlu0 %v2657
  %v2659 = vpop.xlane.xlu0 %2658
  %v2660 = vsel %vm71, %v2652, 0.0
  %2661 = vadd.xlane.f32.xlu0 %v2660
  %v2662 = vpop.xlane.xlu0 %2661
  %v2663 = vmul.f32 %v2659, %v1133
  %v2664 = vmul.f32 %v2662, %v1133
  %v2665 = vsub.f32 %v2651, %v2663
  %v2666 = vsub.f32 %v2652, %v2664
  %v2667 = vmul.f32 %v2665, %v2665
  %v2668 = vmul.f32 %v2666, %v2666
  %v2669 = vsel %vm71, %v2667, 0.0
  %2670 = vadd.xlane.f32.xlu0 %v2669
  %v2671 = vpop.xlane.xlu0 %2670
  %v2672 = vsel %vm71, %v2668, 0.0
  %2673 = vadd.xlane.f32.xlu0 %v2672
  %v2674 = vpop.xlane.xlu0 %2673
  %v2675 = vmul.f32 %v2671, %v1133
  %v2676 = vmul.f32 %v2674, %v1133
  %v2677 = vadd.f32 %v2675, 1e-05
  %v2678 = vadd.f32 %v2676, 1e-05
  %v2679 = vrsqrt.pop %v2677
  %v2680 = vrsqrt.pop %v2678
  %v2681 = vmul.f32 %v2665, %v2679
  %v2682 = vmul.f32 %v2666, %v2680
  %v2684 = vlaneseq
  %v2685 = vshrl.u32 %v2684, 7
  %v2686 = vsub.s32 0, %v2685
  %v2687 = vrot.slane %v2654, %v2686
  %v2689 = vmul.f32 %v2681, %v2687
  %v2690 = vmul.f32 %v2682, %v2687
  %v2692 = vlaneseq
  %v2693 = vshrl.u32 %v2692, 7
  %v2694 = vsub.s32 0, %v2693
  %v2695 = vrot.slane %v2656, %v2694
  %v2697 = vadd.f32 %v2689, %v2695
  %v2698 = vadd.f32 %v2690, %v2695
  %2699 = vst.msk [vmem:[%s13] sm:$0xff] %vm71, %v2697
  %2700 = vst.msk [vmem:[%s13 + $0x8] sm:$0xff] %vm71, %v2698
  // Predicated region
  $region54: #{transformer_encoder.1} parent=0 // pred_check
    _
  $region55: #{transformer_encoder.1} parent=0 // pred_check_branch
    %2702 = sbr.rel (0) target = $region57
  $region56: #{transformer_encoder.1} parent=0 // pred_region
    _
  $region57: #{transformer_encoder.1} parent=0 // pred_fallthru
    _
  // Predicated region
  $region58: #{transformer_encoder.1} parent=0 // pred_check
    _
  $region59: #{transformer_encoder.1} parent=0 // pred_check_branch
    %2704 = sbr.rel (0) target = $region61
  $region60: #{transformer_encoder.1} parent=0 // pred_region
    _
  $region61: #{transformer_encoder.1} parent=0 // pred_fallthru
    _

</llo_original>
